<compile_context>
chip_gen: v6e
topology: v6e:2x2x1
jax: 0.10.0
libtpu: 0.0.40
codegen_flags: <defaults>
</compile_context>

<pallas_src>
import functools

import jax
import jax.numpy as jnp
from jax import lax
from jax.experimental import pallas as pl
from jax.experimental.pallas import tpu as pltpu

_ALPHA = 1.0
_BETA = 1.0
_N_PHYS = 4                       # ra, dec, pmra, pmdec
_MAX_BLOCK_N = 8192
_VMEM_ROW_BUDGET = 8 * 1024 * 1024   # bytes for one double-buffered input set


def _round_up(x, m):
    return ((x + m - 1) // m) * m


def _pick_block_n(n, d, k):
    """Largest multiple-of-128 row tile that keeps double-buffered inputs small."""
    bytes_per_row = 4 * (2 * d + 2 * k + _N_PHYS)
    bn = _VMEM_ROW_BUDGET // (2 * bytes_per_row)
    bn = max(128, min(_MAX_BLOCK_N, (bn // 128) * 128))
    return min(bn, _round_up(n, 128))


def _loss_kernel(recon_ref, orig_ref, probs_ref, target_ref, phys_ref,
                 out_ref,
                 mse_acc, kl_acc, wsum_acc, s1_acc, s2_acc, *,
                 n_samples, latent_dim, alpha, beta):
    i = pl.program_id(0)
    f32 = jnp.float32
    block_n = kl_acc.shape[1]
    base = i * block_n

    @pl.when(i == 0)
    def _init():
        mse_acc[...] = jnp.zeros_like(mse_acc)
        kl_acc[...] = jnp.zeros_like(kl_acc)
        wsum_acc[...] = jnp.zeros_like(wsum_acc)
        s1_acc[...] = jnp.zeros_like(s1_acc)
        s2_acc[...] = jnp.zeros_like(s2_acc)

    # ---- masks for the ragged last tile (OOB rows are unspecified) ----------
    row_ids = base + lax.broadcasted_iota(jnp.int32, (block_n, 1), 0)   # (BN, 1)
    lane_ids = base + lax.broadcasted_iota(jnp.int32, (1, block_n), 1)  # (1, BN)
    row_valid = row_ids < n_samples
    lane_valid = lane_ids < n_samples

    # ---- reconstruction MSE: per-feature partial sums (VMEM accumulator) ----
    diff = jnp.where(row_valid,
                     recon_ref[...].astype(f32) - orig_ref[...].astype(f32),
                     0.0)
    mse_acc[...] += jnp.sum(diff * diff, axis=0, keepdims=True)          # (1, D)

    # ---- KL(t || p), PyTorch F.kl_div semantics (t == 0 contributes 0) ------
    # probs/target are (K, BLOCK_N): lane-dense, so the two logs fill vregs.
    p_raw = probs_ref[...].astype(f32)
    t = jnp.where(lane_valid, target_ref[...].astype(f32), 0.0)
    p_kl = jnp.where(lane_valid, p_raw, 1.0)
    log_p = jnp.log(p_kl + 1e-8)
    log_t = jnp.log(jnp.where(t > 0.0, t, 1.0))
    kl_acc[...] += jnp.sum(t * (log_t - log_p), axis=0, keepdims=True)   # (1, BN)

    # ---- physics sufficient statistics on the MXU ---------------------------
    # phys is the globally-centered (BN, 4) feature tile; squares built on VPU.
    p_w = jnp.where(lane_valid, p_raw, 0.0)                              # (K, BN)
    x = jnp.where(row_valid, phys_ref[...].astype(f32), 0.0)             # (BN, 4)
    wsum_acc[...] += jnp.sum(p_w, axis=1, keepdims=True)                 # (K, 1)
    s1_acc[...] += jnp.dot(p_w, x, preferred_element_type=f32)           # (K, 4)
    s2_acc[...] += jnp.dot(p_w, x * x, preferred_element_type=f32)       # (K, 4)

    @pl.when(i == pl.num_programs(0) - 1)
    def _finalize():
        sq_sum = jnp.sum(mse_acc[...])
        kl_sum = jnp.sum(kl_acc[...])
        w = wsum_acc[...]                                                # (K, 1)
        s1 = s1_acc[...]                                                 # (K, 4)
        s2 = s2_acc[...]                                                 # (K, 4)
        var = jnp.maximum(s2 - (s1 * s1) / w, 0.0)                       # (K, 4)
        spatial_var = jnp.sum(var[:, 0:2])                               # ra, dec
        kinematic_var = jnp.sum(var[:, 2:4])                             # pmra, pmdec
        physics_loss = 0.1 * spatial_var + 0.2 * kinematic_var

        recon_loss = sq_sum / float(n_samples * latent_dim)
        clustering_loss = kl_sum / float(n_samples)
        total = alpha * recon_loss + beta * clustering_loss + 0.1 * physics_loss

        out_ref[0] = recon_loss
        out_ref[1] = clustering_loss
        out_ref[2] = physics_loss
        out_ref[3] = total


@functools.partial(jax.jit, static_argnames=("block_n",))
def _loss_components(reconstruction, original, cluster_probs,
                     target_distribution, features, *, block_n=None):
    n, d = reconstruction.shape
    k = cluster_probs.shape[1]
    f32 = jnp.float32

    if block_n is None:
        bn = _pick_block_n(n, d, k)
    else:
        bn = min(_round_up(int(block_n), 128), _round_up(n, 128))

    # Lane-dense (K, N) layouts for the KL work (tiny copies, K ~ 8).
    probs_t = cluster_probs.T
    target_t = target_distribution.T

    # Globally-centered physics features (shift-invariant weighted variance;
    # avoids f32 cancellation in S2 - S1^2/S0 for sky-coordinate-like values).
    phys = features[:, :_N_PHYS].astype(f32)
    phys = phys - jnp.mean(phys, axis=0, keepdims=True)                  # (N, 4)

    grid = (pl.cdiv(n, bn),)
    kernel = functools.partial(_loss_kernel, n_samples=n, latent_dim=d,
                               alpha=_ALPHA, beta=_BETA)

    comps = pl.pallas_call(
        kernel,
        out_shape=jax.ShapeDtypeStruct((4,), f32),
        grid_spec=pltpu.PrefetchScalarGridSpec(
            num_scalar_prefetch=0,
            grid=grid,
            in_specs=[
                pl.BlockSpec((bn, d), lambda i: (i, 0)),          # reconstruction
                pl.BlockSpec((bn, d), lambda i: (i, 0)),          # original
                pl.BlockSpec((k, bn), lambda i: (0, i)),          # probs^T
                pl.BlockSpec((k, bn), lambda i: (0, i)),          # target^T
                pl.BlockSpec((bn, _N_PHYS), lambda i: (i, 0)),    # centered phys
            ],
            out_specs=pl.BlockSpec(memory_space=pltpu.MemorySpace.SMEM),
            scratch_shapes=[
                pltpu.VMEM((1, d), f32),          # per-feature squared-error acc
                pltpu.VMEM((1, bn), f32),         # per-lane KL acc
                pltpu.VMEM((k, 1), f32),          # sum_n w
                pltpu.VMEM((k, _N_PHYS), f32),    # sum_n w * x
                pltpu.VMEM((k, _N_PHYS), f32),    # sum_n w * x^2
            ]),
        compiler_params=pltpu.CompilerParams(
            dimension_semantics=("arbitrary",),        # carried accumulators
            vmem_limit_bytes=32 * 1024 * 1024),
    )(reconstruction, original, probs_t, target_t, phys)
    return comps


def adaptive_clustering_loss(reconstruction, original, cluster_probs,
                             target_distribution, features, *, block_n=None):
    """Returns (total_loss, loss_components) like the PyTorch module.

    Components are returned as device scalars (no blocking .item() syncs).
    """
    comps = _loss_components(reconstruction, original, cluster_probs,
                             target_distribution, features, block_n=block_n)
    loss_components = {
        "reconstruction": comps[0],
        "clustering": comps[1],
        "physics": comps[2],
        "total": comps[3],
    }
    return comps[3], loss_components


def _reference(reconstruction, original, cluster_probs, target, features):
    """Pure-JAX reference mirroring the PyTorch semantics."""
    recon_loss = jnp.mean((reconstruction - original) ** 2)
    n = cluster_probs.shape[0]
    kl = jnp.sum(target * (jnp.log(target) - jnp.log(cluster_probs + 1e-8))) / n
    ra, dec = features[:, 0], features[:, 1]
    pmra, pmdec = features[:, 2], features[:, 3]
    physics = 0.0
    for c in range(cluster_probs.shape[1]):
        w = cluster_probs[:, c]
        ws = jnp.sum(w)
        rm, dm = jnp.sum(w * ra) / ws, jnp.sum(w * dec) / ws
        physics += 0.1 * jnp.sum(w * ((ra - rm) ** 2 + (dec - dm) ** 2))
    for c in range(cluster_probs.shape[1]):
        w = cluster_probs[:, c]
        ws = jnp.sum(w)
        pm, pdm = jnp.sum(w * pmra) / ws, jnp.sum(w * pmdec) / ws
        physics += 0.2 * jnp.sum(w * ((pmra - pm) ** 2 + (pmdec - pdm) ** 2))
    total = _ALPHA * recon_loss + _BETA * kl + 0.1 * physics
    return total, (recon_loss, kl, physics)


if __name__ == "__main__":
    key = jax.random.PRNGKey(0)
    k1, k2, k3, k4 = jax.random.split(key, 4)

    # N deliberately not a multiple of any tile to exercise the ragged-tile mask.
    N, D, K, F = 2000, 32, 8, 8

    original = jax.random.normal(k1, (N, D), dtype=jnp.float32)
    reconstruction = original + 0.1 * jax.random.normal(k2, (N, D), jnp.float32)

    logits = jax.random.normal(k3, (N, K), dtype=jnp.float32)
    cluster_probs = jax.nn.softmax(logits, axis=-1)
    # DEC-style sharpened target distribution (strictly positive)
    q2 = cluster_probs ** 2 / jnp.sum(cluster_probs, axis=0, keepdims=True)
    target_distribution = q2 / jnp.sum(q2, axis=-1, keepdims=True)

    features = jax.random.normal(k4, (N, F), dtype=jnp.float32)
    # Offset ra/dec like real sky coordinates to exercise the centering fix.
    features = features.at[:, 0].add(150.0).at[:, 1].add(-30.0)

    ref_total, (ref_recon, ref_kl, ref_phys) = _reference(
        reconstruction, original, cluster_probs, target_distribution, features)
    ref_total = jax.block_until_ready(ref_total)

    def _check(total, comps):
        assert jnp.allclose(comps["reconstruction"], ref_recon,
                            rtol=1e-3, atol=1e-5), (comps["reconstruction"], ref_recon)
        assert jnp.allclose(comps["clustering"], ref_kl,
                            rtol=1e-3, atol=1e-5), (comps["clustering"], ref_kl)
        assert jnp.allclose(comps["physics"], ref_phys,
                            rtol=2e-3, atol=1e-4), (comps["physics"], ref_phys)
        assert jnp.allclose(total, ref_total,
                            rtol=2e-3, atol=1e-4), (total, ref_total)

    # 1) auto-picked tile (single ragged tile here)
    total_loss, components = adaptive_clustering_loss(
        reconstruction, original, cluster_probs, target_distribution, features)
    total_loss = jax.block_until_ready(total_loss)
    _check(total_loss, components)

    # 2) forced small tile -> multi-step grid with a ragged last tile
    total_loss2, components2 = adaptive_clustering_loss(
        reconstruction, original, cluster_probs, target_distribution, features,
        block_n=512)
    total_loss2 = jax.block_until_ready(total_loss2)
    _check(total_loss2, components2)

    print("KERNEL_OK")
</pallas_src>

<mosaic_0001>
module attributes {stable_mosaic.version = 11 : i64} {
  func.func @_loss_kernel(%arg0: i32, %arg1: memref<2048x32xf32, #tpu.memory_space<vmem>>, %arg2: memref<2048x32xf32, #tpu.memory_space<vmem>>, %arg3: memref<8x2048xf32, #tpu.memory_space<vmem>>, %arg4: memref<8x2048xf32, #tpu.memory_space<vmem>>, %arg5: memref<2048x4xf32, #tpu.memory_space<vmem>>, %arg6: memref<4xf32, #tpu.memory_space<smem>>, %arg7: memref<1x32xf32, #tpu.memory_space<vmem>>, %arg8: memref<1x2048xf32, #tpu.memory_space<vmem>>, %arg9: memref<8x1xf32, #tpu.memory_space<vmem>>, %arg10: memref<8x4xf32, #tpu.memory_space<vmem>>, %arg11: memref<8x4xf32, #tpu.memory_space<vmem>>) attributes {dimension_semantics = [#tpu.dimension_semantics<arbitrary>], iteration_bounds = array<i64: 1>, scalar_prefetch = 0 : i64, scratch_operands = 5 : i64, tpu.core_type = #tpu.core_type<tc>, window_params = [{transform_indices = @transform_0, window_bounds = array<i64: 2048, 32>}, {transform_indices = @transform_1, window_bounds = array<i64: 2048, 32>}, {transform_indices = @transform_2, window_bounds = array<i64: 8, 2048>}, {transform_indices = @transform_3, window_bounds = array<i64: 8, 2048>}, {transform_indices = @transform_4, window_bounds = array<i64: 2048, 4>}, {transform_indices = @transform_5, window_bounds = array<i64: 4>}]} {
    %c2048_i32 = arith.constant 2048 : i32
    %0 = arith.muli %arg0, %c2048_i32 : i32
    %c0_i32 = arith.constant 0 : i32
    %1 = arith.cmpi eq, %arg0, %c0_i32 : i32
    %2 = arith.extui %1 : i1 to i32
    %c0_i32_0 = arith.constant 0 : i32
    %3 = arith.cmpi ne, %2, %c0_i32_0 : i32
    scf.if %3 {
      %cst_45 = arith.constant 0.000000e+00 : f32
      %78 = vector.broadcast %cst_45 : f32 to vector<1x32xf32>
      %c0_46 = arith.constant 0 : index
      %c0_47 = arith.constant 0 : index
      %79 = vector.load %arg7[%c0_46, %c0_47] : memref<1x32xf32, #tpu.memory_space<vmem>>, vector<1x32xf32>
      tpu.vector_store %arg7[%c0_46, %c0_47], %78 {strides = array<i32>} : memref<1x32xf32, #tpu.memory_space<vmem>>, vector<1x32xf32>,
      %cst_48 = arith.constant 0.000000e+00 : f32
      %80 = vector.broadcast %cst_48 : f32 to vector<1x2048xf32>
      %c0_49 = arith.constant 0 : index
      %c0_50 = arith.constant 0 : index
      %81 = vector.load %arg8[%c0_49, %c0_50] : memref<1x2048xf32, #tpu.memory_space<vmem>>, vector<1x2048xf32>
      tpu.vector_store %arg8[%c0_49, %c0_50], %80 {strides = array<i32>} : memref<1x2048xf32, #tpu.memory_space<vmem>>, vector<1x2048xf32>,
      %cst_51 = arith.constant 0.000000e+00 : f32
      %82 = vector.broadcast %cst_51 : f32 to vector<8x1xf32>
      %c0_52 = arith.constant 0 : index
      %c0_53 = arith.constant 0 : index
      %83 = vector.load %arg9[%c0_52, %c0_53] : memref<8x1xf32, #tpu.memory_space<vmem>>, vector<8x1xf32>
      tpu.vector_store %arg9[%c0_52, %c0_53], %82 {strides = array<i32>} : memref<8x1xf32, #tpu.memory_space<vmem>>, vector<8x1xf32>,
      %cst_54 = arith.constant 0.000000e+00 : f32
      %84 = vector.broadcast %cst_54 : f32 to vector<8x4xf32>
      %c0_55 = arith.constant 0 : index
      %c0_56 = arith.constant 0 : index
      %85 = vector.load %arg10[%c0_55, %c0_56] : memref<8x4xf32, #tpu.memory_space<vmem>>, vector<8x4xf32>
      tpu.vector_store %arg10[%c0_55, %c0_56], %84 {strides = array<i32>} : memref<8x4xf32, #tpu.memory_space<vmem>>, vector<8x4xf32>,
      %cst_57 = arith.constant 0.000000e+00 : f32
      %86 = vector.broadcast %cst_57 : f32 to vector<8x4xf32>
      %c0_58 = arith.constant 0 : index
      %c0_59 = arith.constant 0 : index
      %87 = vector.load %arg11[%c0_58, %c0_59] : memref<8x4xf32, #tpu.memory_space<vmem>>, vector<8x4xf32>
      tpu.vector_store %arg11[%c0_58, %c0_59], %86 {strides = array<i32>} : memref<8x4xf32, #tpu.memory_space<vmem>>, vector<8x4xf32>,
    } else {
    }
    %4 = tpu.iota {dimensions = array<i32: 0>} : vector<2048x1xi32>
    %5 = vector.broadcast %0 : i32 to vector<2048x1xi32>
    %6 = arith.addi %5, %4 : vector<2048x1xi32>
    %7 = tpu.iota {dimensions = array<i32: 1>} : vector<1x2048xi32>
    %8 = vector.broadcast %0 : i32 to vector<1x2048xi32>
    %9 = arith.addi %8, %7 : vector<1x2048xi32>
    %c2000_i32 = arith.constant 2000 : i32
    %10 = vector.broadcast %c2000_i32 : i32 to vector<2048x1xi32>
    %11 = arith.cmpi slt, %6, %10 : vector<2048x1xi32>
    %c2000_i32_1 = arith.constant 2000 : i32
    %12 = vector.broadcast %c2000_i32_1 : i32 to vector<1x2048xi32>
    %13 = arith.cmpi slt, %9, %12 : vector<1x2048xi32>
    %c0 = arith.constant 0 : index
    %c0_2 = arith.constant 0 : index
    %14 = vector.load %arg1[%c0, %c0_2] : memref<2048x32xf32, #tpu.memory_space<vmem>>, vector<2048x32xf32>
    %c0_3 = arith.constant 0 : index
    %c0_4 = arith.constant 0 : index
    %15 = vector.load %arg2[%c0_3, %c0_4] : memref<2048x32xf32, #tpu.memory_space<vmem>>, vector<2048x32xf32>
    %16 = arith.subf %14, %15 : vector<2048x32xf32>
    %cst = arith.constant 0.000000e+00 : f32
    %17 = vector.shape_cast %11 : vector<2048x1xi1> to vector<2048x1xi1>
    %18 = vector.broadcast %17 : vector<2048x1xi1> to vector<2048x32xi1>
    %19 = vector.broadcast %cst : f32 to vector<2048x32xf32>
    %20 = arith.select %18, %16, %19 : vector<2048x32xi1>, vector<2048x32xf32>
    %c0_5 = arith.constant 0 : index
    %c0_6 = arith.constant 0 : index
    %21 = vector.load %arg7[%c0_5, %c0_6] : memref<1x32xf32, #tpu.memory_space<vmem>>, vector<1x32xf32>
    %22 = arith.mulf %20, %20 : vector<2048x32xf32>
    %cst_7 = arith.constant dense<0.000000e+00> : vector<32xf32>
    %23 = vector.multi_reduction <add>, %22, %cst_7 [0] : vector<2048x32xf32> to vector<32xf32>
    %24 = vector.shape_cast %23 : vector<32xf32> to vector<1x32xf32>
    %25 = arith.addf %21, %24 : vector<1x32xf32>
    %c0_8 = arith.constant 0 : index
    %c0_9 = arith.constant 0 : index
    %26 = vector.load %arg7[%c0_8, %c0_9] : memref<1x32xf32, #tpu.memory_space<vmem>>, vector<1x32xf32>
    tpu.vector_store %arg7[%c0_8, %c0_9], %25 {strides = array<i32>} : memref<1x32xf32, #tpu.memory_space<vmem>>, vector<1x32xf32>,
    %c0_10 = arith.constant 0 : index
    %c0_11 = arith.constant 0 : index
    %27 = vector.load %arg3[%c0_10, %c0_11] : memref<8x2048xf32, #tpu.memory_space<vmem>>, vector<8x2048xf32>
    %c0_12 = arith.constant 0 : index
    %c0_13 = arith.constant 0 : index
    %28 = vector.load %arg4[%c0_12, %c0_13] : memref<8x2048xf32, #tpu.memory_space<vmem>>, vector<8x2048xf32>
    %cst_14 = arith.constant 0.000000e+00 : f32
    %29 = vector.shape_cast %13 : vector<1x2048xi1> to vector<1x2048xi1>
    %30 = vector.broadcast %29 : vector<1x2048xi1> to vector<8x2048xi1>
    %31 = vector.broadcast %cst_14 : f32 to vector<8x2048xf32>
    %32 = arith.select %30, %28, %31 : vector<8x2048xi1>, vector<8x2048xf32>
    %cst_15 = arith.constant 1.000000e+00 : f32
    %33 = vector.shape_cast %13 : vector<1x2048xi1> to vector<1x2048xi1>
    %34 = vector.broadcast %33 : vector<1x2048xi1> to vector<8x2048xi1>
    %35 = vector.broadcast %cst_15 : f32 to vector<8x2048xf32>
    %36 = arith.select %34, %27, %35 : vector<8x2048xi1>, vector<8x2048xf32>
    %cst_16 = arith.constant 9.99999993E-9 : f32
    %37 = vector.broadcast %cst_16 : f32 to vector<8x2048xf32>
    %38 = arith.addf %36, %37 : vector<8x2048xf32>
    %39 = math.log %38 : vector<8x2048xf32>
    %cst_17 = arith.constant 0.000000e+00 : f32
    %40 = vector.broadcast %cst_17 : f32 to vector<8x2048xf32>
    %41 = arith.cmpf ogt, %32, %40 : vector<8x2048xf32>
    %cst_18 = arith.constant 1.000000e+00 : f32
    %42 = vector.broadcast %cst_18 : f32 to vector<8x2048xf32>
    %43 = arith.select %41, %32, %42 : vector<8x2048xi1>, vector<8x2048xf32>
    %44 = math.log %43 : vector<8x2048xf32>
    %c0_19 = arith.constant 0 : index
    %c0_20 = arith.constant 0 : index
    %45 = vector.load %arg8[%c0_19, %c0_20] : memref<1x2048xf32, #tpu.memory_space<vmem>>, vector<1x2048xf32>
    %46 = arith.subf %44, %39 : vector<8x2048xf32>
    %47 = arith.mulf %32, %46 : vector<8x2048xf32>
    %cst_21 = arith.constant dense<0.000000e+00> : vector<2048xf32>
    %48 = vector.multi_reduction <add>, %47, %cst_21 [0] : vector<8x2048xf32> to vector<2048xf32>
    %49 = vector.shape_cast %48 : vector<2048xf32> to vector<1x2048xf32>
    %50 = arith.addf %45, %49 : vector<1x2048xf32>
    %c0_22 = arith.constant 0 : index
    %c0_23 = arith.constant 0 : index
    %51 = vector.load %arg8[%c0_22, %c0_23] : memref<1x2048xf32, #tpu.memory_space<vmem>>, vector<1x2048xf32>
    tpu.vector_store %arg8[%c0_22, %c0_23], %50 {strides = array<i32>} : memref<1x2048xf32, #tpu.memory_space<vmem>>, vector<1x2048xf32>,
    %cst_24 = arith.constant 0.000000e+00 : f32
    %52 = vector.shape_cast %13 : vector<1x2048xi1> to vector<1x2048xi1>
    %53 = vector.broadcast %52 : vector<1x2048xi1> to vector<8x2048xi1>
    %54 = vector.broadcast %cst_24 : f32 to vector<8x2048xf32>
    %55 = arith.select %53, %27, %54 : vector<8x2048xi1>, vector<8x2048xf32>
    %c0_25 = arith.constant 0 : index
    %c0_26 = arith.constant 0 : index
    %56 = vector.load %arg5[%c0_25, %c0_26] : memref<2048x4xf32, #tpu.memory_space<vmem>>, vector<2048x4xf32>
    %cst_27 = arith.constant 0.000000e+00 : f32
    %57 = vector.shape_cast %11 : vector<2048x1xi1> to vector<2048x1xi1>
    %58 = vector.broadcast %57 : vector<2048x1xi1> to vector<2048x4xi1>
    %59 = vector.broadcast %cst_27 : f32 to vector<2048x4xf32>
    %60 = arith.select %58, %56, %59 : vector<2048x4xi1>, vector<2048x4xf32>
    %c0_28 = arith.constant 0 : index
    %c0_29 = arith.constant 0 : index
    %61 = vector.load %arg9[%c0_28, %c0_29] : memref<8x1xf32, #tpu.memory_space<vmem>>, vector<8x1xf32>
    %cst_30 = arith.constant dense<0.000000e+00> : vector<8xf32>
    %62 = vector.multi_reduction <add>, %55, %cst_30 [1] : vector<8x2048xf32> to vector<8xf32>
    %63 = vector.shape_cast %62 : vector<8xf32> to vector<8x1xf32>
    %64 = arith.addf %61, %63 : vector<8x1xf32>
    %c0_31 = arith.constant 0 : index
    %c0_32 = arith.constant 0 : index
    %65 = vector.load %arg9[%c0_31, %c0_32] : memref<8x1xf32, #tpu.memory_space<vmem>>, vector<8x1xf32>
    tpu.vector_store %arg9[%c0_31, %c0_32], %64 {strides = array<i32>} : memref<8x1xf32, #tpu.memory_space<vmem>>, vector<8x1xf32>,
    %c0_33 = arith.constant 0 : index
    %c0_34 = arith.constant 0 : index
    %66 = vector.load %arg10[%c0_33, %c0_34] : memref<8x4xf32, #tpu.memory_space<vmem>>, vector<8x4xf32>
    %cst_35 = arith.constant dense<0.000000e+00> : vector<8x4xf32>
    %67 = tpu.matmul %55, %60, %cst_35 {dimension_numbers = #tpu.dot_dimension_numbers<[1], [0], [0], [1], [0, 0, 1, 1], [], []>} : vector<8x2048xf32>, vector<2048x4xf32>, vector<8x4xf32> -> vector<8x4xf32>
    %68 = arith.addf %66, %67 : vector<8x4xf32>
    %c0_36 = arith.constant 0 : index
    %c0_37 = arith.constant 0 : index
    %69 = vector.load %arg10[%c0_36, %c0_37] : memref<8x4xf32, #tpu.memory_space<vmem>>, vector<8x4xf32>
    tpu.vector_store %arg10[%c0_36, %c0_37], %68 {strides = array<i32>} : memref<8x4xf32, #tpu.memory_space<vmem>>, vector<8x4xf32>,
    %c0_38 = arith.constant 0 : index
    %c0_39 = arith.constant 0 : index
    %70 = vector.load %arg11[%c0_38, %c0_39] : memref<8x4xf32, #tpu.memory_space<vmem>>, vector<8x4xf32>
    %71 = arith.mulf %60, %60 : vector<2048x4xf32>
    %cst_40 = arith.constant dense<0.000000e+00> : vector<8x4xf32>
    %72 = tpu.matmul %55, %71, %cst_40 {dimension_numbers = #tpu.dot_dimension_numbers<[1], [0], [0], [1], [0, 0, 1, 1], [], []>} : vector<8x2048xf32>, vector<2048x4xf32>, vector<8x4xf32> -> vector<8x4xf32>
    %73 = arith.addf %70, %72 : vector<8x4xf32>
    %c0_41 = arith.constant 0 : index
    %c0_42 = arith.constant 0 : index
    %74 = vector.load %arg11[%c0_41, %c0_42] : memref<8x4xf32, #tpu.memory_space<vmem>>, vector<8x4xf32>
    tpu.vector_store %arg11[%c0_41, %c0_42], %73 {strides = array<i32>} : memref<8x4xf32, #tpu.memory_space<vmem>>, vector<8x4xf32>,
    %c0_i32_43 = arith.constant 0 : i32
    %75 = arith.cmpi eq, %arg0, %c0_i32_43 : i32
    %76 = arith.extui %75 : i1 to i32
    %c0_i32_44 = arith.constant 0 : i32
    %77 = arith.cmpi ne, %76, %c0_i32_44 : i32
    scf.if %77 {
      %c0_45 = arith.constant 0 : index
      %c0_46 = arith.constant 0 : index
      %78 = vector.load %arg7[%c0_45, %c0_46] : memref<1x32xf32, #tpu.memory_space<vmem>>, vector<1x32xf32>
      %79 = vector.shape_cast %78 : vector<1x32xf32> to vector<1x1x32xf32>
      %cst_47 = arith.constant dense<0.000000e+00> : vector<1xf32>
      %80 = vector.multi_reduction <add>, %79, %cst_47 [1, 2] : vector<1x1x32xf32> to vector<1xf32>
      %81 = vector.shape_cast %80 : vector<1xf32> to vector<1x1x1xf32>
      %82 = vector.extract %81[0, 0, 0] : f32 from vector<1x1x1xf32>
      %c0_48 = arith.constant 0 : index
      %c0_49 = arith.constant 0 : index
      %83 = vector.load %arg8[%c0_48, %c0_49] : memref<1x2048xf32, #tpu.memory_space<vmem>>, vector<1x2048xf32>
      %84 = vector.shape_cast %83 : vector<1x2048xf32> to vector<1x1x2048xf32>
      %cst_50 = arith.constant dense<0.000000e+00> : vector<1xf32>
      %85 = vector.multi_reduction <add>, %84, %cst_50 [1, 2] : vector<1x1x2048xf32> to vector<1xf32>
      %86 = vector.shape_cast %85 : vector<1xf32> to vector<1x1x1xf32>
      %87 = vector.extract %86[0, 0, 0] : f32 from vector<1x1x1xf32>
      %c0_51 = arith.constant 0 : index
      %c0_52 = arith.constant 0 : index
      %88 = vector.load %arg9[%c0_51, %c0_52] : memref<8x1xf32, #tpu.memory_space<vmem>>, vector<8x1xf32>
      %c0_53 = arith.constant 0 : index
      %c0_54 = arith.constant 0 : index
      %89 = vector.load %arg10[%c0_53, %c0_54] : memref<8x4xf32, #tpu.memory_space<vmem>>, vector<8x4xf32>
      %c0_55 = arith.constant 0 : index
      %c0_56 = arith.constant 0 : index
      %90 = vector.load %arg11[%c0_55, %c0_56] : memref<8x4xf32, #tpu.memory_space<vmem>>, vector<8x4xf32>
      %91 = arith.mulf %89, %89 : vector<8x4xf32>
      %92 = vector.broadcast %88 : vector<8x1xf32> to vector<8x4xf32>
      %93 = arith.divf %91, %92 : vector<8x4xf32>
      %94 = arith.subf %90, %93 : vector<8x4xf32>
      %cst_57 = arith.constant 0.000000e+00 : f32
      %95 = vector.broadcast %cst_57 : f32 to vector<8x4xf32>
      %96 = arith.maximumf %94, %95 : vector<8x4xf32>
      %97 = vector.extract_strided_slice %96 {offsets = [0, 0], sizes = [8, 2], strides = [1, 1]} : vector<8x4xf32> to vector<8x2xf32>
      %98 = vector.shape_cast %97 : vector<8x2xf32> to vector<1x8x2xf32>
      %cst_58 = arith.constant dense<0.000000e+00> : vector<1xf32>
      %99 = vector.multi_reduction <add>, %98, %cst_58 [1, 2] : vector<1x8x2xf32> to vector<1xf32>
      %100 = vector.shape_cast %99 : vector<1xf32> to vector<1x1x1xf32>
      %101 = vector.extract %100[0, 0, 0] : f32 from vector<1x1x1xf32>
      %102 = vector.extract_strided_slice %96 {offsets = [0, 2], sizes = [8, 2], strides = [1, 1]} : vector<8x4xf32> to vector<8x2xf32>
      %103 = vector.shape_cast %102 : vector<8x2xf32> to vector<1x8x2xf32>
      %cst_59 = arith.constant dense<0.000000e+00> : vector<1xf32>
      %104 = vector.multi_reduction <add>, %103, %cst_59 [1, 2] : vector<1x8x2xf32> to vector<1xf32>
      %105 = vector.shape_cast %104 : vector<1xf32> to vector<1x1x1xf32>
      %106 = vector.extract %105[0, 0, 0] : f32 from vector<1x1x1xf32>
      %cst_60 = arith.constant 1.000000e-01 : f32
      %107 = arith.mulf %cst_60, %101 : f32
      %cst_61 = arith.constant 2.000000e-01 : f32
      %108 = arith.mulf %cst_61, %106 : f32
      %109 = arith.addf %107, %108 : f32
      %cst_62 = arith.constant 6.400000e+04 : f32
      %110 = arith.divf %82, %cst_62 : f32
      %cst_63 = arith.constant 2.000000e+03 : f32
      %111 = arith.divf %87, %cst_63 : f32
      %cst_64 = arith.constant 1.000000e+00 : f32
      %112 = arith.mulf %cst_64, %110 : f32
      %cst_65 = arith.constant 1.000000e+00 : f32
      %113 = arith.mulf %cst_65, %111 : f32
      %114 = arith.addf %112, %113 : f32
      %cst_66 = arith.constant 1.000000e-01 : f32
      %115 = arith.mulf %cst_66, %109 : f32
      %116 = arith.addf %114, %115 : f32
      %c0_67 = arith.constant 0 : index
      %117 = memref.load %arg6[%c0_67] : memref<4xf32, #tpu.memory_space<smem>>
      memref.store %110, %arg6[%c0_67] : memref<4xf32, #tpu.memory_space<smem>>
      %c1 = arith.constant 1 : index
      %118 = memref.load %arg6[%c1] : memref<4xf32, #tpu.memory_space<smem>>
      memref.store %111, %arg6[%c1] : memref<4xf32, #tpu.memory_space<smem>>
      %c2 = arith.constant 2 : index
      %119 = memref.load %arg6[%c2] : memref<4xf32, #tpu.memory_space<smem>>
      memref.store %109, %arg6[%c2] : memref<4xf32, #tpu.memory_space<smem>>
      %c3 = arith.constant 3 : index
      %120 = memref.load %arg6[%c3] : memref<4xf32, #tpu.memory_space<smem>>
      memref.store %116, %arg6[%c3] : memref<4xf32, #tpu.memory_space<smem>>
    } else {
    }
    return
  }
  func.func @transform_0(%arg0: i32) -> (i32, i32) {
    %c0_i32 = arith.constant 0 : i32
    %c0_i32_0 = arith.constant 0 : i32
    return %arg0, %c0_i32 : i32, i32
  }
  func.func @transform_1(%arg0: i32) -> (i32, i32) {
    %c0_i32 = arith.constant 0 : i32
    %c0_i32_0 = arith.constant 0 : i32
    return %arg0, %c0_i32 : i32, i32
  }
  func.func @transform_2(%arg0: i32) -> (i32, i32) {
    %c0_i32 = arith.constant 0 : i32
    %c0_i32_0 = arith.constant 0 : i32
    return %c0_i32, %arg0 : i32, i32
  }
  func.func @transform_3(%arg0: i32) -> (i32, i32) {
    %c0_i32 = arith.constant 0 : i32
    %c0_i32_0 = arith.constant 0 : i32
    return %c0_i32, %arg0 : i32, i32
  }
  func.func @transform_4(%arg0: i32) -> (i32, i32) {
    %c0_i32 = arith.constant 0 : i32
    %c0_i32_0 = arith.constant 0 : i32
    return %arg0, %c0_i32 : i32, i32
  }
  func.func @transform_5(%arg0: i32) -> i32 {
    %c0_i32 = arith.constant 0 : i32
    %c0_i32_0 = arith.constant 0 : i32
    return %c0_i32 : i32
  }
}

</mosaic_0001>

<llo_original>
// kernel: _loss_components.1
$region0: #{_loss_components.1}
  #allocation0 [shape = 'u32[]', space=smem, size = 0x4, offset = 0x4, fixed_abs, tag = 'smem constant byte address 0x4 - core index']
  #allocation1 [shape = 'u32[144,128]{1,0:T(1,128)}', space=vmem, size = 0x12000, scoped, tag = 'internal scratch']
  #allocation2 [shape = 'f32[1,32]{1,0:T(1,128)}', space=vmem, size = 0x200, scoped, tag = 'scratch operand']
  #allocation3 [shape = 'f32[1,2048]{1,0:T(1,128)}', space=vmem, size = 0x2000, scoped, tag = 'scratch operand']
  #allocation4 [shape = 'f32[8,1]{1,0:T(8,128)}', space=vmem, size = 0x1000, scoped, tag = 'scratch operand']
  #allocation5 [shape = 'f32[8,4]{1,0:T(8,128)}', space=vmem, size = 0x1000, scoped, tag = 'scratch operand']
  #allocation6 [shape = 'f32[8,4]{1,0:T(8,128)}', space=vmem, size = 0x1000, scoped, tag = 'scratch operand']
  %s0 = inlined_call_operand.vmem [shape: f32[2000,32], index: 0, kind: input, shape index: {}]
  %s1 = inlined_call_operand.vmem [shape: f32[2000,32], index: 1, kind: input, shape index: {}]
  %s2 = inlined_call_operand.vmem [shape: f32[8,2000], index: 2, kind: input, shape index: {}]
  %s3 = inlined_call_operand.vmem [shape: f32[8,2000], index: 3, kind: input, shape index: {}]
  %s4 = inlined_call_operand.vmem [shape: f32[2000,4], index: 4, kind: input, shape index: {}]
  %s5 = inlined_call_operand.hbm [shape: f32[4], index: 5, kind: output, shape index: {}]
  %s6 = sld [smem:[#allocation0]]
  $region38: #{_loss_components.1} parent=0
    _
  %s8 = ssub.s32 1, %s6
  %s9 = scalar_select 0, %s8, %s6
  $region1: #{_loss_components.1} parent=0
    #allocation7 [shape = 'u8[512]{0}', space=smem, size = 0x200, scoped, tag = 'output window, operand 0, single buffered']
    #allocation8 [shape = 's32[1]{0}', space=sflag, size = 0x4, scoped, tag = 'scoped memory for _loss_components.1']
    %10 = vsyncpa [#allocation8], 0
    // Predicated region
    $region2: #{_loss_components.1} parent=1 // pred_check
      _
    $region3: #{_loss_components.1} parent=1 // pred_check_branch
      %12 = sbr.rel (0) target = $region5
    $region4: #{_loss_components.1} parent=1 // pred_region
      _
    $region5: #{_loss_components.1} parent=1 // pred_fallthru
      _
    // Predicated region
    $region6: #{_loss_components.1} parent=1 // pred_check
      _
    $region7: #{_loss_components.1} parent=1 // pred_check_branch
      %14 = sbr.rel (0) target = $region9
    $region8: #{_loss_components.1} parent=1 // pred_region
      _
    $region9: #{_loss_components.1} parent=1 // pred_fallthru
      _
    // Predicated region
    $region10: #{_loss_components.1} parent=1 // pred_check
      _
    $region11: #{_loss_components.1} parent=1 // pred_check_branch
      %16 = sbr.rel (0) target = $region13
    $region12: #{_loss_components.1} parent=1 // pred_region
      _
    $region13: #{_loss_components.1} parent=1 // pred_fallthru
      _
    // Predicated region
    $region14: #{_loss_components.1} parent=1 // pred_check
      _
    $region15: #{_loss_components.1} parent=1 // pred_check_branch
      %18 = sbr.rel (0) target = $region17
    $region16: #{_loss_components.1} parent=1 // pred_region
      _
    $region17: #{_loss_components.1} parent=1 // pred_fallthru
      _
    // Predicated region
    $region18: #{_loss_components.1} parent=1 // pred_check
      _
    $region19: #{_loss_components.1} parent=1 // pred_check_branch
      %20 = sbr.rel (0) target = $region21
    $region20: #{_loss_components.1} parent=1 // pred_region
      _
    $region21: #{_loss_components.1} parent=1 // pred_fallthru
      _
    %s21 = smul.u32 0, 2048
    %p22 = scmp.eq.s32.totalorder 0, 0
    // Predicated region
    $region22: #{_loss_components.1} parent=1 // pred_check
      %p23 = pneg %p22
    $region23: #{_loss_components.1} parent=1 // pred_check_branch
      %25 = sbr.rel (%p23) target = $region25
    $region24: #{_loss_components.1} parent=1 // pred_region
      %vm26 = vcmask 253952
      %27 = vst.msk [vmem:[#allocation2] sm:$0x1] %vm26, 0.0
      %28 = vst [vmem:[#allocation3] sm:$0xff] 0.0
      %29 = vst [vmem:[#allocation3 + $0x8] sm:$0xff] 0.0
      %vm30 = vcmask 7168
      %31 = vst.msk [vmem:[#allocation4] sm:$0xff] %vm30, 0.0
      %vm32 = vcmask 31744
      %33 = vst.msk [vmem:[#allocation5] sm:$0xff] %vm32, 0.0
      %34 = vst.msk [vmem:[#allocation6] sm:$0xff] %vm32, 0.0
    $region25: #{_loss_components.1} parent=1 // pred_fallthru
      _
    %v35 = vlaneseq
    %v36 = vshrl.u32 %v35, 7
    %v37 = vadd.s32 %v36, 8
    %v38 = vadd.s32 %v36, 16
    %v39 = vadd.s32 %v36, 24
    %v40 = vadd.s32 %v36, 32
    %v41 = vadd.s32 %v36, 40
    %v42 = vadd.s32 %v36, 48
    %v43 = vadd.s32 %v36, 56
    %v44 = vadd.s32 %v36, 64
    %v45 = vadd.s32 %v36, 72
    %v46 = vadd.s32 %v36, 80
    %v47 = vadd.s32 %v36, 88
    %v48 = vadd.s32 %v36, 96
    %v49 = vadd.s32 %v36, 104
    %v50 = vadd.s32 %v36, 112
    %v51 = vadd.s32 %v36, 120
    %v52 = vadd.s32 %v36, 128
    %v53 = vadd.s32 %v36, 136
    %v54 = vadd.s32 %v36, 144
    %v55 = vadd.s32 %v36, 152
    %v56 = vadd.s32 %v36, 160
    %v57 = vadd.s32 %v36, 168
    %v58 = vadd.s32 %v36, 176
    %v59 = vadd.s32 %v36, 184
    %v60 = vadd.s32 %v36, 192
    %v61 = vadd.s32 %v36, 200
    %v62 = vadd.s32 %v36, 208
    %v63 = vadd.s32 %v36, 216
    %v64 = vadd.s32 %v36, 224
    %v65 = vadd.s32 %v36, 232
    %v66 = vadd.s32 %v36, 240
    %v67 = vadd.s32 %v36, 248
    %v68 = vadd.s32 %v36, 256
    %v69 = vadd.s32 %v36, 264
    %v70 = vadd.s32 %v36, 272
    %v71 = vadd.s32 %v36, 280
    %v72 = vadd.s32 %v36, 288
    %v73 = vadd.s32 %v36, 296
    %v74 = vadd.s32 %v36, 304
    %v75 = vadd.s32 %v36, 312
    %v76 = vadd.s32 %v36, 320
    %v77 = vadd.s32 %v36, 328
    %v78 = vadd.s32 %v36, 336
    %v79 = vadd.s32 %v36, 344
    %v80 = vadd.s32 %v36, 352
    %v81 = vadd.s32 %v36, 360
    %v82 = vadd.s32 %v36, 368
    %v83 = vadd.s32 %v36, 376
    %v84 = vadd.s32 %v36, 384
    %v85 = vadd.s32 %v36, 392
    %v86 = vadd.s32 %v36, 400
    %v87 = vadd.s32 %v36, 408
    %v88 = vadd.s32 %v36, 416
    %v89 = vadd.s32 %v36, 424
    %v90 = vadd.s32 %v36, 432
    %v91 = vadd.s32 %v36, 440
    %v92 = vadd.s32 %v36, 448
    %v93 = vadd.s32 %v36, 456
    %v94 = vadd.s32 %v36, 464
    %v95 = vadd.s32 %v36, 472
    %v96 = vadd.s32 %v36, 480
    %v97 = vadd.s32 %v36, 488
    %v98 = vadd.s32 %v36, 496
    %v99 = vadd.s32 %v36, 504
    %v100 = vadd.s32 %v36, 512
    %v101 = vadd.s32 %v36, 520
    %v102 = vadd.s32 %v36, 528
    %v103 = vadd.s32 %v36, 536
    %v104 = vadd.s32 %v36, 544
    %v105 = vadd.s32 %v36, 552
    %v106 = vadd.s32 %v36, 560
    %v107 = vadd.s32 %v36, 568
    %v108 = vadd.s32 %v36, 576
    %v109 = vadd.s32 %v36, 584
    %v110 = vadd.s32 %v36, 592
    %v111 = vadd.s32 %v36, 600
    %v112 = vadd.s32 %v36, 608
    %v113 = vadd.s32 %v36, 616
    %v114 = vadd.s32 %v36, 624
    %v115 = vadd.s32 %v36, 632
    %v116 = vadd.s32 %v36, 640
    %v117 = vadd.s32 %v36, 648
    %v118 = vadd.s32 %v36, 656
    %v119 = vadd.s32 %v36, 664
    %v120 = vadd.s32 %v36, 672
    %v121 = vadd.s32 %v36, 680
    %v122 = vadd.s32 %v36, 688
    %v123 = vadd.s32 %v36, 696
    %v124 = vadd.s32 %v36, 704
    %v125 = vadd.s32 %v36, 712
    %v126 = vadd.s32 %v36, 720
    %v127 = vadd.s32 %v36, 728
    %v128 = vadd.s32 %v36, 736
    %v129 = vadd.s32 %v36, 744
    %v130 = vadd.s32 %v36, 752
    %v131 = vadd.s32 %v36, 760
    %v132 = vadd.s32 %v36, 768
    %v133 = vadd.s32 %v36, 776
    %v134 = vadd.s32 %v36, 784
    %v135 = vadd.s32 %v36, 792
    %v136 = vadd.s32 %v36, 800
    %v137 = vadd.s32 %v36, 808
    %v138 = vadd.s32 %v36, 816
    %v139 = vadd.s32 %v36, 824
    %v140 = vadd.s32 %v36, 832
    %v141 = vadd.s32 %v36, 840
    %v142 = vadd.s32 %v36, 848
    %v143 = vadd.s32 %v36, 856
    %v144 = vadd.s32 %v36, 864
    %v145 = vadd.s32 %v36, 872
    %v146 = vadd.s32 %v36, 880
    %v147 = vadd.s32 %v36, 888
    %v148 = vadd.s32 %v36, 896
    %v149 = vadd.s32 %v36, 904
    %v150 = vadd.s32 %v36, 912
    %v151 = vadd.s32 %v36, 920
    %v152 = vadd.s32 %v36, 928
    %v153 = vadd.s32 %v36, 936
    %v154 = vadd.s32 %v36, 944
    %v155 = vadd.s32 %v36, 952
    %v156 = vadd.s32 %v36, 960
    %v157 = vadd.s32 %v36, 968
    %v158 = vadd.s32 %v36, 976
    %v159 = vadd.s32 %v36, 984
    %v160 = vadd.s32 %v36, 992
    %v161 = vadd.s32 %v36, 1000
    %v162 = vadd.s32 %v36, 1008
    %v163 = vadd.s32 %v36, 1016
    %v164 = vadd.s32 %v36, 1024
    %v165 = vadd.s32 %v36, 1032
    %v166 = vadd.s32 %v36, 1040
    %v167 = vadd.s32 %v36, 1048
    %v168 = vadd.s32 %v36, 1056
    %v169 = vadd.s32 %v36, 1064
    %v170 = vadd.s32 %v36, 1072
    %v171 = vadd.s32 %v36, 1080
    %v172 = vadd.s32 %v36, 1088
    %v173 = vadd.s32 %v36, 1096
    %v174 = vadd.s32 %v36, 1104
    %v175 = vadd.s32 %v36, 1112
    %v176 = vadd.s32 %v36, 1120
    %v177 = vadd.s32 %v36, 1128
    %v178 = vadd.s32 %v36, 1136
    %v179 = vadd.s32 %v36, 1144
    %v180 = vadd.s32 %v36, 1152
    %v181 = vadd.s32 %v36, 1160
    %v182 = vadd.s32 %v36, 1168
    %v183 = vadd.s32 %v36, 1176
    %v184 = vadd.s32 %v36, 1184
    %v185 = vadd.s32 %v36, 1192
    %v186 = vadd.s32 %v36, 1200
    %v187 = vadd.s32 %v36, 1208
    %v188 = vadd.s32 %v36, 1216
    %v189 = vadd.s32 %v36, 1224
    %v190 = vadd.s32 %v36, 1232
    %v191 = vadd.s32 %v36, 1240
    %v192 = vadd.s32 %v36, 1248
    %v193 = vadd.s32 %v36, 1256
    %v194 = vadd.s32 %v36, 1264
    %v195 = vadd.s32 %v36, 1272
    %v196 = vadd.s32 %v36, 1280
    %v197 = vadd.s32 %v36, 1288
    %v198 = vadd.s32 %v36, 1296
    %v199 = vadd.s32 %v36, 1304
    %v200 = vadd.s32 %v36, 1312
    %v201 = vadd.s32 %v36, 1320
    %v202 = vadd.s32 %v36, 1328
    %v203 = vadd.s32 %v36, 1336
    %v204 = vadd.s32 %v36, 1344
    %v205 = vadd.s32 %v36, 1352
    %v206 = vadd.s32 %v36, 1360
    %v207 = vadd.s32 %v36, 1368
    %v208 = vadd.s32 %v36, 1376
    %v209 = vadd.s32 %v36, 1384
    %v210 = vadd.s32 %v36, 1392
    %v211 = vadd.s32 %v36, 1400
    %v212 = vadd.s32 %v36, 1408
    %v213 = vadd.s32 %v36, 1416
    %v214 = vadd.s32 %v36, 1424
    %v215 = vadd.s32 %v36, 1432
    %v216 = vadd.s32 %v36, 1440
    %v217 = vadd.s32 %v36, 1448
    %v218 = vadd.s32 %v36, 1456
    %v219 = vadd.s32 %v36, 1464
    %v220 = vadd.s32 %v36, 1472
    %v221 = vadd.s32 %v36, 1480
    %v222 = vadd.s32 %v36, 1488
    %v223 = vadd.s32 %v36, 1496
    %v224 = vadd.s32 %v36, 1504
    %v225 = vadd.s32 %v36, 1512
    %v226 = vadd.s32 %v36, 1520
    %v227 = vadd.s32 %v36, 1528
    %v228 = vadd.s32 %v36, 1536
    %v229 = vadd.s32 %v36, 1544
    %v230 = vadd.s32 %v36, 1552
    %v231 = vadd.s32 %v36, 1560
    %v232 = vadd.s32 %v36, 1568
    %v233 = vadd.s32 %v36, 1576
    %v234 = vadd.s32 %v36, 1584
    %v235 = vadd.s32 %v36, 1592
    %v236 = vadd.s32 %v36, 1600
    %v237 = vadd.s32 %v36, 1608
    %v238 = vadd.s32 %v36, 1616
    %v239 = vadd.s32 %v36, 1624
    %v240 = vadd.s32 %v36, 1632
    %v241 = vadd.s32 %v36, 1640
    %v242 = vadd.s32 %v36, 1648
    %v243 = vadd.s32 %v36, 1656
    %v244 = vadd.s32 %v36, 1664
    %v245 = vadd.s32 %v36, 1672
    %v246 = vadd.s32 %v36, 1680
    %v247 = vadd.s32 %v36, 1688
    %v248 = vadd.s32 %v36, 1696
    %v249 = vadd.s32 %v36, 1704
    %v250 = vadd.s32 %v36, 1712
    %v251 = vadd.s32 %v36, 1720
    %v252 = vadd.s32 %v36, 1728
    %v253 = vadd.s32 %v36, 1736
    %v254 = vadd.s32 %v36, 1744
    %v255 = vadd.s32 %v36, 1752
    %v256 = vadd.s32 %v36, 1760
    %v257 = vadd.s32 %v36, 1768
    %v258 = vadd.s32 %v36, 1776
    %v259 = vadd.s32 %v36, 1784
    %v260 = vadd.s32 %v36, 1792
    %v261 = vadd.s32 %v36, 1800
    %v262 = vadd.s32 %v36, 1808
    %v263 = vadd.s32 %v36, 1816
    %v264 = vadd.s32 %v36, 1824
    %v265 = vadd.s32 %v36, 1832
    %v266 = vadd.s32 %v36, 1840
    %v267 = vadd.s32 %v36, 1848
    %v268 = vadd.s32 %v36, 1856
    %v269 = vadd.s32 %v36, 1864
    %v270 = vadd.s32 %v36, 1872
    %v271 = vadd.s32 %v36, 1880
    %v272 = vadd.s32 %v36, 1888
    %v273 = vadd.s32 %v36, 1896
    %v274 = vadd.s32 %v36, 1904
    %v275 = vadd.s32 %v36, 1912
    %v276 = vadd.s32 %v36, 1920
    %v277 = vadd.s32 %v36, 1928
    %v278 = vadd.s32 %v36, 1936
    %v279 = vadd.s32 %v36, 1944
    %v280 = vadd.s32 %v36, 1952
    %v281 = vadd.s32 %v36, 1960
    %v282 = vadd.s32 %v36, 1968
    %v283 = vadd.s32 %v36, 1976
    %v284 = vadd.s32 %v36, 1984
    %v285 = vadd.s32 %v36, 1992
    %v286 = vadd.s32 %v36, 2000
    %v287 = vadd.s32 %v36, 2008
    %v288 = vadd.s32 %v36, 2016
    %v289 = vadd.s32 %v36, 2024
    %v290 = vadd.s32 %v36, 2032
    %v291 = vadd.s32 %v36, 2040
    %v292 = vstv %s21
    %v293 = vadd.s32 %v292, %v36
    %v294 = vadd.s32 %v292, %v37
    %v295 = vadd.s32 %v292, %v38
    %v296 = vadd.s32 %v292, %v39
    %v297 = vadd.s32 %v292, %v40
    %v298 = vadd.s32 %v292, %v41
    %v299 = vadd.s32 %v292, %v42
    %v300 = vadd.s32 %v292, %v43
    %v301 = vadd.s32 %v292, %v44
    %v302 = vadd.s32 %v292, %v45
    %v303 = vadd.s32 %v292, %v46
    %v304 = vadd.s32 %v292, %v47
    %v305 = vadd.s32 %v292, %v48
    %v306 = vadd.s32 %v292, %v49
    %v307 = vadd.s32 %v292, %v50
    %v308 = vadd.s32 %v292, %v51
    %v309 = vadd.s32 %v292, %v52
    %v310 = vadd.s32 %v292, %v53
    %v311 = vadd.s32 %v292, %v54
    %v312 = vadd.s32 %v292, %v55
    %v313 = vadd.s32 %v292, %v56
    %v314 = vadd.s32 %v292, %v57
    %v315 = vadd.s32 %v292, %v58
    %v316 = vadd.s32 %v292, %v59
    %v317 = vadd.s32 %v292, %v60
    %v318 = vadd.s32 %v292, %v61
    %v319 = vadd.s32 %v292, %v62
    %v320 = vadd.s32 %v292, %v63
    %v321 = vadd.s32 %v292, %v64
    %v322 = vadd.s32 %v292, %v65
    %v323 = vadd.s32 %v292, %v66
    %v324 = vadd.s32 %v292, %v67
    %v325 = vadd.s32 %v292, %v68
    %v326 = vadd.s32 %v292, %v69
    %v327 = vadd.s32 %v292, %v70
    %v328 = vadd.s32 %v292, %v71
    %v329 = vadd.s32 %v292, %v72
    %v330 = vadd.s32 %v292, %v73
    %v331 = vadd.s32 %v292, %v74
    %v332 = vadd.s32 %v292, %v75
    %v333 = vadd.s32 %v292, %v76
    %v334 = vadd.s32 %v292, %v77
    %v335 = vadd.s32 %v292, %v78
    %v336 = vadd.s32 %v292, %v79
    %v337 = vadd.s32 %v292, %v80
    %v338 = vadd.s32 %v292, %v81
    %v339 = vadd.s32 %v292, %v82
    %v340 = vadd.s32 %v292, %v83
    %v341 = vadd.s32 %v292, %v84
    %v342 = vadd.s32 %v292, %v85
    %v343 = vadd.s32 %v292, %v86
    %v344 = vadd.s32 %v292, %v87
    %v345 = vadd.s32 %v292, %v88
    %v346 = vadd.s32 %v292, %v89
    %v347 = vadd.s32 %v292, %v90
    %v348 = vadd.s32 %v292, %v91
    %v349 = vadd.s32 %v292, %v92
    %v350 = vadd.s32 %v292, %v93
    %v351 = vadd.s32 %v292, %v94
    %v352 = vadd.s32 %v292, %v95
    %v353 = vadd.s32 %v292, %v96
    %v354 = vadd.s32 %v292, %v97
    %v355 = vadd.s32 %v292, %v98
    %v356 = vadd.s32 %v292, %v99
    %v357 = vadd.s32 %v292, %v100
    %v358 = vadd.s32 %v292, %v101
    %v359 = vadd.s32 %v292, %v102
    %v360 = vadd.s32 %v292, %v103
    %v361 = vadd.s32 %v292, %v104
    %v362 = vadd.s32 %v292, %v105
    %v363 = vadd.s32 %v292, %v106
    %v364 = vadd.s32 %v292, %v107
    %v365 = vadd.s32 %v292, %v108
    %v366 = vadd.s32 %v292, %v109
    %v367 = vadd.s32 %v292, %v110
    %v368 = vadd.s32 %v292, %v111
    %v369 = vadd.s32 %v292, %v112
    %v370 = vadd.s32 %v292, %v113
    %v371 = vadd.s32 %v292, %v114
    %v372 = vadd.s32 %v292, %v115
    %v373 = vadd.s32 %v292, %v116
    %v374 = vadd.s32 %v292, %v117
    %v375 = vadd.s32 %v292, %v118
    %v376 = vadd.s32 %v292, %v119
    %v377 = vadd.s32 %v292, %v120
    %v378 = vadd.s32 %v292, %v121
    %v379 = vadd.s32 %v292, %v122
    %v380 = vadd.s32 %v292, %v123
    %v381 = vadd.s32 %v292, %v124
    %v382 = vadd.s32 %v292, %v125
    %v383 = vadd.s32 %v292, %v126
    %v384 = vadd.s32 %v292, %v127
    %v385 = vadd.s32 %v292, %v128
    %v386 = vadd.s32 %v292, %v129
    %v387 = vadd.s32 %v292, %v130
    %v388 = vadd.s32 %v292, %v131
    %v389 = vadd.s32 %v292, %v132
    %v390 = vadd.s32 %v292, %v133
    %v391 = vadd.s32 %v292, %v134
    %v392 = vadd.s32 %v292, %v135
    %v393 = vadd.s32 %v292, %v136
    %v394 = vadd.s32 %v292, %v137
    %v395 = vadd.s32 %v292, %v138
    %v396 = vadd.s32 %v292, %v139
    %v397 = vadd.s32 %v292, %v140
    %v398 = vadd.s32 %v292, %v141
    %v399 = vadd.s32 %v292, %v142
    %v400 = vadd.s32 %v292, %v143
    %v401 = vadd.s32 %v292, %v144
    %v402 = vadd.s32 %v292, %v145
    %v403 = vadd.s32 %v292, %v146
    %v404 = vadd.s32 %v292, %v147
    %v405 = vadd.s32 %v292, %v148
    %v406 = vadd.s32 %v292, %v149
    %v407 = vadd.s32 %v292, %v150
    %v408 = vadd.s32 %v292, %v151
    %v409 = vadd.s32 %v292, %v152
    %v410 = vadd.s32 %v292, %v153
    %v411 = vadd.s32 %v292, %v154
    %v412 = vadd.s32 %v292, %v155
    %v413 = vadd.s32 %v292, %v156
    %v414 = vadd.s32 %v292, %v157
    %v415 = vadd.s32 %v292, %v158
    %v416 = vadd.s32 %v292, %v159
    %v417 = vadd.s32 %v292, %v160
    %v418 = vadd.s32 %v292, %v161
    %v419 = vadd.s32 %v292, %v162
    %v420 = vadd.s32 %v292, %v163
    %v421 = vadd.s32 %v292, %v164
    %v422 = vadd.s32 %v292, %v165
    %v423 = vadd.s32 %v292, %v166
    %v424 = vadd.s32 %v292, %v167
    %v425 = vadd.s32 %v292, %v168
    %v426 = vadd.s32 %v292, %v169
    %v427 = vadd.s32 %v292, %v170
    %v428 = vadd.s32 %v292, %v171
    %v429 = vadd.s32 %v292, %v172
    %v430 = vadd.s32 %v292, %v173
    %v431 = vadd.s32 %v292, %v174
    %v432 = vadd.s32 %v292, %v175
    %v433 = vadd.s32 %v292, %v176
    %v434 = vadd.s32 %v292, %v177
    %v435 = vadd.s32 %v292, %v178
    %v436 = vadd.s32 %v292, %v179
    %v437 = vadd.s32 %v292, %v180
    %v438 = vadd.s32 %v292, %v181
    %v439 = vadd.s32 %v292, %v182
    %v440 = vadd.s32 %v292, %v183
    %v441 = vadd.s32 %v292, %v184
    %v442 = vadd.s32 %v292, %v185
    %v443 = vadd.s32 %v292, %v186
    %v444 = vadd.s32 %v292, %v187
    %v445 = vadd.s32 %v292, %v188
    %v446 = vadd.s32 %v292, %v189
    %v447 = vadd.s32 %v292, %v190
    %v448 = vadd.s32 %v292, %v191
    %v449 = vadd.s32 %v292, %v192
    %v450 = vadd.s32 %v292, %v193
    %v451 = vadd.s32 %v292, %v194
    %v452 = vadd.s32 %v292, %v195
    %v453 = vadd.s32 %v292, %v196
    %v454 = vadd.s32 %v292, %v197
    %v455 = vadd.s32 %v292, %v198
    %v456 = vadd.s32 %v292, %v199
    %v457 = vadd.s32 %v292, %v200
    %v458 = vadd.s32 %v292, %v201
    %v459 = vadd.s32 %v292, %v202
    %v460 = vadd.s32 %v292, %v203
    %v461 = vadd.s32 %v292, %v204
    %v462 = vadd.s32 %v292, %v205
    %v463 = vadd.s32 %v292, %v206
    %v464 = vadd.s32 %v292, %v207
    %v465 = vadd.s32 %v292, %v208
    %v466 = vadd.s32 %v292, %v209
    %v467 = vadd.s32 %v292, %v210
    %v468 = vadd.s32 %v292, %v211
    %v469 = vadd.s32 %v292, %v212
    %v470 = vadd.s32 %v292, %v213
    %v471 = vadd.s32 %v292, %v214
    %v472 = vadd.s32 %v292, %v215
    %v473 = vadd.s32 %v292, %v216
    %v474 = vadd.s32 %v292, %v217
    %v475 = vadd.s32 %v292, %v218
    %v476 = vadd.s32 %v292, %v219
    %v477 = vadd.s32 %v292, %v220
    %v478 = vadd.s32 %v292, %v221
    %v479 = vadd.s32 %v292, %v222
    %v480 = vadd.s32 %v292, %v223
    %v481 = vadd.s32 %v292, %v224
    %v482 = vadd.s32 %v292, %v225
    %v483 = vadd.s32 %v292, %v226
    %v484 = vadd.s32 %v292, %v227
    %v485 = vadd.s32 %v292, %v228
    %v486 = vadd.s32 %v292, %v229
    %v487 = vadd.s32 %v292, %v230
    %v488 = vadd.s32 %v292, %v231
    %v489 = vadd.s32 %v292, %v232
    %v490 = vadd.s32 %v292, %v233
    %v491 = vadd.s32 %v292, %v234
    %v492 = vadd.s32 %v292, %v235
    %v493 = vadd.s32 %v292, %v236
    %v494 = vadd.s32 %v292, %v237
    %v495 = vadd.s32 %v292, %v238
    %v496 = vadd.s32 %v292, %v239
    %v497 = vadd.s32 %v292, %v240
    %v498 = vadd.s32 %v292, %v241
    %v499 = vadd.s32 %v292, %v242
    %v500 = vadd.s32 %v292, %v243
    %v501 = vadd.s32 %v292, %v244
    %v502 = vadd.s32 %v292, %v245
    %v503 = vadd.s32 %v292, %v246
    %v504 = vadd.s32 %v292, %v247
    %v505 = vadd.s32 %v292, %v248
    %v506 = vadd.s32 %v292, %v249
    %v507 = vadd.s32 %v292, %v250
    %v508 = vadd.s32 %v292, %v251
    %v509 = vadd.s32 %v292, %v252
    %v510 = vadd.s32 %v292, %v253
    %v511 = vadd.s32 %v292, %v254
    %v512 = vadd.s32 %v292, %v255
    %v513 = vadd.s32 %v292, %v256
    %v514 = vadd.s32 %v292, %v257
    %v515 = vadd.s32 %v292, %v258
    %v516 = vadd.s32 %v292, %v259
    %v517 = vadd.s32 %v292, %v260
    %v518 = vadd.s32 %v292, %v261
    %v519 = vadd.s32 %v292, %v262
    %v520 = vadd.s32 %v292, %v263
    %v521 = vadd.s32 %v292, %v264
    %v522 = vadd.s32 %v292, %v265
    %v523 = vadd.s32 %v292, %v266
    %v524 = vadd.s32 %v292, %v267
    %v525 = vadd.s32 %v292, %v268
    %v526 = vadd.s32 %v292, %v269
    %v527 = vadd.s32 %v292, %v270
    %v528 = vadd.s32 %v292, %v271
    %v529 = vadd.s32 %v292, %v272
    %v530 = vadd.s32 %v292, %v273
    %v531 = vadd.s32 %v292, %v274
    %v532 = vadd.s32 %v292, %v275
    %v533 = vadd.s32 %v292, %v276
    %v534 = vadd.s32 %v292, %v277
    %v535 = vadd.s32 %v292, %v278
    %v536 = vadd.s32 %v292, %v279
    %v537 = vadd.s32 %v292, %v280
    %v538 = vadd.s32 %v292, %v281
    %v539 = vadd.s32 %v292, %v282
    %v540 = vadd.s32 %v292, %v283
    %v541 = vadd.s32 %v292, %v284
    %v542 = vadd.s32 %v292, %v285
    %v543 = vadd.s32 %v292, %v286
    %v544 = vadd.s32 %v292, %v287
    %v545 = vadd.s32 %v292, %v288
    %v546 = vadd.s32 %v292, %v289
    %v547 = vadd.s32 %v292, %v290
    %v548 = vadd.s32 %v292, %v291
    %v549 = vlaneseq
    %v550 = vand.u32 %v549, 127
    %v551 = vadd.s32 %v550, 128
    %v552 = vadd.s32 %v550, 256
    %v553 = vadd.s32 %v550, 384
    %v554 = vadd.s32 %v550, 512
    %v555 = vadd.s32 %v550, 640
    %v556 = vadd.s32 %v550, 768
    %v557 = vadd.s32 %v550, 896
    %v558 = vadd.s32 %v550, 1024
    %v559 = vadd.s32 %v550, 1152
    %v560 = vadd.s32 %v550, 1280
    %v561 = vadd.s32 %v550, 1408
    %v562 = vadd.s32 %v550, 1536
    %v563 = vadd.s32 %v550, 1664
    %v564 = vadd.s32 %v550, 1792
    %v565 = vadd.s32 %v550, 1920
    %v566 = vadd.s32 %v292, %v550
    %v567 = vadd.s32 %v292, %v551
    %v568 = vadd.s32 %v292, %v552
    %v569 = vadd.s32 %v292, %v553
    %v570 = vadd.s32 %v292, %v554
    %v571 = vadd.s32 %v292, %v555
    %v572 = vadd.s32 %v292, %v556
    %v573 = vadd.s32 %v292, %v557
    %v574 = vadd.s32 %v292, %v558
    %v575 = vadd.s32 %v292, %v559
    %v576 = vadd.s32 %v292, %v560
    %v577 = vadd.s32 %v292, %v561
    %v578 = vadd.s32 %v292, %v562
    %v579 = vadd.s32 %v292, %v563
    %v580 = vadd.s32 %v292, %v564
    %v581 = vadd.s32 %v292, %v565
    %vm582 = vcmp.lt.s32.totalorder %v293, 2000
    %vm583 = vcmp.lt.s32.totalorder %v294, 2000
    %vm584 = vcmp.lt.s32.totalorder %v295, 2000
    %vm585 = vcmp.lt.s32.totalorder %v296, 2000
    %vm586 = vcmp.lt.s32.totalorder %v297, 2000
    %vm587 = vcmp.lt.s32.totalorder %v298, 2000
    %vm588 = vcmp.lt.s32.totalorder %v299, 2000
    %vm589 = vcmp.lt.s32.totalorder %v300, 2000
    %vm590 = vcmp.lt.s32.totalorder %v301, 2000
    %vm591 = vcmp.lt.s32.totalorder %v302, 2000
    %vm592 = vcmp.lt.s32.totalorder %v303, 2000
    %vm593 = vcmp.lt.s32.totalorder %v304, 2000
    %vm594 = vcmp.lt.s32.totalorder %v305, 2000
    %vm595 = vcmp.lt.s32.totalorder %v306, 2000
    %vm596 = vcmp.lt.s32.totalorder %v307, 2000
    %vm597 = vcmp.lt.s32.totalorder %v308, 2000
    %vm598 = vcmp.lt.s32.totalorder %v309, 2000
    %vm599 = vcmp.lt.s32.totalorder %v310, 2000
    %vm600 = vcmp.lt.s32.totalorder %v311, 2000
    %vm601 = vcmp.lt.s32.totalorder %v312, 2000
    %vm602 = vcmp.lt.s32.totalorder %v313, 2000
    %vm603 = vcmp.lt.s32.totalorder %v314, 2000
    %vm604 = vcmp.lt.s32.totalorder %v315, 2000
    %vm605 = vcmp.lt.s32.totalorder %v316, 2000
    %vm606 = vcmp.lt.s32.totalorder %v317, 2000
    %vm607 = vcmp.lt.s32.totalorder %v318, 2000
    %vm608 = vcmp.lt.s32.totalorder %v319, 2000
    %vm609 = vcmp.lt.s32.totalorder %v320, 2000
    %vm610 = vcmp.lt.s32.totalorder %v321, 2000
    %vm611 = vcmp.lt.s32.totalorder %v322, 2000
    %vm612 = vcmp.lt.s32.totalorder %v323, 2000
    %vm613 = vcmp.lt.s32.totalorder %v324, 2000
    %vm614 = vcmp.lt.s32.totalorder %v325, 2000
    %vm615 = vcmp.lt.s32.totalorder %v326, 2000
    %vm616 = vcmp.lt.s32.totalorder %v327, 2000
    %vm617 = vcmp.lt.s32.totalorder %v328, 2000
    %vm618 = vcmp.lt.s32.totalorder %v329, 2000
    %vm619 = vcmp.lt.s32.totalorder %v330, 2000
    %vm620 = vcmp.lt.s32.totalorder %v331, 2000
    %vm621 = vcmp.lt.s32.totalorder %v332, 2000
    %vm622 = vcmp.lt.s32.totalorder %v333, 2000
    %vm623 = vcmp.lt.s32.totalorder %v334, 2000
    %vm624 = vcmp.lt.s32.totalorder %v335, 2000
    %vm625 = vcmp.lt.s32.totalorder %v336, 2000
    %vm626 = vcmp.lt.s32.totalorder %v337, 2000
    %vm627 = vcmp.lt.s32.totalorder %v338, 2000
    %vm628 = vcmp.lt.s32.totalorder %v339, 2000
    %vm629 = vcmp.lt.s32.totalorder %v340, 2000
    %vm630 = vcmp.lt.s32.totalorder %v341, 2000
    %vm631 = vcmp.lt.s32.totalorder %v342, 2000
    %vm632 = vcmp.lt.s32.totalorder %v343, 2000
    %vm633 = vcmp.lt.s32.totalorder %v344, 2000
    %vm634 = vcmp.lt.s32.totalorder %v345, 2000
    %vm635 = vcmp.lt.s32.totalorder %v346, 2000
    %vm636 = vcmp.lt.s32.totalorder %v347, 2000
    %vm637 = vcmp.lt.s32.totalorder %v348, 2000
    %vm638 = vcmp.lt.s32.totalorder %v349, 2000
    %vm639 = vcmp.lt.s32.totalorder %v350, 2000
    %vm640 = vcmp.lt.s32.totalorder %v351, 2000
    %vm641 = vcmp.lt.s32.totalorder %v352, 2000
    %vm642 = vcmp.lt.s32.totalorder %v353, 2000
    %vm643 = vcmp.lt.s32.totalorder %v354, 2000
    %vm644 = vcmp.lt.s32.totalorder %v355, 2000
    %vm645 = vcmp.lt.s32.totalorder %v356, 2000
    %vm646 = vcmp.lt.s32.totalorder %v357, 2000
    %vm647 = vcmp.lt.s32.totalorder %v358, 2000
    %vm648 = vcmp.lt.s32.totalorder %v359, 2000
    %vm649 = vcmp.lt.s32.totalorder %v360, 2000
    %vm650 = vcmp.lt.s32.totalorder %v361, 2000
    %vm651 = vcmp.lt.s32.totalorder %v362, 2000
    %vm652 = vcmp.lt.s32.totalorder %v363, 2000
    %vm653 = vcmp.lt.s32.totalorder %v364, 2000
    %vm654 = vcmp.lt.s32.totalorder %v365, 2000
    %vm655 = vcmp.lt.s32.totalorder %v366, 2000
    %vm656 = vcmp.lt.s32.totalorder %v367, 2000
    %vm657 = vcmp.lt.s32.totalorder %v368, 2000
    %vm658 = vcmp.lt.s32.totalorder %v369, 2000
    %vm659 = vcmp.lt.s32.totalorder %v370, 2000
    %vm660 = vcmp.lt.s32.totalorder %v371, 2000
    %vm661 = vcmp.lt.s32.totalorder %v372, 2000
    %vm662 = vcmp.lt.s32.totalorder %v373, 2000
    %vm663 = vcmp.lt.s32.totalorder %v374, 2000
    %vm664 = vcmp.lt.s32.totalorder %v375, 2000
    %vm665 = vcmp.lt.s32.totalorder %v376, 2000
    %vm666 = vcmp.lt.s32.totalorder %v377, 2000
    %vm667 = vcmp.lt.s32.totalorder %v378, 2000
    %vm668 = vcmp.lt.s32.totalorder %v379, 2000
    %vm669 = vcmp.lt.s32.totalorder %v380, 2000
    %vm670 = vcmp.lt.s32.totalorder %v381, 2000
    %vm671 = vcmp.lt.s32.totalorder %v382, 2000
    %vm672 = vcmp.lt.s32.totalorder %v383, 2000
    %vm673 = vcmp.lt.s32.totalorder %v384, 2000
    %vm674 = vcmp.lt.s32.totalorder %v385, 2000
    %vm675 = vcmp.lt.s32.totalorder %v386, 2000
    %vm676 = vcmp.lt.s32.totalorder %v387, 2000
    %vm677 = vcmp.lt.s32.totalorder %v388, 2000
    %vm678 = vcmp.lt.s32.totalorder %v389, 2000
    %vm679 = vcmp.lt.s32.totalorder %v390, 2000
    %vm680 = vcmp.lt.s32.totalorder %v391, 2000
    %vm681 = vcmp.lt.s32.totalorder %v392, 2000
    %vm682 = vcmp.lt.s32.totalorder %v393, 2000
    %vm683 = vcmp.lt.s32.totalorder %v394, 2000
    %vm684 = vcmp.lt.s32.totalorder %v395, 2000
    %vm685 = vcmp.lt.s32.totalorder %v396, 2000
    %vm686 = vcmp.lt.s32.totalorder %v397, 2000
    %vm687 = vcmp.lt.s32.totalorder %v398, 2000
    %vm688 = vcmp.lt.s32.totalorder %v399, 2000
    %vm689 = vcmp.lt.s32.totalorder %v400, 2000
    %vm690 = vcmp.lt.s32.totalorder %v401, 2000
    %vm691 = vcmp.lt.s32.totalorder %v402, 2000
    %vm692 = vcmp.lt.s32.totalorder %v403, 2000
    %vm693 = vcmp.lt.s32.totalorder %v404, 2000
    %vm694 = vcmp.lt.s32.totalorder %v405, 2000
    %vm695 = vcmp.lt.s32.totalorder %v406, 2000
    %vm696 = vcmp.lt.s32.totalorder %v407, 2000
    %vm697 = vcmp.lt.s32.totalorder %v408, 2000
    %vm698 = vcmp.lt.s32.totalorder %v409, 2000
    %vm699 = vcmp.lt.s32.totalorder %v410, 2000
    %vm700 = vcmp.lt.s32.totalorder %v411, 2000
    %vm701 = vcmp.lt.s32.totalorder %v412, 2000
    %vm702 = vcmp.lt.s32.totalorder %v413, 2000
    %vm703 = vcmp.lt.s32.totalorder %v414, 2000
    %vm704 = vcmp.lt.s32.totalorder %v415, 2000
    %vm705 = vcmp.lt.s32.totalorder %v416, 2000
    %vm706 = vcmp.lt.s32.totalorder %v417, 2000
    %vm707 = vcmp.lt.s32.totalorder %v418, 2000
    %vm708 = vcmp.lt.s32.totalorder %v419, 2000
    %vm709 = vcmp.lt.s32.totalorder %v420, 2000
    %vm710 = vcmp.lt.s32.totalorder %v421, 2000
    %vm711 = vcmp.lt.s32.totalorder %v422, 2000
    %vm712 = vcmp.lt.s32.totalorder %v423, 2000
    %vm713 = vcmp.lt.s32.totalorder %v424, 2000
    %vm714 = vcmp.lt.s32.totalorder %v425, 2000
    %vm715 = vcmp.lt.s32.totalorder %v426, 2000
    %vm716 = vcmp.lt.s32.totalorder %v427, 2000
    %vm717 = vcmp.lt.s32.totalorder %v428, 2000
    %vm718 = vcmp.lt.s32.totalorder %v429, 2000
    %vm719 = vcmp.lt.s32.totalorder %v430, 2000
    %vm720 = vcmp.lt.s32.totalorder %v431, 2000
    %vm721 = vcmp.lt.s32.totalorder %v432, 2000
    %vm722 = vcmp.lt.s32.totalorder %v433, 2000
    %vm723 = vcmp.lt.s32.totalorder %v434, 2000
    %vm724 = vcmp.lt.s32.totalorder %v435, 2000
    %vm725 = vcmp.lt.s32.totalorder %v436, 2000
    %vm726 = vcmp.lt.s32.totalorder %v437, 2000
    %vm727 = vcmp.lt.s32.totalorder %v438, 2000
    %vm728 = vcmp.lt.s32.totalorder %v439, 2000
    %vm729 = vcmp.lt.s32.totalorder %v440, 2000
    %vm730 = vcmp.lt.s32.totalorder %v441, 2000
    %vm731 = vcmp.lt.s32.totalorder %v442, 2000
    %vm732 = vcmp.lt.s32.totalorder %v443, 2000
    %vm733 = vcmp.lt.s32.totalorder %v444, 2000
    %vm734 = vcmp.lt.s32.totalorder %v445, 2000
    %vm735 = vcmp.lt.s32.totalorder %v446, 2000
    %vm736 = vcmp.lt.s32.totalorder %v447, 2000
    %vm737 = vcmp.lt.s32.totalorder %v448, 2000
    %vm738 = vcmp.lt.s32.totalorder %v449, 2000
    %vm739 = vcmp.lt.s32.totalorder %v450, 2000
    %vm740 = vcmp.lt.s32.totalorder %v451, 2000
    %vm741 = vcmp.lt.s32.totalorder %v452, 2000
    %vm742 = vcmp.lt.s32.totalorder %v453, 2000
    %vm743 = vcmp.lt.s32.totalorder %v454, 2000
    %vm744 = vcmp.lt.s32.totalorder %v455, 2000
    %vm745 = vcmp.lt.s32.totalorder %v456, 2000
    %vm746 = vcmp.lt.s32.totalorder %v457, 2000
    %vm747 = vcmp.lt.s32.totalorder %v458, 2000
    %vm748 = vcmp.lt.s32.totalorder %v459, 2000
    %vm749 = vcmp.lt.s32.totalorder %v460, 2000
    %vm750 = vcmp.lt.s32.totalorder %v461, 2000
    %vm751 = vcmp.lt.s32.totalorder %v462, 2000
    %vm752 = vcmp.lt.s32.totalorder %v463, 2000
    %vm753 = vcmp.lt.s32.totalorder %v464, 2000
    %vm754 = vcmp.lt.s32.totalorder %v465, 2000
    %vm755 = vcmp.lt.s32.totalorder %v466, 2000
    %vm756 = vcmp.lt.s32.totalorder %v467, 2000
    %vm757 = vcmp.lt.s32.totalorder %v468, 2000
    %vm758 = vcmp.lt.s32.totalorder %v469, 2000
    %vm759 = vcmp.lt.s32.totalorder %v470, 2000
    %vm760 = vcmp.lt.s32.totalorder %v471, 2000
    %vm761 = vcmp.lt.s32.totalorder %v472, 2000
    %vm762 = vcmp.lt.s32.totalorder %v473, 2000
    %vm763 = vcmp.lt.s32.totalorder %v474, 2000
    %vm764 = vcmp.lt.s32.totalorder %v475, 2000
    %vm765 = vcmp.lt.s32.totalorder %v476, 2000
    %vm766 = vcmp.lt.s32.totalorder %v477, 2000
    %vm767 = vcmp.lt.s32.totalorder %v478, 2000
    %vm768 = vcmp.lt.s32.totalorder %v479, 2000
    %vm769 = vcmp.lt.s32.totalorder %v480, 2000
    %vm770 = vcmp.lt.s32.totalorder %v481, 2000
    %vm771 = vcmp.lt.s32.totalorder %v482, 2000
    %vm772 = vcmp.lt.s32.totalorder %v483, 2000
    %vm773 = vcmp.lt.s32.totalorder %v484, 2000
    %vm774 = vcmp.lt.s32.totalorder %v485, 2000
    %vm775 = vcmp.lt.s32.totalorder %v486, 2000
    %vm776 = vcmp.lt.s32.totalorder %v487, 2000
    %vm777 = vcmp.lt.s32.totalorder %v488, 2000
    %vm778 = vcmp.lt.s32.totalorder %v489, 2000
    %vm779 = vcmp.lt.s32.totalorder %v490, 2000
    %vm780 = vcmp.lt.s32.totalorder %v491, 2000
    %vm781 = vcmp.lt.s32.totalorder %v492, 2000
    %vm782 = vcmp.lt.s32.totalorder %v493, 2000
    %vm783 = vcmp.lt.s32.totalorder %v494, 2000
    %vm784 = vcmp.lt.s32.totalorder %v495, 2000
    %vm785 = vcmp.lt.s32.totalorder %v496, 2000
    %vm786 = vcmp.lt.s32.totalorder %v497, 2000
    %vm787 = vcmp.lt.s32.totalorder %v498, 2000
    %vm788 = vcmp.lt.s32.totalorder %v499, 2000
    %vm789 = vcmp.lt.s32.totalorder %v500, 2000
    %vm790 = vcmp.lt.s32.totalorder %v501, 2000
    %vm791 = vcmp.lt.s32.totalorder %v502, 2000
    %vm792 = vcmp.lt.s32.totalorder %v503, 2000
    %vm793 = vcmp.lt.s32.totalorder %v504, 2000
    %vm794 = vcmp.lt.s32.totalorder %v505, 2000
    %vm795 = vcmp.lt.s32.totalorder %v506, 2000
    %vm796 = vcmp.lt.s32.totalorder %v507, 2000
    %vm797 = vcmp.lt.s32.totalorder %v508, 2000
    %vm798 = vcmp.lt.s32.totalorder %v509, 2000
    %vm799 = vcmp.lt.s32.totalorder %v510, 2000
    %vm800 = vcmp.lt.s32.totalorder %v511, 2000
    %vm801 = vcmp.lt.s32.totalorder %v512, 2000
    %vm802 = vcmp.lt.s32.totalorder %v513, 2000
    %vm803 = vcmp.lt.s32.totalorder %v514, 2000
    %vm804 = vcmp.lt.s32.totalorder %v515, 2000
    %vm805 = vcmp.lt.s32.totalorder %v516, 2000
    %vm806 = vcmp.lt.s32.totalorder %v517, 2000
    %vm807 = vcmp.lt.s32.totalorder %v518, 2000
    %vm808 = vcmp.lt.s32.totalorder %v519, 2000
    %vm809 = vcmp.lt.s32.totalorder %v520, 2000
    %vm810 = vcmp.lt.s32.totalorder %v521, 2000
    %vm811 = vcmp.lt.s32.totalorder %v522, 2000
    %vm812 = vcmp.lt.s32.totalorder %v523, 2000
    %vm813 = vcmp.lt.s32.totalorder %v524, 2000
    %vm814 = vcmp.lt.s32.totalorder %v525, 2000
    %vm815 = vcmp.lt.s32.totalorder %v526, 2000
    %vm816 = vcmp.lt.s32.totalorder %v527, 2000
    %vm817 = vcmp.lt.s32.totalorder %v528, 2000
    %vm818 = vcmp.lt.s32.totalorder %v529, 2000
    %vm819 = vcmp.lt.s32.totalorder %v530, 2000
    %vm820 = vcmp.lt.s32.totalorder %v531, 2000
    %vm821 = vcmp.lt.s32.totalorder %v532, 2000
    %vm822 = vcmp.lt.s32.totalorder %v533, 2000
    %vm823 = vcmp.lt.s32.totalorder %v534, 2000
    %vm824 = vcmp.lt.s32.totalorder %v535, 2000
    %vm825 = vcmp.lt.s32.totalorder %v536, 2000
    %vm826 = vcmp.lt.s32.totalorder %v537, 2000
    %vm827 = vcmp.lt.s32.totalorder %v538, 2000
    %vm828 = vcmp.lt.s32.totalorder %v539, 2000
    %vm829 = vcmp.lt.s32.totalorder %v540, 2000
    %vm830 = vcmp.lt.s32.totalorder %v541, 2000
    %vm831 = vcmp.lt.s32.totalorder %v542, 2000
    %vm832 = vcmp.lt.s32.totalorder %v543, 2000
    %vm833 = vcmp.lt.s32.totalorder %v544, 2000
    %vm834 = vcmp.lt.s32.totalorder %v545, 2000
    %vm835 = vcmp.lt.s32.totalorder %v546, 2000
    %vm836 = vcmp.lt.s32.totalorder %v547, 2000
    %vm837 = vcmp.lt.s32.totalorder %v548, 2000
    %vm838 = vcmp.lt.s32.totalorder %v566, 2000
    %vm839 = vcmp.lt.s32.totalorder %v567, 2000
    %vm840 = vcmp.lt.s32.totalorder %v568, 2000
    %vm841 = vcmp.lt.s32.totalorder %v569, 2000
    %vm842 = vcmp.lt.s32.totalorder %v570, 2000
    %vm843 = vcmp.lt.s32.totalorder %v571, 2000
    %vm844 = vcmp.lt.s32.totalorder %v572, 2000
    %vm845 = vcmp.lt.s32.totalorder %v573, 2000
    %vm846 = vcmp.lt.s32.totalorder %v574, 2000
    %vm847 = vcmp.lt.s32.totalorder %v575, 2000
    %vm848 = vcmp.lt.s32.totalorder %v576, 2000
    %vm849 = vcmp.lt.s32.totalorder %v577, 2000
    %vm850 = vcmp.lt.s32.totalorder %v578, 2000
    %vm851 = vcmp.lt.s32.totalorder %v579, 2000
    %vm852 = vcmp.lt.s32.totalorder %v580, 2000
    %vm853 = vcmp.lt.s32.totalorder %v581, 2000
    %v854 = vld [vmem:[%s0] sm:$0xff]
    %v855 = vld [vmem:[%s0 + $0x8] sm:$0xff]
    %v856 = vld [vmem:[%s0 + $0x10] sm:$0xff]
    %v857 = vld [vmem:[%s0 + $0x18] sm:$0xff]
    %v858 = vld [vmem:[%s0 + $0x20] sm:$0xff]
    %v859 = vld [vmem:[%s0 + $0x28] sm:$0xff]
    %v860 = vld [vmem:[%s0 + $0x30] sm:$0xff]
    %v861 = vld [vmem:[%s0 + $0x38] sm:$0xff]
    %v862 = vld [vmem:[%s0 + $0x40] sm:$0xff]
    %v863 = vld [vmem:[%s0 + $0x48] sm:$0xff]
    %v864 = vld [vmem:[%s0 + $0x50] sm:$0xff]
    %v865 = vld [vmem:[%s0 + $0x58] sm:$0xff]
    %v866 = vld [vmem:[%s0 + $0x60] sm:$0xff]
    %v867 = vld [vmem:[%s0 + $0x68] sm:$0xff]
    %v868 = vld [vmem:[%s0 + $0x70] sm:$0xff]
    %v869 = vld [vmem:[%s0 + $0x78] sm:$0xff]
    %v870 = vld [vmem:[%s0 + $0x80] sm:$0xff]
    %v871 = vld [vmem:[%s0 + $0x88] sm:$0xff]
    %v872 = vld [vmem:[%s0 + $0x90] sm:$0xff]
    %v873 = vld [vmem:[%s0 + $0x98] sm:$0xff]
    %v874 = vld [vmem:[%s0 + $0xa0] sm:$0xff]
    %v875 = vld [vmem:[%s0 + $0xa8] sm:$0xff]
    %v876 = vld [vmem:[%s0 + $0xb0] sm:$0xff]
    %v877 = vld [vmem:[%s0 + $0xb8] sm:$0xff]
    %v878 = vld [vmem:[%s0 + $0xc0] sm:$0xff]
    %v879 = vld [vmem:[%s0 + $0xc8] sm:$0xff]
    %v880 = vld [vmem:[%s0 + $0xd0] sm:$0xff]
    %v881 = vld [vmem:[%s0 + $0xd8] sm:$0xff]
    %v882 = vld [vmem:[%s0 + $0xe0] sm:$0xff]
    %v883 = vld [vmem:[%s0 + $0xe8] sm:$0xff]
    %v884 = vld [vmem:[%s0 + $0xf0] sm:$0xff]
    %v885 = vld [vmem:[%s0 + $0xf8] sm:$0xff]
    %v886 = vld [vmem:[%s0 + $0x100] sm:$0xff]
    %v887 = vld [vmem:[%s0 + $0x108] sm:$0xff]
    %v888 = vld [vmem:[%s0 + $0x110] sm:$0xff]
    %v889 = vld [vmem:[%s0 + $0x118] sm:$0xff]
    %v890 = vld [vmem:[%s0 + $0x120] sm:$0xff]
    %v891 = vld [vmem:[%s0 + $0x128] sm:$0xff]
    %v892 = vld [vmem:[%s0 + $0x130] sm:$0xff]
    %v893 = vld [vmem:[%s0 + $0x138] sm:$0xff]
    %v894 = vld [vmem:[%s0 + $0x140] sm:$0xff]
    %v895 = vld [vmem:[%s0 + $0x148] sm:$0xff]
    %v896 = vld [vmem:[%s0 + $0x150] sm:$0xff]
    %v897 = vld [vmem:[%s0 + $0x158] sm:$0xff]
    %v898 = vld [vmem:[%s0 + $0x160] sm:$0xff]
    %v899 = vld [vmem:[%s0 + $0x168] sm:$0xff]
    %v900 = vld [vmem:[%s0 + $0x170] sm:$0xff]
    %v901 = vld [vmem:[%s0 + $0x178] sm:$0xff]
    %v902 = vld [vmem:[%s0 + $0x180] sm:$0xff]
    %v903 = vld [vmem:[%s0 + $0x188] sm:$0xff]
    %v904 = vld [vmem:[%s0 + $0x190] sm:$0xff]
    %v905 = vld [vmem:[%s0 + $0x198] sm:$0xff]
    %v906 = vld [vmem:[%s0 + $0x1a0] sm:$0xff]
    %v907 = vld [vmem:[%s0 + $0x1a8] sm:$0xff]
    %v908 = vld [vmem:[%s0 + $0x1b0] sm:$0xff]
    %v909 = vld [vmem:[%s0 + $0x1b8] sm:$0xff]
    %v910 = vld [vmem:[%s0 + $0x1c0] sm:$0xff]
    %v911 = vld [vmem:[%s0 + $0x1c8] sm:$0xff]
    %v912 = vld [vmem:[%s0 + $0x1d0] sm:$0xff]
    %v913 = vld [vmem:[%s0 + $0x1d8] sm:$0xff]
    %v914 = vld [vmem:[%s0 + $0x1e0] sm:$0xff]
    %v915 = vld [vmem:[%s0 + $0x1e8] sm:$0xff]
    %v916 = vld [vmem:[%s0 + $0x1f0] sm:$0xff]
    %v917 = vld [vmem:[%s0 + $0x1f8] sm:$0xff]
    %v918 = vld [vmem:[%s0 + $0x200] sm:$0xff]
    %v919 = vld [vmem:[%s0 + $0x208] sm:$0xff]
    %v920 = vld [vmem:[%s0 + $0x210] sm:$0xff]
    %v921 = vld [vmem:[%s0 + $0x218] sm:$0xff]
    %v922 = vld [vmem:[%s0 + $0x220] sm:$0xff]
    %v923 = vld [vmem:[%s0 + $0x228] sm:$0xff]
    %v924 = vld [vmem:[%s0 + $0x230] sm:$0xff]
    %v925 = vld [vmem:[%s0 + $0x238] sm:$0xff]
    %v926 = vld [vmem:[%s0 + $0x240] sm:$0xff]
    %v927 = vld [vmem:[%s0 + $0x248] sm:$0xff]
    %v928 = vld [vmem:[%s0 + $0x250] sm:$0xff]
    %v929 = vld [vmem:[%s0 + $0x258] sm:$0xff]
    %v930 = vld [vmem:[%s0 + $0x260] sm:$0xff]
    %v931 = vld [vmem:[%s0 + $0x268] sm:$0xff]
    %v932 = vld [vmem:[%s0 + $0x270] sm:$0xff]
    %v933 = vld [vmem:[%s0 + $0x278] sm:$0xff]
    %v934 = vld [vmem:[%s0 + $0x280] sm:$0xff]
    %v935 = vld [vmem:[%s0 + $0x288] sm:$0xff]
    %v936 = vld [vmem:[%s0 + $0x290] sm:$0xff]
    %v937 = vld [vmem:[%s0 + $0x298] sm:$0xff]
    %v938 = vld [vmem:[%s0 + $0x2a0] sm:$0xff]
    %v939 = vld [vmem:[%s0 + $0x2a8] sm:$0xff]
    %v940 = vld [vmem:[%s0 + $0x2b0] sm:$0xff]
    %v941 = vld [vmem:[%s0 + $0x2b8] sm:$0xff]
    %v942 = vld [vmem:[%s0 + $0x2c0] sm:$0xff]
    %v943 = vld [vmem:[%s0 + $0x2c8] sm:$0xff]
    %v944 = vld [vmem:[%s0 + $0x2d0] sm:$0xff]
    %v945 = vld [vmem:[%s0 + $0x2d8] sm:$0xff]
    %v946 = vld [vmem:[%s0 + $0x2e0] sm:$0xff]
    %v947 = vld [vmem:[%s0 + $0x2e8] sm:$0xff]
    %v948 = vld [vmem:[%s0 + $0x2f0] sm:$0xff]
    %v949 = vld [vmem:[%s0 + $0x2f8] sm:$0xff]
    %v950 = vld [vmem:[%s0 + $0x300] sm:$0xff]
    %v951 = vld [vmem:[%s0 + $0x308] sm:$0xff]
    %v952 = vld [vmem:[%s0 + $0x310] sm:$0xff]
    %v953 = vld [vmem:[%s0 + $0x318] sm:$0xff]
    %v954 = vld [vmem:[%s0 + $0x320] sm:$0xff]
    %v955 = vld [vmem:[%s0 + $0x328] sm:$0xff]
    %v956 = vld [vmem:[%s0 + $0x330] sm:$0xff]
    %v957 = vld [vmem:[%s0 + $0x338] sm:$0xff]
    %v958 = vld [vmem:[%s0 + $0x340] sm:$0xff]
    %v959 = vld [vmem:[%s0 + $0x348] sm:$0xff]
    %v960 = vld [vmem:[%s0 + $0x350] sm:$0xff]
    %v961 = vld [vmem:[%s0 + $0x358] sm:$0xff]
    %v962 = vld [vmem:[%s0 + $0x360] sm:$0xff]
    %v963 = vld [vmem:[%s0 + $0x368] sm:$0xff]
    %v964 = vld [vmem:[%s0 + $0x370] sm:$0xff]
    %v965 = vld [vmem:[%s0 + $0x378] sm:$0xff]
    %v966 = vld [vmem:[%s0 + $0x380] sm:$0xff]
    %v967 = vld [vmem:[%s0 + $0x388] sm:$0xff]
    %v968 = vld [vmem:[%s0 + $0x390] sm:$0xff]
    %v969 = vld [vmem:[%s0 + $0x398] sm:$0xff]
    %v970 = vld [vmem:[%s0 + $0x3a0] sm:$0xff]
    %v971 = vld [vmem:[%s0 + $0x3a8] sm:$0xff]
    %v972 = vld [vmem:[%s0 + $0x3b0] sm:$0xff]
    %v973 = vld [vmem:[%s0 + $0x3b8] sm:$0xff]
    %v974 = vld [vmem:[%s0 + $0x3c0] sm:$0xff]
    %v975 = vld [vmem:[%s0 + $0x3c8] sm:$0xff]
    %v976 = vld [vmem:[%s0 + $0x3d0] sm:$0xff]
    %v977 = vld [vmem:[%s0 + $0x3d8] sm:$0xff]
    %v978 = vld [vmem:[%s0 + $0x3e0] sm:$0xff]
    %v979 = vld [vmem:[%s0 + $0x3e8] sm:$0xff]
    %v980 = vld [vmem:[%s0 + $0x3f0] sm:$0xff]
    %v981 = vld [vmem:[%s0 + $0x3f8] sm:$0xff]
    %v982 = vld [vmem:[%s0 + $0x400] sm:$0xff]
    %v983 = vld [vmem:[%s0 + $0x408] sm:$0xff]
    %v984 = vld [vmem:[%s0 + $0x410] sm:$0xff]
    %v985 = vld [vmem:[%s0 + $0x418] sm:$0xff]
    %v986 = vld [vmem:[%s0 + $0x420] sm:$0xff]
    %v987 = vld [vmem:[%s0 + $0x428] sm:$0xff]
    %v988 = vld [vmem:[%s0 + $0x430] sm:$0xff]
    %v989 = vld [vmem:[%s0 + $0x438] sm:$0xff]
    %v990 = vld [vmem:[%s0 + $0x440] sm:$0xff]
    %v991 = vld [vmem:[%s0 + $0x448] sm:$0xff]
    %v992 = vld [vmem:[%s0 + $0x450] sm:$0xff]
    %v993 = vld [vmem:[%s0 + $0x458] sm:$0xff]
    %v994 = vld [vmem:[%s0 + $0x460] sm:$0xff]
    %v995 = vld [vmem:[%s0 + $0x468] sm:$0xff]
    %v996 = vld [vmem:[%s0 + $0x470] sm:$0xff]
    %v997 = vld [vmem:[%s0 + $0x478] sm:$0xff]
    %v998 = vld [vmem:[%s0 + $0x480] sm:$0xff]
    %v999 = vld [vmem:[%s0 + $0x488] sm:$0xff]
    %v1000 = vld [vmem:[%s0 + $0x490] sm:$0xff]
    %v1001 = vld [vmem:[%s0 + $0x498] sm:$0xff]
    %v1002 = vld [vmem:[%s0 + $0x4a0] sm:$0xff]
    %v1003 = vld [vmem:[%s0 + $0x4a8] sm:$0xff]
    %v1004 = vld [vmem:[%s0 + $0x4b0] sm:$0xff]
    %v1005 = vld [vmem:[%s0 + $0x4b8] sm:$0xff]
    %v1006 = vld [vmem:[%s0 + $0x4c0] sm:$0xff]
    %v1007 = vld [vmem:[%s0 + $0x4c8] sm:$0xff]
    %v1008 = vld [vmem:[%s0 + $0x4d0] sm:$0xff]
    %v1009 = vld [vmem:[%s0 + $0x4d8] sm:$0xff]
    %v1010 = vld [vmem:[%s0 + $0x4e0] sm:$0xff]
    %v1011 = vld [vmem:[%s0 + $0x4e8] sm:$0xff]
    %v1012 = vld [vmem:[%s0 + $0x4f0] sm:$0xff]
    %v1013 = vld [vmem:[%s0 + $0x4f8] sm:$0xff]
    %v1014 = vld [vmem:[%s0 + $0x500] sm:$0xff]
    %v1015 = vld [vmem:[%s0 + $0x508] sm:$0xff]
    %v1016 = vld [vmem:[%s0 + $0x510] sm:$0xff]
    %v1017 = vld [vmem:[%s0 + $0x518] sm:$0xff]
    %v1018 = vld [vmem:[%s0 + $0x520] sm:$0xff]
    %v1019 = vld [vmem:[%s0 + $0x528] sm:$0xff]
    %v1020 = vld [vmem:[%s0 + $0x530] sm:$0xff]
    %v1021 = vld [vmem:[%s0 + $0x538] sm:$0xff]
    %v1022 = vld [vmem:[%s0 + $0x540] sm:$0xff]
    %v1023 = vld [vmem:[%s0 + $0x548] sm:$0xff]
    %v1024 = vld [vmem:[%s0 + $0x550] sm:$0xff]
    %v1025 = vld [vmem:[%s0 + $0x558] sm:$0xff]
    %v1026 = vld [vmem:[%s0 + $0x560] sm:$0xff]
    %v1027 = vld [vmem:[%s0 + $0x568] sm:$0xff]
    %v1028 = vld [vmem:[%s0 + $0x570] sm:$0xff]
    %v1029 = vld [vmem:[%s0 + $0x578] sm:$0xff]
    %v1030 = vld [vmem:[%s0 + $0x580] sm:$0xff]
    %v1031 = vld [vmem:[%s0 + $0x588] sm:$0xff]
    %v1032 = vld [vmem:[%s0 + $0x590] sm:$0xff]
    %v1033 = vld [vmem:[%s0 + $0x598] sm:$0xff]
    %v1034 = vld [vmem:[%s0 + $0x5a0] sm:$0xff]
    %v1035 = vld [vmem:[%s0 + $0x5a8] sm:$0xff]
    %v1036 = vld [vmem:[%s0 + $0x5b0] sm:$0xff]
    %v1037 = vld [vmem:[%s0 + $0x5b8] sm:$0xff]
    %v1038 = vld [vmem:[%s0 + $0x5c0] sm:$0xff]
    %v1039 = vld [vmem:[%s0 + $0x5c8] sm:$0xff]
    %v1040 = vld [vmem:[%s0 + $0x5d0] sm:$0xff]
    %v1041 = vld [vmem:[%s0 + $0x5d8] sm:$0xff]
    %v1042 = vld [vmem:[%s0 + $0x5e0] sm:$0xff]
    %v1043 = vld [vmem:[%s0 + $0x5e8] sm:$0xff]
    %v1044 = vld [vmem:[%s0 + $0x5f0] sm:$0xff]
    %v1045 = vld [vmem:[%s0 + $0x5f8] sm:$0xff]
    %v1046 = vld [vmem:[%s0 + $0x600] sm:$0xff]
    %v1047 = vld [vmem:[%s0 + $0x608] sm:$0xff]
    %v1048 = vld [vmem:[%s0 + $0x610] sm:$0xff]
    %v1049 = vld [vmem:[%s0 + $0x618] sm:$0xff]
    %v1050 = vld [vmem:[%s0 + $0x620] sm:$0xff]
    %v1051 = vld [vmem:[%s0 + $0x628] sm:$0xff]
    %v1052 = vld [vmem:[%s0 + $0x630] sm:$0xff]
    %v1053 = vld [vmem:[%s0 + $0x638] sm:$0xff]
    %v1054 = vld [vmem:[%s0 + $0x640] sm:$0xff]
    %v1055 = vld [vmem:[%s0 + $0x648] sm:$0xff]
    %v1056 = vld [vmem:[%s0 + $0x650] sm:$0xff]
    %v1057 = vld [vmem:[%s0 + $0x658] sm:$0xff]
    %v1058 = vld [vmem:[%s0 + $0x660] sm:$0xff]
    %v1059 = vld [vmem:[%s0 + $0x668] sm:$0xff]
    %v1060 = vld [vmem:[%s0 + $0x670] sm:$0xff]
    %v1061 = vld [vmem:[%s0 + $0x678] sm:$0xff]
    %v1062 = vld [vmem:[%s0 + $0x680] sm:$0xff]
    %v1063 = vld [vmem:[%s0 + $0x688] sm:$0xff]
    %v1064 = vld [vmem:[%s0 + $0x690] sm:$0xff]
    %v1065 = vld [vmem:[%s0 + $0x698] sm:$0xff]
    %v1066 = vld [vmem:[%s0 + $0x6a0] sm:$0xff]
    %v1067 = vld [vmem:[%s0 + $0x6a8] sm:$0xff]
    %v1068 = vld [vmem:[%s0 + $0x6b0] sm:$0xff]
    %v1069 = vld [vmem:[%s0 + $0x6b8] sm:$0xff]
    %v1070 = vld [vmem:[%s0 + $0x6c0] sm:$0xff]
    %v1071 = vld [vmem:[%s0 + $0x6c8] sm:$0xff]
    %v1072 = vld [vmem:[%s0 + $0x6d0] sm:$0xff]
    %v1073 = vld [vmem:[%s0 + $0x6d8] sm:$0xff]
    %v1074 = vld [vmem:[%s0 + $0x6e0] sm:$0xff]
    %v1075 = vld [vmem:[%s0 + $0x6e8] sm:$0xff]
    %v1076 = vld [vmem:[%s0 + $0x6f0] sm:$0xff]
    %v1077 = vld [vmem:[%s0 + $0x6f8] sm:$0xff]
    %v1078 = vld [vmem:[%s0 + $0x700] sm:$0xff]
    %v1079 = vld [vmem:[%s0 + $0x708] sm:$0xff]
    %v1080 = vld [vmem:[%s0 + $0x710] sm:$0xff]
    %v1081 = vld [vmem:[%s0 + $0x718] sm:$0xff]
    %v1082 = vld [vmem:[%s0 + $0x720] sm:$0xff]
    %v1083 = vld [vmem:[%s0 + $0x728] sm:$0xff]
    %v1084 = vld [vmem:[%s0 + $0x730] sm:$0xff]
    %v1085 = vld [vmem:[%s0 + $0x738] sm:$0xff]
    %v1086 = vld [vmem:[%s0 + $0x740] sm:$0xff]
    %v1087 = vld [vmem:[%s0 + $0x748] sm:$0xff]
    %v1088 = vld [vmem:[%s0 + $0x750] sm:$0xff]
    %v1089 = vld [vmem:[%s0 + $0x758] sm:$0xff]
    %v1090 = vld [vmem:[%s0 + $0x760] sm:$0xff]
    %v1091 = vld [vmem:[%s0 + $0x768] sm:$0xff]
    %v1092 = vld [vmem:[%s0 + $0x770] sm:$0xff]
    %v1093 = vld [vmem:[%s0 + $0x778] sm:$0xff]
    %v1094 = vld [vmem:[%s0 + $0x780] sm:$0xff]
    %v1095 = vld [vmem:[%s0 + $0x788] sm:$0xff]
    %v1096 = vld [vmem:[%s0 + $0x790] sm:$0xff]
    %v1097 = vld [vmem:[%s0 + $0x798] sm:$0xff]
    %v1098 = vld [vmem:[%s0 + $0x7a0] sm:$0xff]
    %v1099 = vld [vmem:[%s0 + $0x7a8] sm:$0xff]
    %v1100 = vld [vmem:[%s0 + $0x7b0] sm:$0xff]
    %v1101 = vld [vmem:[%s0 + $0x7b8] sm:$0xff]
    %v1102 = vld [vmem:[%s0 + $0x7c0] sm:$0xff]
    %v1103 = vld [vmem:[%s0 + $0x7c8] sm:$0xff]
    %v1104 = vld [vmem:[%s0 + $0x7d0] sm:$0xff]
    %v1105 = vld [vmem:[%s0 + $0x7d8] sm:$0xff]
    %v1106 = vld [vmem:[%s0 + $0x7e0] sm:$0xff]
    %v1107 = vld [vmem:[%s0 + $0x7e8] sm:$0xff]
    %v1108 = vld [vmem:[%s0 + $0x7f0] sm:$0xff]
    %v1109 = vld [vmem:[%s0 + $0x7f8] sm:$0xff]
    %v1110 = vld [vmem:[%s1] sm:$0xff]
    %v1111 = vld [vmem:[%s1 + $0x8] sm:$0xff]
    %v1112 = vld [vmem:[%s1 + $0x10] sm:$0xff]
    %v1113 = vld [vmem:[%s1 + $0x18] sm:$0xff]
    %v1114 = vld [vmem:[%s1 + $0x20] sm:$0xff]
    %v1115 = vld [vmem:[%s1 + $0x28] sm:$0xff]
    %v1116 = vld [vmem:[%s1 + $0x30] sm:$0xff]
    %v1117 = vld [vmem:[%s1 + $0x38] sm:$0xff]
    %v1118 = vld [vmem:[%s1 + $0x40] sm:$0xff]
    %v1119 = vld [vmem:[%s1 + $0x48] sm:$0xff]
    %v1120 = vld [vmem:[%s1 + $0x50] sm:$0xff]
    %v1121 = vld [vmem:[%s1 + $0x58] sm:$0xff]
    %v1122 = vld [vmem:[%s1 + $0x60] sm:$0xff]
    %v1123 = vld [vmem:[%s1 + $0x68] sm:$0xff]
    %v1124 = vld [vmem:[%s1 + $0x70] sm:$0xff]
    %v1125 = vld [vmem:[%s1 + $0x78] sm:$0xff]
    %v1126 = vld [vmem:[%s1 + $0x80] sm:$0xff]
    %v1127 = vld [vmem:[%s1 + $0x88] sm:$0xff]
    %v1128 = vld [vmem:[%s1 + $0x90] sm:$0xff]
    %v1129 = vld [vmem:[%s1 + $0x98] sm:$0xff]
    %v1130 = vld [vmem:[%s1 + $0xa0] sm:$0xff]
    %v1131 = vld [vmem:[%s1 + $0xa8] sm:$0xff]
    %v1132 = vld [vmem:[%s1 + $0xb0] sm:$0xff]
    %v1133 = vld [vmem:[%s1 + $0xb8] sm:$0xff]
    %v1134 = vld [vmem:[%s1 + $0xc0] sm:$0xff]
    %v1135 = vld [vmem:[%s1 + $0xc8] sm:$0xff]
    %v1136 = vld [vmem:[%s1 + $0xd0] sm:$0xff]
    %v1137 = vld [vmem:[%s1 + $0xd8] sm:$0xff]
    %v1138 = vld [vmem:[%s1 + $0xe0] sm:$0xff]
    %v1139 = vld [vmem:[%s1 + $0xe8] sm:$0xff]
    %v1140 = vld [vmem:[%s1 + $0xf0] sm:$0xff]
    %v1141 = vld [vmem:[%s1 + $0xf8] sm:$0xff]
    %v1142 = vld [vmem:[%s1 + $0x100] sm:$0xff]
    %v1143 = vld [vmem:[%s1 + $0x108] sm:$0xff]
    %v1144 = vld [vmem:[%s1 + $0x110] sm:$0xff]
    %v1145 = vld [vmem:[%s1 + $0x118] sm:$0xff]
    %v1146 = vld [vmem:[%s1 + $0x120] sm:$0xff]
    %v1147 = vld [vmem:[%s1 + $0x128] sm:$0xff]
    %v1148 = vld [vmem:[%s1 + $0x130] sm:$0xff]
    %v1149 = vld [vmem:[%s1 + $0x138] sm:$0xff]
    %v1150 = vld [vmem:[%s1 + $0x140] sm:$0xff]
    %v1151 = vld [vmem:[%s1 + $0x148] sm:$0xff]
    %v1152 = vld [vmem:[%s1 + $0x150] sm:$0xff]
    %v1153 = vld [vmem:[%s1 + $0x158] sm:$0xff]
    %v1154 = vld [vmem:[%s1 + $0x160] sm:$0xff]
    %v1155 = vld [vmem:[%s1 + $0x168] sm:$0xff]
    %v1156 = vld [vmem:[%s1 + $0x170] sm:$0xff]
    %v1157 = vld [vmem:[%s1 + $0x178] sm:$0xff]
    %v1158 = vld [vmem:[%s1 + $0x180] sm:$0xff]
    %v1159 = vld [vmem:[%s1 + $0x188] sm:$0xff]
    %v1160 = vld [vmem:[%s1 + $0x190] sm:$0xff]
    %v1161 = vld [vmem:[%s1 + $0x198] sm:$0xff]
    %v1162 = vld [vmem:[%s1 + $0x1a0] sm:$0xff]
    %v1163 = vld [vmem:[%s1 + $0x1a8] sm:$0xff]
    %v1164 = vld [vmem:[%s1 + $0x1b0] sm:$0xff]
    %v1165 = vld [vmem:[%s1 + $0x1b8] sm:$0xff]
    %v1166 = vld [vmem:[%s1 + $0x1c0] sm:$0xff]
    %v1167 = vld [vmem:[%s1 + $0x1c8] sm:$0xff]
    %v1168 = vld [vmem:[%s1 + $0x1d0] sm:$0xff]
    %v1169 = vld [vmem:[%s1 + $0x1d8] sm:$0xff]
    %v1170 = vld [vmem:[%s1 + $0x1e0] sm:$0xff]
    %v1171 = vld [vmem:[%s1 + $0x1e8] sm:$0xff]
    %v1172 = vld [vmem:[%s1 + $0x1f0] sm:$0xff]
    %v1173 = vld [vmem:[%s1 + $0x1f8] sm:$0xff]
    %v1174 = vld [vmem:[%s1 + $0x200] sm:$0xff]
    %v1175 = vld [vmem:[%s1 + $0x208] sm:$0xff]
    %v1176 = vld [vmem:[%s1 + $0x210] sm:$0xff]
    %v1177 = vld [vmem:[%s1 + $0x218] sm:$0xff]
    %v1178 = vld [vmem:[%s1 + $0x220] sm:$0xff]
    %v1179 = vld [vmem:[%s1 + $0x228] sm:$0xff]
    %v1180 = vld [vmem:[%s1 + $0x230] sm:$0xff]
    %v1181 = vld [vmem:[%s1 + $0x238] sm:$0xff]
    %v1182 = vld [vmem:[%s1 + $0x240] sm:$0xff]
    %v1183 = vld [vmem:[%s1 + $0x248] sm:$0xff]
    %v1184 = vld [vmem:[%s1 + $0x250] sm:$0xff]
    %v1185 = vld [vmem:[%s1 + $0x258] sm:$0xff]
    %v1186 = vld [vmem:[%s1 + $0x260] sm:$0xff]
    %v1187 = vld [vmem:[%s1 + $0x268] sm:$0xff]
    %v1188 = vld [vmem:[%s1 + $0x270] sm:$0xff]
    %v1189 = vld [vmem:[%s1 + $0x278] sm:$0xff]
    %v1190 = vld [vmem:[%s1 + $0x280] sm:$0xff]
    %v1191 = vld [vmem:[%s1 + $0x288] sm:$0xff]
    %v1192 = vld [vmem:[%s1 + $0x290] sm:$0xff]
    %v1193 = vld [vmem:[%s1 + $0x298] sm:$0xff]
    %v1194 = vld [vmem:[%s1 + $0x2a0] sm:$0xff]
    %v1195 = vld [vmem:[%s1 + $0x2a8] sm:$0xff]
    %v1196 = vld [vmem:[%s1 + $0x2b0] sm:$0xff]
    %v1197 = vld [vmem:[%s1 + $0x2b8] sm:$0xff]
    %v1198 = vld [vmem:[%s1 + $0x2c0] sm:$0xff]
    %v1199 = vld [vmem:[%s1 + $0x2c8] sm:$0xff]
    %v1200 = vld [vmem:[%s1 + $0x2d0] sm:$0xff]
    %v1201 = vld [vmem:[%s1 + $0x2d8] sm:$0xff]
    %v1202 = vld [vmem:[%s1 + $0x2e0] sm:$0xff]
    %v1203 = vld [vmem:[%s1 + $0x2e8] sm:$0xff]
    %v1204 = vld [vmem:[%s1 + $0x2f0] sm:$0xff]
    %v1205 = vld [vmem:[%s1 + $0x2f8] sm:$0xff]
    %v1206 = vld [vmem:[%s1 + $0x300] sm:$0xff]
    %v1207 = vld [vmem:[%s1 + $0x308] sm:$0xff]
    %v1208 = vld [vmem:[%s1 + $0x310] sm:$0xff]
    %v1209 = vld [vmem:[%s1 + $0x318] sm:$0xff]
    %v1210 = vld [vmem:[%s1 + $0x320] sm:$0xff]
    %v1211 = vld [vmem:[%s1 + $0x328] sm:$0xff]
    %v1212 = vld [vmem:[%s1 + $0x330] sm:$0xff]
    %v1213 = vld [vmem:[%s1 + $0x338] sm:$0xff]
    %v1214 = vld [vmem:[%s1 + $0x340] sm:$0xff]
    %v1215 = vld [vmem:[%s1 + $0x348] sm:$0xff]
    %v1216 = vld [vmem:[%s1 + $0x350] sm:$0xff]
    %v1217 = vld [vmem:[%s1 + $0x358] sm:$0xff]
    %v1218 = vld [vmem:[%s1 + $0x360] sm:$0xff]
    %v1219 = vld [vmem:[%s1 + $0x368] sm:$0xff]
    %v1220 = vld [vmem:[%s1 + $0x370] sm:$0xff]
    %v1221 = vld [vmem:[%s1 + $0x378] sm:$0xff]
    %v1222 = vld [vmem:[%s1 + $0x380] sm:$0xff]
    %v1223 = vld [vmem:[%s1 + $0x388] sm:$0xff]
    %v1224 = vld [vmem:[%s1 + $0x390] sm:$0xff]
    %v1225 = vld [vmem:[%s1 + $0x398] sm:$0xff]
    %v1226 = vld [vmem:[%s1 + $0x3a0] sm:$0xff]
    %v1227 = vld [vmem:[%s1 + $0x3a8] sm:$0xff]
    %v1228 = vld [vmem:[%s1 + $0x3b0] sm:$0xff]
    %v1229 = vld [vmem:[%s1 + $0x3b8] sm:$0xff]
    %v1230 = vld [vmem:[%s1 + $0x3c0] sm:$0xff]
    %v1231 = vld [vmem:[%s1 + $0x3c8] sm:$0xff]
    %v1232 = vld [vmem:[%s1 + $0x3d0] sm:$0xff]
    %v1233 = vld [vmem:[%s1 + $0x3d8] sm:$0xff]
    %v1234 = vld [vmem:[%s1 + $0x3e0] sm:$0xff]
    %v1235 = vld [vmem:[%s1 + $0x3e8] sm:$0xff]
    %v1236 = vld [vmem:[%s1 + $0x3f0] sm:$0xff]
    %v1237 = vld [vmem:[%s1 + $0x3f8] sm:$0xff]
    %v1238 = vld [vmem:[%s1 + $0x400] sm:$0xff]
    %v1239 = vld [vmem:[%s1 + $0x408] sm:$0xff]
    %v1240 = vld [vmem:[%s1 + $0x410] sm:$0xff]
    %v1241 = vld [vmem:[%s1 + $0x418] sm:$0xff]
    %v1242 = vld [vmem:[%s1 + $0x420] sm:$0xff]
    %v1243 = vld [vmem:[%s1 + $0x428] sm:$0xff]
    %v1244 = vld [vmem:[%s1 + $0x430] sm:$0xff]
    %v1245 = vld [vmem:[%s1 + $0x438] sm:$0xff]
    %v1246 = vld [vmem:[%s1 + $0x440] sm:$0xff]
    %v1247 = vld [vmem:[%s1 + $0x448] sm:$0xff]
    %v1248 = vld [vmem:[%s1 + $0x450] sm:$0xff]
    %v1249 = vld [vmem:[%s1 + $0x458] sm:$0xff]
    %v1250 = vld [vmem:[%s1 + $0x460] sm:$0xff]
    %v1251 = vld [vmem:[%s1 + $0x468] sm:$0xff]
    %v1252 = vld [vmem:[%s1 + $0x470] sm:$0xff]
    %v1253 = vld [vmem:[%s1 + $0x478] sm:$0xff]
    %v1254 = vld [vmem:[%s1 + $0x480] sm:$0xff]
    %v1255 = vld [vmem:[%s1 + $0x488] sm:$0xff]
    %v1256 = vld [vmem:[%s1 + $0x490] sm:$0xff]
    %v1257 = vld [vmem:[%s1 + $0x498] sm:$0xff]
    %v1258 = vld [vmem:[%s1 + $0x4a0] sm:$0xff]
    %v1259 = vld [vmem:[%s1 + $0x4a8] sm:$0xff]
    %v1260 = vld [vmem:[%s1 + $0x4b0] sm:$0xff]
    %v1261 = vld [vmem:[%s1 + $0x4b8] sm:$0xff]
    %v1262 = vld [vmem:[%s1 + $0x4c0] sm:$0xff]
    %v1263 = vld [vmem:[%s1 + $0x4c8] sm:$0xff]
    %v1264 = vld [vmem:[%s1 + $0x4d0] sm:$0xff]
    %v1265 = vld [vmem:[%s1 + $0x4d8] sm:$0xff]
    %v1266 = vld [vmem:[%s1 + $0x4e0] sm:$0xff]
    %v1267 = vld [vmem:[%s1 + $0x4e8] sm:$0xff]
    %v1268 = vld [vmem:[%s1 + $0x4f0] sm:$0xff]
    %v1269 = vld [vmem:[%s1 + $0x4f8] sm:$0xff]
    %v1270 = vld [vmem:[%s1 + $0x500] sm:$0xff]
    %v1271 = vld [vmem:[%s1 + $0x508] sm:$0xff]
    %v1272 = vld [vmem:[%s1 + $0x510] sm:$0xff]
    %v1273 = vld [vmem:[%s1 + $0x518] sm:$0xff]
    %v1274 = vld [vmem:[%s1 + $0x520] sm:$0xff]
    %v1275 = vld [vmem:[%s1 + $0x528] sm:$0xff]
    %v1276 = vld [vmem:[%s1 + $0x530] sm:$0xff]
    %v1277 = vld [vmem:[%s1 + $0x538] sm:$0xff]
    %v1278 = vld [vmem:[%s1 + $0x540] sm:$0xff]
    %v1279 = vld [vmem:[%s1 + $0x548] sm:$0xff]
    %v1280 = vld [vmem:[%s1 + $0x550] sm:$0xff]
    %v1281 = vld [vmem:[%s1 + $0x558] sm:$0xff]
    %v1282 = vld [vmem:[%s1 + $0x560] sm:$0xff]
    %v1283 = vld [vmem:[%s1 + $0x568] sm:$0xff]
    %v1284 = vld [vmem:[%s1 + $0x570] sm:$0xff]
    %v1285 = vld [vmem:[%s1 + $0x578] sm:$0xff]
    %v1286 = vld [vmem:[%s1 + $0x580] sm:$0xff]
    %v1287 = vld [vmem:[%s1 + $0x588] sm:$0xff]
    %v1288 = vld [vmem:[%s1 + $0x590] sm:$0xff]
    %v1289 = vld [vmem:[%s1 + $0x598] sm:$0xff]
    %v1290 = vld [vmem:[%s1 + $0x5a0] sm:$0xff]
    %v1291 = vld [vmem:[%s1 + $0x5a8] sm:$0xff]
    %v1292 = vld [vmem:[%s1 + $0x5b0] sm:$0xff]
    %v1293 = vld [vmem:[%s1 + $0x5b8] sm:$0xff]
    %v1294 = vld [vmem:[%s1 + $0x5c0] sm:$0xff]
    %v1295 = vld [vmem:[%s1 + $0x5c8] sm:$0xff]
    %v1296 = vld [vmem:[%s1 + $0x5d0] sm:$0xff]
    %v1297 = vld [vmem:[%s1 + $0x5d8] sm:$0xff]
    %v1298 = vld [vmem:[%s1 + $0x5e0] sm:$0xff]
    %v1299 = vld [vmem:[%s1 + $0x5e8] sm:$0xff]
    %v1300 = vld [vmem:[%s1 + $0x5f0] sm:$0xff]
    %v1301 = vld [vmem:[%s1 + $0x5f8] sm:$0xff]
    %v1302 = vld [vmem:[%s1 + $0x600] sm:$0xff]
    %v1303 = vld [vmem:[%s1 + $0x608] sm:$0xff]
    %v1304 = vld [vmem:[%s1 + $0x610] sm:$0xff]
    %v1305 = vld [vmem:[%s1 + $0x618] sm:$0xff]
    %v1306 = vld [vmem:[%s1 + $0x620] sm:$0xff]
    %v1307 = vld [vmem:[%s1 + $0x628] sm:$0xff]
    %v1308 = vld [vmem:[%s1 + $0x630] sm:$0xff]
    %v1309 = vld [vmem:[%s1 + $0x638] sm:$0xff]
    %v1310 = vld [vmem:[%s1 + $0x640] sm:$0xff]
    %v1311 = vld [vmem:[%s1 + $0x648] sm:$0xff]
    %v1312 = vld [vmem:[%s1 + $0x650] sm:$0xff]
    %v1313 = vld [vmem:[%s1 + $0x658] sm:$0xff]
    %v1314 = vld [vmem:[%s1 + $0x660] sm:$0xff]
    %v1315 = vld [vmem:[%s1 + $0x668] sm:$0xff]
    %v1316 = vld [vmem:[%s1 + $0x670] sm:$0xff]
    %v1317 = vld [vmem:[%s1 + $0x678] sm:$0xff]
    %v1318 = vld [vmem:[%s1 + $0x680] sm:$0xff]
    %v1319 = vld [vmem:[%s1 + $0x688] sm:$0xff]
    %v1320 = vld [vmem:[%s1 + $0x690] sm:$0xff]
    %v1321 = vld [vmem:[%s1 + $0x698] sm:$0xff]
    %v1322 = vld [vmem:[%s1 + $0x6a0] sm:$0xff]
    %v1323 = vld [vmem:[%s1 + $0x6a8] sm:$0xff]
    %v1324 = vld [vmem:[%s1 + $0x6b0] sm:$0xff]
    %v1325 = vld [vmem:[%s1 + $0x6b8] sm:$0xff]
    %v1326 = vld [vmem:[%s1 + $0x6c0] sm:$0xff]
    %v1327 = vld [vmem:[%s1 + $0x6c8] sm:$0xff]
    %v1328 = vld [vmem:[%s1 + $0x6d0] sm:$0xff]
    %v1329 = vld [vmem:[%s1 + $0x6d8] sm:$0xff]
    %v1330 = vld [vmem:[%s1 + $0x6e0] sm:$0xff]
    %v1331 = vld [vmem:[%s1 + $0x6e8] sm:$0xff]
    %v1332 = vld [vmem:[%s1 + $0x6f0] sm:$0xff]
    %v1333 = vld [vmem:[%s1 + $0x6f8] sm:$0xff]
    %v1334 = vld [vmem:[%s1 + $0x700] sm:$0xff]
    %v1335 = vld [vmem:[%s1 + $0x708] sm:$0xff]
    %v1336 = vld [vmem:[%s1 + $0x710] sm:$0xff]
    %v1337 = vld [vmem:[%s1 + $0x718] sm:$0xff]
    %v1338 = vld [vmem:[%s1 + $0x720] sm:$0xff]
    %v1339 = vld [vmem:[%s1 + $0x728] sm:$0xff]
    %v1340 = vld [vmem:[%s1 + $0x730] sm:$0xff]
    %v1341 = vld [vmem:[%s1 + $0x738] sm:$0xff]
    %v1342 = vld [vmem:[%s1 + $0x740] sm:$0xff]
    %v1343 = vld [vmem:[%s1 + $0x748] sm:$0xff]
    %v1344 = vld [vmem:[%s1 + $0x750] sm:$0xff]
    %v1345 = vld [vmem:[%s1 + $0x758] sm:$0xff]
    %v1346 = vld [vmem:[%s1 + $0x760] sm:$0xff]
    %v1347 = vld [vmem:[%s1 + $0x768] sm:$0xff]
    %v1348 = vld [vmem:[%s1 + $0x770] sm:$0xff]
    %v1349 = vld [vmem:[%s1 + $0x778] sm:$0xff]
    %v1350 = vld [vmem:[%s1 + $0x780] sm:$0xff]
    %v1351 = vld [vmem:[%s1 + $0x788] sm:$0xff]
    %v1352 = vld [vmem:[%s1 + $0x790] sm:$0xff]
    %v1353 = vld [vmem:[%s1 + $0x798] sm:$0xff]
    %v1354 = vld [vmem:[%s1 + $0x7a0] sm:$0xff]
    %v1355 = vld [vmem:[%s1 + $0x7a8] sm:$0xff]
    %v1356 = vld [vmem:[%s1 + $0x7b0] sm:$0xff]
    %v1357 = vld [vmem:[%s1 + $0x7b8] sm:$0xff]
    %v1358 = vld [vmem:[%s1 + $0x7c0] sm:$0xff]
    %v1359 = vld [vmem:[%s1 + $0x7c8] sm:$0xff]
    %v1360 = vld [vmem:[%s1 + $0x7d0] sm:$0xff]
    %v1361 = vld [vmem:[%s1 + $0x7d8] sm:$0xff]
    %v1362 = vld [vmem:[%s1 + $0x7e0] sm:$0xff]
    %v1363 = vld [vmem:[%s1 + $0x7e8] sm:$0xff]
    %v1364 = vld [vmem:[%s1 + $0x7f0] sm:$0xff]
    %v1365 = vld [vmem:[%s1 + $0x7f8] sm:$0xff]
    %v1366 = vsub.f32 %v854, %v1110
    %v1367 = vsub.f32 %v855, %v1111
    %v1368 = vsub.f32 %v856, %v1112
    %v1369 = vsub.f32 %v857, %v1113
    %v1370 = vsub.f32 %v858, %v1114
    %v1371 = vsub.f32 %v859, %v1115
    %v1372 = vsub.f32 %v860, %v1116
    %v1373 = vsub.f32 %v861, %v1117
    %v1374 = vsub.f32 %v862, %v1118
    %v1375 = vsub.f32 %v863, %v1119
    %v1376 = vsub.f32 %v864, %v1120
    %v1377 = vsub.f32 %v865, %v1121
    %v1378 = vsub.f32 %v866, %v1122
    %v1379 = vsub.f32 %v867, %v1123
    %v1380 = vsub.f32 %v868, %v1124
    %v1381 = vsub.f32 %v869, %v1125
    %v1382 = vsub.f32 %v870, %v1126
    %v1383 = vsub.f32 %v871, %v1127
    %v1384 = vsub.f32 %v872, %v1128
    %v1385 = vsub.f32 %v873, %v1129
    %v1386 = vsub.f32 %v874, %v1130
    %v1387 = vsub.f32 %v875, %v1131
    %v1388 = vsub.f32 %v876, %v1132
    %v1389 = vsub.f32 %v877, %v1133
    %v1390 = vsub.f32 %v878, %v1134
    %v1391 = vsub.f32 %v879, %v1135
    %v1392 = vsub.f32 %v880, %v1136
    %v1393 = vsub.f32 %v881, %v1137
    %v1394 = vsub.f32 %v882, %v1138
    %v1395 = vsub.f32 %v883, %v1139
    %v1396 = vsub.f32 %v884, %v1140
    %v1397 = vsub.f32 %v885, %v1141
    %v1398 = vsub.f32 %v886, %v1142
    %v1399 = vsub.f32 %v887, %v1143
    %v1400 = vsub.f32 %v888, %v1144
    %v1401 = vsub.f32 %v889, %v1145
    %v1402 = vsub.f32 %v890, %v1146
    %v1403 = vsub.f32 %v891, %v1147
    %v1404 = vsub.f32 %v892, %v1148
    %v1405 = vsub.f32 %v893, %v1149
    %v1406 = vsub.f32 %v894, %v1150
    %v1407 = vsub.f32 %v895, %v1151
    %v1408 = vsub.f32 %v896, %v1152
    %v1409 = vsub.f32 %v897, %v1153
    %v1410 = vsub.f32 %v898, %v1154
    %v1411 = vsub.f32 %v899, %v1155
    %v1412 = vsub.f32 %v900, %v1156
    %v1413 = vsub.f32 %v901, %v1157
    %v1414 = vsub.f32 %v902, %v1158
    %v1415 = vsub.f32 %v903, %v1159
    %v1416 = vsub.f32 %v904, %v1160
    %v1417 = vsub.f32 %v905, %v1161
    %v1418 = vsub.f32 %v906, %v1162
    %v1419 = vsub.f32 %v907, %v1163
    %v1420 = vsub.f32 %v908, %v1164
    %v1421 = vsub.f32 %v909, %v1165
    %v1422 = vsub.f32 %v910, %v1166
    %v1423 = vsub.f32 %v911, %v1167
    %v1424 = vsub.f32 %v912, %v1168
    %v1425 = vsub.f32 %v913, %v1169
    %v1426 = vsub.f32 %v914, %v1170
    %v1427 = vsub.f32 %v915, %v1171
    %v1428 = vsub.f32 %v916, %v1172
    %v1429 = vsub.f32 %v917, %v1173
    %v1430 = vsub.f32 %v918, %v1174
    %v1431 = vsub.f32 %v919, %v1175
    %v1432 = vsub.f32 %v920, %v1176
    %v1433 = vsub.f32 %v921, %v1177
    %v1434 = vsub.f32 %v922, %v1178
    %v1435 = vsub.f32 %v923, %v1179
    %v1436 = vsub.f32 %v924, %v1180
    %v1437 = vsub.f32 %v925, %v1181
    %v1438 = vsub.f32 %v926, %v1182
    %v1439 = vsub.f32 %v927, %v1183
    %v1440 = vsub.f32 %v928, %v1184
    %v1441 = vsub.f32 %v929, %v1185
    %v1442 = vsub.f32 %v930, %v1186
    %v1443 = vsub.f32 %v931, %v1187
    %v1444 = vsub.f32 %v932, %v1188
    %v1445 = vsub.f32 %v933, %v1189
    %v1446 = vsub.f32 %v934, %v1190
    %v1447 = vsub.f32 %v935, %v1191
    %v1448 = vsub.f32 %v936, %v1192
    %v1449 = vsub.f32 %v937, %v1193
    %v1450 = vsub.f32 %v938, %v1194
    %v1451 = vsub.f32 %v939, %v1195
    %v1452 = vsub.f32 %v940, %v1196
    %v1453 = vsub.f32 %v941, %v1197
    %v1454 = vsub.f32 %v942, %v1198
    %v1455 = vsub.f32 %v943, %v1199
    %v1456 = vsub.f32 %v944, %v1200
    %v1457 = vsub.f32 %v945, %v1201
    %v1458 = vsub.f32 %v946, %v1202
    %v1459 = vsub.f32 %v947, %v1203
    %v1460 = vsub.f32 %v948, %v1204
    %v1461 = vsub.f32 %v949, %v1205
    %v1462 = vsub.f32 %v950, %v1206
    %v1463 = vsub.f32 %v951, %v1207
    %v1464 = vsub.f32 %v952, %v1208
    %v1465 = vsub.f32 %v953, %v1209
    %v1466 = vsub.f32 %v954, %v1210
    %v1467 = vsub.f32 %v955, %v1211
    %v1468 = vsub.f32 %v956, %v1212
    %v1469 = vsub.f32 %v957, %v1213
    %v1470 = vsub.f32 %v958, %v1214
    %v1471 = vsub.f32 %v959, %v1215
    %v1472 = vsub.f32 %v960, %v1216
    %v1473 = vsub.f32 %v961, %v1217
    %v1474 = vsub.f32 %v962, %v1218
    %v1475 = vsub.f32 %v963, %v1219
    %v1476 = vsub.f32 %v964, %v1220
    %v1477 = vsub.f32 %v965, %v1221
    %v1478 = vsub.f32 %v966, %v1222
    %v1479 = vsub.f32 %v967, %v1223
    %v1480 = vsub.f32 %v968, %v1224
    %v1481 = vsub.f32 %v969, %v1225
    %v1482 = vsub.f32 %v970, %v1226
    %v1483 = vsub.f32 %v971, %v1227
    %v1484 = vsub.f32 %v972, %v1228
    %v1485 = vsub.f32 %v973, %v1229
    %v1486 = vsub.f32 %v974, %v1230
    %v1487 = vsub.f32 %v975, %v1231
    %v1488 = vsub.f32 %v976, %v1232
    %v1489 = vsub.f32 %v977, %v1233
    %v1490 = vsub.f32 %v978, %v1234
    %v1491 = vsub.f32 %v979, %v1235
    %v1492 = vsub.f32 %v980, %v1236
    %v1493 = vsub.f32 %v981, %v1237
    %v1494 = vsub.f32 %v982, %v1238
    %v1495 = vsub.f32 %v983, %v1239
    %v1496 = vsub.f32 %v984, %v1240
    %v1497 = vsub.f32 %v985, %v1241
    %v1498 = vsub.f32 %v986, %v1242
    %v1499 = vsub.f32 %v987, %v1243
    %v1500 = vsub.f32 %v988, %v1244
    %v1501 = vsub.f32 %v989, %v1245
    %v1502 = vsub.f32 %v990, %v1246
    %v1503 = vsub.f32 %v991, %v1247
    %v1504 = vsub.f32 %v992, %v1248
    %v1505 = vsub.f32 %v993, %v1249
    %v1506 = vsub.f32 %v994, %v1250
    %v1507 = vsub.f32 %v995, %v1251
    %v1508 = vsub.f32 %v996, %v1252
    %v1509 = vsub.f32 %v997, %v1253
    %v1510 = vsub.f32 %v998, %v1254
    %v1511 = vsub.f32 %v999, %v1255
    %v1512 = vsub.f32 %v1000, %v1256
    %v1513 = vsub.f32 %v1001, %v1257
    %v1514 = vsub.f32 %v1002, %v1258
    %v1515 = vsub.f32 %v1003, %v1259
    %v1516 = vsub.f32 %v1004, %v1260
    %v1517 = vsub.f32 %v1005, %v1261
    %v1518 = vsub.f32 %v1006, %v1262
    %v1519 = vsub.f32 %v1007, %v1263
    %v1520 = vsub.f32 %v1008, %v1264
    %v1521 = vsub.f32 %v1009, %v1265
    %v1522 = vsub.f32 %v1010, %v1266
    %v1523 = vsub.f32 %v1011, %v1267
    %v1524 = vsub.f32 %v1012, %v1268
    %v1525 = vsub.f32 %v1013, %v1269
    %v1526 = vsub.f32 %v1014, %v1270
    %v1527 = vsub.f32 %v1015, %v1271
    %v1528 = vsub.f32 %v1016, %v1272
    %v1529 = vsub.f32 %v1017, %v1273
    %v1530 = vsub.f32 %v1018, %v1274
    %v1531 = vsub.f32 %v1019, %v1275
    %v1532 = vsub.f32 %v1020, %v1276
    %v1533 = vsub.f32 %v1021, %v1277
    %v1534 = vsub.f32 %v1022, %v1278
    %v1535 = vsub.f32 %v1023, %v1279
    %v1536 = vsub.f32 %v1024, %v1280
    %v1537 = vsub.f32 %v1025, %v1281
    %v1538 = vsub.f32 %v1026, %v1282
    %v1539 = vsub.f32 %v1027, %v1283
    %v1540 = vsub.f32 %v1028, %v1284
    %v1541 = vsub.f32 %v1029, %v1285
    %v1542 = vsub.f32 %v1030, %v1286
    %v1543 = vsub.f32 %v1031, %v1287
    %v1544 = vsub.f32 %v1032, %v1288
    %v1545 = vsub.f32 %v1033, %v1289
    %v1546 = vsub.f32 %v1034, %v1290
    %v1547 = vsub.f32 %v1035, %v1291
    %v1548 = vsub.f32 %v1036, %v1292
    %v1549 = vsub.f32 %v1037, %v1293
    %v1550 = vsub.f32 %v1038, %v1294
    %v1551 = vsub.f32 %v1039, %v1295
    %v1552 = vsub.f32 %v1040, %v1296
    %v1553 = vsub.f32 %v1041, %v1297
    %v1554 = vsub.f32 %v1042, %v1298
    %v1555 = vsub.f32 %v1043, %v1299
    %v1556 = vsub.f32 %v1044, %v1300
    %v1557 = vsub.f32 %v1045, %v1301
    %v1558 = vsub.f32 %v1046, %v1302
    %v1559 = vsub.f32 %v1047, %v1303
    %v1560 = vsub.f32 %v1048, %v1304
    %v1561 = vsub.f32 %v1049, %v1305
    %v1562 = vsub.f32 %v1050, %v1306
    %v1563 = vsub.f32 %v1051, %v1307
    %v1564 = vsub.f32 %v1052, %v1308
    %v1565 = vsub.f32 %v1053, %v1309
    %v1566 = vsub.f32 %v1054, %v1310
    %v1567 = vsub.f32 %v1055, %v1311
    %v1568 = vsub.f32 %v1056, %v1312
    %v1569 = vsub.f32 %v1057, %v1313
    %v1570 = vsub.f32 %v1058, %v1314
    %v1571 = vsub.f32 %v1059, %v1315
    %v1572 = vsub.f32 %v1060, %v1316
    %v1573 = vsub.f32 %v1061, %v1317
    %v1574 = vsub.f32 %v1062, %v1318
    %v1575 = vsub.f32 %v1063, %v1319
    %v1576 = vsub.f32 %v1064, %v1320
    %v1577 = vsub.f32 %v1065, %v1321
    %v1578 = vsub.f32 %v1066, %v1322
    %v1579 = vsub.f32 %v1067, %v1323
    %v1580 = vsub.f32 %v1068, %v1324
    %v1581 = vsub.f32 %v1069, %v1325
    %v1582 = vsub.f32 %v1070, %v1326
    %v1583 = vsub.f32 %v1071, %v1327
    %v1584 = vsub.f32 %v1072, %v1328
    %v1585 = vsub.f32 %v1073, %v1329
    %v1586 = vsub.f32 %v1074, %v1330
    %v1587 = vsub.f32 %v1075, %v1331
    %v1588 = vsub.f32 %v1076, %v1332
    %v1589 = vsub.f32 %v1077, %v1333
    %v1590 = vsub.f32 %v1078, %v1334
    %v1591 = vsub.f32 %v1079, %v1335
    %v1592 = vsub.f32 %v1080, %v1336
    %v1593 = vsub.f32 %v1081, %v1337
    %v1594 = vsub.f32 %v1082, %v1338
    %v1595 = vsub.f32 %v1083, %v1339
    %v1596 = vsub.f32 %v1084, %v1340
    %v1597 = vsub.f32 %v1085, %v1341
    %v1598 = vsub.f32 %v1086, %v1342
    %v1599 = vsub.f32 %v1087, %v1343
    %v1600 = vsub.f32 %v1088, %v1344
    %v1601 = vsub.f32 %v1089, %v1345
    %v1602 = vsub.f32 %v1090, %v1346
    %v1603 = vsub.f32 %v1091, %v1347
    %v1604 = vsub.f32 %v1092, %v1348
    %v1605 = vsub.f32 %v1093, %v1349
    %v1606 = vsub.f32 %v1094, %v1350
    %v1607 = vsub.f32 %v1095, %v1351
    %v1608 = vsub.f32 %v1096, %v1352
    %v1609 = vsub.f32 %v1097, %v1353
    %v1610 = vsub.f32 %v1098, %v1354
    %v1611 = vsub.f32 %v1099, %v1355
    %v1612 = vsub.f32 %v1100, %v1356
    %v1613 = vsub.f32 %v1101, %v1357
    %v1614 = vsub.f32 %v1102, %v1358
    %v1615 = vsub.f32 %v1103, %v1359
    %v1616 = vsub.f32 %v1104, %v1360
    %v1617 = vsub.f32 %v1105, %v1361
    %v1618 = vsub.f32 %v1106, %v1362
    %v1619 = vsub.f32 %v1107, %v1363
    %v1620 = vsub.f32 %v1108, %v1364
    %v1621 = vsub.f32 %v1109, %v1365
    %v1622 = vsel %vm582, 1, 0
    %v1623 = vsel %vm583, 1, 0
    %v1624 = vsel %vm584, 1, 0
    %v1625 = vsel %vm585, 1, 0
    %v1626 = vsel %vm586, 1, 0
    %v1627 = vsel %vm587, 1, 0
    %v1628 = vsel %vm588, 1, 0
    %v1629 = vsel %vm589, 1, 0
    %v1630 = vsel %vm590, 1, 0
    %v1631 = vsel %vm591, 1, 0
    %v1632 = vsel %vm592, 1, 0
    %v1633 = vsel %vm593, 1, 0
    %v1634 = vsel %vm594, 1, 0
    %v1635 = vsel %vm595, 1, 0
    %v1636 = vsel %vm596, 1, 0
    %v1637 = vsel %vm597, 1, 0
    %v1638 = vsel %vm598, 1, 0
    %v1639 = vsel %vm599, 1, 0
    %v1640 = vsel %vm600, 1, 0
    %v1641 = vsel %vm601, 1, 0
    %v1642 = vsel %vm602, 1, 0
    %v1643 = vsel %vm603, 1, 0
    %v1644 = vsel %vm604, 1, 0
    %v1645 = vsel %vm605, 1, 0
    %v1646 = vsel %vm606, 1, 0
    %v1647 = vsel %vm607, 1, 0
    %v1648 = vsel %vm608, 1, 0
    %v1649 = vsel %vm609, 1, 0
    %v1650 = vsel %vm610, 1, 0
    %v1651 = vsel %vm611, 1, 0
    %v1652 = vsel %vm612, 1, 0
    %v1653 = vsel %vm613, 1, 0
    %v1654 = vsel %vm614, 1, 0
    %v1655 = vsel %vm615, 1, 0
    %v1656 = vsel %vm616, 1, 0
    %v1657 = vsel %vm617, 1, 0
    %v1658 = vsel %vm618, 1, 0
    %v1659 = vsel %vm619, 1, 0
    %v1660 = vsel %vm620, 1, 0
    %v1661 = vsel %vm621, 1, 0
    %v1662 = vsel %vm622, 1, 0
    %v1663 = vsel %vm623, 1, 0
    %v1664 = vsel %vm624, 1, 0
    %v1665 = vsel %vm625, 1, 0
    %v1666 = vsel %vm626, 1, 0
    %v1667 = vsel %vm627, 1, 0
    %v1668 = vsel %vm628, 1, 0
    %v1669 = vsel %vm629, 1, 0
    %v1670 = vsel %vm630, 1, 0
    %v1671 = vsel %vm631, 1, 0
    %v1672 = vsel %vm632, 1, 0
    %v1673 = vsel %vm633, 1, 0
    %v1674 = vsel %vm634, 1, 0
    %v1675 = vsel %vm635, 1, 0
    %v1676 = vsel %vm636, 1, 0
    %v1677 = vsel %vm637, 1, 0
    %v1678 = vsel %vm638, 1, 0
    %v1679 = vsel %vm639, 1, 0
    %v1680 = vsel %vm640, 1, 0
    %v1681 = vsel %vm641, 1, 0
    %v1682 = vsel %vm642, 1, 0
    %v1683 = vsel %vm643, 1, 0
    %v1684 = vsel %vm644, 1, 0
    %v1685 = vsel %vm645, 1, 0
    %v1686 = vsel %vm646, 1, 0
    %v1687 = vsel %vm647, 1, 0
    %v1688 = vsel %vm648, 1, 0
    %v1689 = vsel %vm649, 1, 0
    %v1690 = vsel %vm650, 1, 0
    %v1691 = vsel %vm651, 1, 0
    %v1692 = vsel %vm652, 1, 0
    %v1693 = vsel %vm653, 1, 0
    %v1694 = vsel %vm654, 1, 0
    %v1695 = vsel %vm655, 1, 0
    %v1696 = vsel %vm656, 1, 0
    %v1697 = vsel %vm657, 1, 0
    %v1698 = vsel %vm658, 1, 0
    %v1699 = vsel %vm659, 1, 0
    %v1700 = vsel %vm660, 1, 0
    %v1701 = vsel %vm661, 1, 0
    %v1702 = vsel %vm662, 1, 0
    %v1703 = vsel %vm663, 1, 0
    %v1704 = vsel %vm664, 1, 0
    %v1705 = vsel %vm665, 1, 0
    %v1706 = vsel %vm666, 1, 0
    %v1707 = vsel %vm667, 1, 0
    %v1708 = vsel %vm668, 1, 0
    %v1709 = vsel %vm669, 1, 0
    %v1710 = vsel %vm670, 1, 0
    %v1711 = vsel %vm671, 1, 0
    %v1712 = vsel %vm672, 1, 0
    %v1713 = vsel %vm673, 1, 0
    %v1714 = vsel %vm674, 1, 0
    %v1715 = vsel %vm675, 1, 0
    %v1716 = vsel %vm676, 1, 0
    %v1717 = vsel %vm677, 1, 0
    %v1718 = vsel %vm678, 1, 0
    %v1719 = vsel %vm679, 1, 0
    %v1720 = vsel %vm680, 1, 0
    %v1721 = vsel %vm681, 1, 0
    %v1722 = vsel %vm682, 1, 0
    %v1723 = vsel %vm683, 1, 0
    %v1724 = vsel %vm684, 1, 0
    %v1725 = vsel %vm685, 1, 0
    %v1726 = vsel %vm686, 1, 0
    %v1727 = vsel %vm687, 1, 0
    %v1728 = vsel %vm688, 1, 0
    %v1729 = vsel %vm689, 1, 0
    %v1730 = vsel %vm690, 1, 0
    %v1731 = vsel %vm691, 1, 0
    %v1732 = vsel %vm692, 1, 0
    %v1733 = vsel %vm693, 1, 0
    %v1734 = vsel %vm694, 1, 0
    %v1735 = vsel %vm695, 1, 0
    %v1736 = vsel %vm696, 1, 0
    %v1737 = vsel %vm697, 1, 0
    %v1738 = vsel %vm698, 1, 0
    %v1739 = vsel %vm699, 1, 0
    %v1740 = vsel %vm700, 1, 0
    %v1741 = vsel %vm701, 1, 0
    %v1742 = vsel %vm702, 1, 0
    %v1743 = vsel %vm703, 1, 0
    %v1744 = vsel %vm704, 1, 0
    %v1745 = vsel %vm705, 1, 0
    %v1746 = vsel %vm706, 1, 0
    %v1747 = vsel %vm707, 1, 0
    %v1748 = vsel %vm708, 1, 0
    %v1749 = vsel %vm709, 1, 0
    %v1750 = vsel %vm710, 1, 0
    %v1751 = vsel %vm711, 1, 0
    %v1752 = vsel %vm712, 1, 0
    %v1753 = vsel %vm713, 1, 0
    %v1754 = vsel %vm714, 1, 0
    %v1755 = vsel %vm715, 1, 0
    %v1756 = vsel %vm716, 1, 0
    %v1757 = vsel %vm717, 1, 0
    %v1758 = vsel %vm718, 1, 0
    %v1759 = vsel %vm719, 1, 0
    %v1760 = vsel %vm720, 1, 0
    %v1761 = vsel %vm721, 1, 0
    %v1762 = vsel %vm722, 1, 0
    %v1763 = vsel %vm723, 1, 0
    %v1764 = vsel %vm724, 1, 0
    %v1765 = vsel %vm725, 1, 0
    %v1766 = vsel %vm726, 1, 0
    %v1767 = vsel %vm727, 1, 0
    %v1768 = vsel %vm728, 1, 0
    %v1769 = vsel %vm729, 1, 0
    %v1770 = vsel %vm730, 1, 0
    %v1771 = vsel %vm731, 1, 0
    %v1772 = vsel %vm732, 1, 0
    %v1773 = vsel %vm733, 1, 0
    %v1774 = vsel %vm734, 1, 0
    %v1775 = vsel %vm735, 1, 0
    %v1776 = vsel %vm736, 1, 0
    %v1777 = vsel %vm737, 1, 0
    %v1778 = vsel %vm738, 1, 0
    %v1779 = vsel %vm739, 1, 0
    %v1780 = vsel %vm740, 1, 0
    %v1781 = vsel %vm741, 1, 0
    %v1782 = vsel %vm742, 1, 0
    %v1783 = vsel %vm743, 1, 0
    %v1784 = vsel %vm744, 1, 0
    %v1785 = vsel %vm745, 1, 0
    %v1786 = vsel %vm746, 1, 0
    %v1787 = vsel %vm747, 1, 0
    %v1788 = vsel %vm748, 1, 0
    %v1789 = vsel %vm749, 1, 0
    %v1790 = vsel %vm750, 1, 0
    %v1791 = vsel %vm751, 1, 0
    %v1792 = vsel %vm752, 1, 0
    %v1793 = vsel %vm753, 1, 0
    %v1794 = vsel %vm754, 1, 0
    %v1795 = vsel %vm755, 1, 0
    %v1796 = vsel %vm756, 1, 0
    %v1797 = vsel %vm757, 1, 0
    %v1798 = vsel %vm758, 1, 0
    %v1799 = vsel %vm759, 1, 0
    %v1800 = vsel %vm760, 1, 0
    %v1801 = vsel %vm761, 1, 0
    %v1802 = vsel %vm762, 1, 0
    %v1803 = vsel %vm763, 1, 0
    %v1804 = vsel %vm764, 1, 0
    %v1805 = vsel %vm765, 1, 0
    %v1806 = vsel %vm766, 1, 0
    %v1807 = vsel %vm767, 1, 0
    %v1808 = vsel %vm768, 1, 0
    %v1809 = vsel %vm769, 1, 0
    %v1810 = vsel %vm770, 1, 0
    %v1811 = vsel %vm771, 1, 0
    %v1812 = vsel %vm772, 1, 0
    %v1813 = vsel %vm773, 1, 0
    %v1814 = vsel %vm774, 1, 0
    %v1815 = vsel %vm775, 1, 0
    %v1816 = vsel %vm776, 1, 0
    %v1817 = vsel %vm777, 1, 0
    %v1818 = vsel %vm778, 1, 0
    %v1819 = vsel %vm779, 1, 0
    %v1820 = vsel %vm780, 1, 0
    %v1821 = vsel %vm781, 1, 0
    %v1822 = vsel %vm782, 1, 0
    %v1823 = vsel %vm783, 1, 0
    %v1824 = vsel %vm784, 1, 0
    %v1825 = vsel %vm785, 1, 0
    %v1826 = vsel %vm786, 1, 0
    %v1827 = vsel %vm787, 1, 0
    %v1828 = vsel %vm788, 1, 0
    %v1829 = vsel %vm789, 1, 0
    %v1830 = vsel %vm790, 1, 0
    %v1831 = vsel %vm791, 1, 0
    %v1832 = vsel %vm792, 1, 0
    %v1833 = vsel %vm793, 1, 0
    %v1834 = vsel %vm794, 1, 0
    %v1835 = vsel %vm795, 1, 0
    %v1836 = vsel %vm796, 1, 0
    %v1837 = vsel %vm797, 1, 0
    %v1838 = vsel %vm798, 1, 0
    %v1839 = vsel %vm799, 1, 0
    %v1840 = vsel %vm800, 1, 0
    %v1841 = vsel %vm801, 1, 0
    %v1842 = vsel %vm802, 1, 0
    %v1843 = vsel %vm803, 1, 0
    %v1844 = vsel %vm804, 1, 0
    %v1845 = vsel %vm805, 1, 0
    %v1846 = vsel %vm806, 1, 0
    %v1847 = vsel %vm807, 1, 0
    %v1848 = vsel %vm808, 1, 0
    %v1849 = vsel %vm809, 1, 0
    %v1850 = vsel %vm810, 1, 0
    %v1851 = vsel %vm811, 1, 0
    %v1852 = vsel %vm812, 1, 0
    %v1853 = vsel %vm813, 1, 0
    %v1854 = vsel %vm814, 1, 0
    %v1855 = vsel %vm815, 1, 0
    %v1856 = vsel %vm816, 1, 0
    %v1857 = vsel %vm817, 1, 0
    %v1858 = vsel %vm818, 1, 0
    %v1859 = vsel %vm819, 1, 0
    %v1860 = vsel %vm820, 1, 0
    %v1861 = vsel %vm821, 1, 0
    %v1862 = vsel %vm822, 1, 0
    %v1863 = vsel %vm823, 1, 0
    %v1864 = vsel %vm824, 1, 0
    %v1865 = vsel %vm825, 1, 0
    %v1866 = vsel %vm826, 1, 0
    %v1867 = vsel %vm827, 1, 0
    %v1868 = vsel %vm828, 1, 0
    %v1869 = vsel %vm829, 1, 0
    %v1870 = vsel %vm830, 1, 0
    %v1871 = vsel %vm831, 1, 0
    %v1872 = vsel %vm832, 1, 0
    %v1873 = vsel %vm833, 1, 0
    %v1874 = vsel %vm834, 1, 0
    %v1875 = vsel %vm835, 1, 0
    %v1876 = vsel %vm836, 1, 0
    %v1877 = vsel %vm837, 1, 0
    %vm1878 = vcmp.eq.s32.totalorder %v1622, 1
    %vm1879 = vcmp.eq.s32.totalorder %v1623, 1
    %vm1880 = vcmp.eq.s32.totalorder %v1624, 1
    %vm1881 = vcmp.eq.s32.totalorder %v1625, 1
    %vm1882 = vcmp.eq.s32.totalorder %v1626, 1
    %vm1883 = vcmp.eq.s32.totalorder %v1627, 1
    %vm1884 = vcmp.eq.s32.totalorder %v1628, 1
    %vm1885 = vcmp.eq.s32.totalorder %v1629, 1
    %vm1886 = vcmp.eq.s32.totalorder %v1630, 1
    %vm1887 = vcmp.eq.s32.totalorder %v1631, 1
    %vm1888 = vcmp.eq.s32.totalorder %v1632, 1
    %vm1889 = vcmp.eq.s32.totalorder %v1633, 1
    %vm1890 = vcmp.eq.s32.totalorder %v1634, 1
    %vm1891 = vcmp.eq.s32.totalorder %v1635, 1
    %vm1892 = vcmp.eq.s32.totalorder %v1636, 1
    %vm1893 = vcmp.eq.s32.totalorder %v1637, 1
    %vm1894 = vcmp.eq.s32.totalorder %v1638, 1
    %vm1895 = vcmp.eq.s32.totalorder %v1639, 1
    %vm1896 = vcmp.eq.s32.totalorder %v1640, 1
    %vm1897 = vcmp.eq.s32.totalorder %v1641, 1
    %vm1898 = vcmp.eq.s32.totalorder %v1642, 1
    %vm1899 = vcmp.eq.s32.totalorder %v1643, 1
    %vm1900 = vcmp.eq.s32.totalorder %v1644, 1
    %vm1901 = vcmp.eq.s32.totalorder %v1645, 1
    %vm1902 = vcmp.eq.s32.totalorder %v1646, 1
    %vm1903 = vcmp.eq.s32.totalorder %v1647, 1
    %vm1904 = vcmp.eq.s32.totalorder %v1648, 1
    %vm1905 = vcmp.eq.s32.totalorder %v1649, 1
    %vm1906 = vcmp.eq.s32.totalorder %v1650, 1
    %vm1907 = vcmp.eq.s32.totalorder %v1651, 1
    %vm1908 = vcmp.eq.s32.totalorder %v1652, 1
    %vm1909 = vcmp.eq.s32.totalorder %v1653, 1
    %vm1910 = vcmp.eq.s32.totalorder %v1654, 1
    %vm1911 = vcmp.eq.s32.totalorder %v1655, 1
    %vm1912 = vcmp.eq.s32.totalorder %v1656, 1
    %vm1913 = vcmp.eq.s32.totalorder %v1657, 1
    %vm1914 = vcmp.eq.s32.totalorder %v1658, 1
    %vm1915 = vcmp.eq.s32.totalorder %v1659, 1
    %vm1916 = vcmp.eq.s32.totalorder %v1660, 1
    %vm1917 = vcmp.eq.s32.totalorder %v1661, 1
    %vm1918 = vcmp.eq.s32.totalorder %v1662, 1
    %vm1919 = vcmp.eq.s32.totalorder %v1663, 1
    %vm1920 = vcmp.eq.s32.totalorder %v1664, 1
    %vm1921 = vcmp.eq.s32.totalorder %v1665, 1
    %vm1922 = vcmp.eq.s32.totalorder %v1666, 1
    %vm1923 = vcmp.eq.s32.totalorder %v1667, 1
    %vm1924 = vcmp.eq.s32.totalorder %v1668, 1
    %vm1925 = vcmp.eq.s32.totalorder %v1669, 1
    %vm1926 = vcmp.eq.s32.totalorder %v1670, 1
    %vm1927 = vcmp.eq.s32.totalorder %v1671, 1
    %vm1928 = vcmp.eq.s32.totalorder %v1672, 1
    %vm1929 = vcmp.eq.s32.totalorder %v1673, 1
    %vm1930 = vcmp.eq.s32.totalorder %v1674, 1
    %vm1931 = vcmp.eq.s32.totalorder %v1675, 1
    %vm1932 = vcmp.eq.s32.totalorder %v1676, 1
    %vm1933 = vcmp.eq.s32.totalorder %v1677, 1
    %vm1934 = vcmp.eq.s32.totalorder %v1678, 1
    %vm1935 = vcmp.eq.s32.totalorder %v1679, 1
    %vm1936 = vcmp.eq.s32.totalorder %v1680, 1
    %vm1937 = vcmp.eq.s32.totalorder %v1681, 1
    %vm1938 = vcmp.eq.s32.totalorder %v1682, 1
    %vm1939 = vcmp.eq.s32.totalorder %v1683, 1
    %vm1940 = vcmp.eq.s32.totalorder %v1684, 1
    %vm1941 = vcmp.eq.s32.totalorder %v1685, 1
    %vm1942 = vcmp.eq.s32.totalorder %v1686, 1
    %vm1943 = vcmp.eq.s32.totalorder %v1687, 1
    %vm1944 = vcmp.eq.s32.totalorder %v1688, 1
    %vm1945 = vcmp.eq.s32.totalorder %v1689, 1
    %vm1946 = vcmp.eq.s32.totalorder %v1690, 1
    %vm1947 = vcmp.eq.s32.totalorder %v1691, 1
    %vm1948 = vcmp.eq.s32.totalorder %v1692, 1
    %vm1949 = vcmp.eq.s32.totalorder %v1693, 1
    %vm1950 = vcmp.eq.s32.totalorder %v1694, 1
    %vm1951 = vcmp.eq.s32.totalorder %v1695, 1
    %vm1952 = vcmp.eq.s32.totalorder %v1696, 1
    %vm1953 = vcmp.eq.s32.totalorder %v1697, 1
    %vm1954 = vcmp.eq.s32.totalorder %v1698, 1
    %vm1955 = vcmp.eq.s32.totalorder %v1699, 1
    %vm1956 = vcmp.eq.s32.totalorder %v1700, 1
    %vm1957 = vcmp.eq.s32.totalorder %v1701, 1
    %vm1958 = vcmp.eq.s32.totalorder %v1702, 1
    %vm1959 = vcmp.eq.s32.totalorder %v1703, 1
    %vm1960 = vcmp.eq.s32.totalorder %v1704, 1
    %vm1961 = vcmp.eq.s32.totalorder %v1705, 1
    %vm1962 = vcmp.eq.s32.totalorder %v1706, 1
    %vm1963 = vcmp.eq.s32.totalorder %v1707, 1
    %vm1964 = vcmp.eq.s32.totalorder %v1708, 1
    %vm1965 = vcmp.eq.s32.totalorder %v1709, 1
    %vm1966 = vcmp.eq.s32.totalorder %v1710, 1
    %vm1967 = vcmp.eq.s32.totalorder %v1711, 1
    %vm1968 = vcmp.eq.s32.totalorder %v1712, 1
    %vm1969 = vcmp.eq.s32.totalorder %v1713, 1
    %vm1970 = vcmp.eq.s32.totalorder %v1714, 1
    %vm1971 = vcmp.eq.s32.totalorder %v1715, 1
    %vm1972 = vcmp.eq.s32.totalorder %v1716, 1
    %vm1973 = vcmp.eq.s32.totalorder %v1717, 1
    %vm1974 = vcmp.eq.s32.totalorder %v1718, 1
    %vm1975 = vcmp.eq.s32.totalorder %v1719, 1
    %vm1976 = vcmp.eq.s32.totalorder %v1720, 1
    %vm1977 = vcmp.eq.s32.totalorder %v1721, 1
    %vm1978 = vcmp.eq.s32.totalorder %v1722, 1
    %vm1979 = vcmp.eq.s32.totalorder %v1723, 1
    %vm1980 = vcmp.eq.s32.totalorder %v1724, 1
    %vm1981 = vcmp.eq.s32.totalorder %v1725, 1
    %vm1982 = vcmp.eq.s32.totalorder %v1726, 1
    %vm1983 = vcmp.eq.s32.totalorder %v1727, 1
    %vm1984 = vcmp.eq.s32.totalorder %v1728, 1
    %vm1985 = vcmp.eq.s32.totalorder %v1729, 1
    %vm1986 = vcmp.eq.s32.totalorder %v1730, 1
    %vm1987 = vcmp.eq.s32.totalorder %v1731, 1
    %vm1988 = vcmp.eq.s32.totalorder %v1732, 1
    %vm1989 = vcmp.eq.s32.totalorder %v1733, 1
    %vm1990 = vcmp.eq.s32.totalorder %v1734, 1
    %vm1991 = vcmp.eq.s32.totalorder %v1735, 1
    %vm1992 = vcmp.eq.s32.totalorder %v1736, 1
    %vm1993 = vcmp.eq.s32.totalorder %v1737, 1
    %vm1994 = vcmp.eq.s32.totalorder %v1738, 1
    %vm1995 = vcmp.eq.s32.totalorder %v1739, 1
    %vm1996 = vcmp.eq.s32.totalorder %v1740, 1
    %vm1997 = vcmp.eq.s32.totalorder %v1741, 1
    %vm1998 = vcmp.eq.s32.totalorder %v1742, 1
    %vm1999 = vcmp.eq.s32.totalorder %v1743, 1
    %vm2000 = vcmp.eq.s32.totalorder %v1744, 1
    %vm2001 = vcmp.eq.s32.totalorder %v1745, 1
    %vm2002 = vcmp.eq.s32.totalorder %v1746, 1
    %vm2003 = vcmp.eq.s32.totalorder %v1747, 1
    %vm2004 = vcmp.eq.s32.totalorder %v1748, 1
    %vm2005 = vcmp.eq.s32.totalorder %v1749, 1
    %vm2006 = vcmp.eq.s32.totalorder %v1750, 1
    %vm2007 = vcmp.eq.s32.totalorder %v1751, 1
    %vm2008 = vcmp.eq.s32.totalorder %v1752, 1
    %vm2009 = vcmp.eq.s32.totalorder %v1753, 1
    %vm2010 = vcmp.eq.s32.totalorder %v1754, 1
    %vm2011 = vcmp.eq.s32.totalorder %v1755, 1
    %vm2012 = vcmp.eq.s32.totalorder %v1756, 1
    %vm2013 = vcmp.eq.s32.totalorder %v1757, 1
    %vm2014 = vcmp.eq.s32.totalorder %v1758, 1
    %vm2015 = vcmp.eq.s32.totalorder %v1759, 1
    %vm2016 = vcmp.eq.s32.totalorder %v1760, 1
    %vm2017 = vcmp.eq.s32.totalorder %v1761, 1
    %vm2018 = vcmp.eq.s32.totalorder %v1762, 1
    %vm2019 = vcmp.eq.s32.totalorder %v1763, 1
    %vm2020 = vcmp.eq.s32.totalorder %v1764, 1
    %vm2021 = vcmp.eq.s32.totalorder %v1765, 1
    %vm2022 = vcmp.eq.s32.totalorder %v1766, 1
    %vm2023 = vcmp.eq.s32.totalorder %v1767, 1
    %vm2024 = vcmp.eq.s32.totalorder %v1768, 1
    %vm2025 = vcmp.eq.s32.totalorder %v1769, 1
    %vm2026 = vcmp.eq.s32.totalorder %v1770, 1
    %vm2027 = vcmp.eq.s32.totalorder %v1771, 1
    %vm2028 = vcmp.eq.s32.totalorder %v1772, 1
    %vm2029 = vcmp.eq.s32.totalorder %v1773, 1
    %vm2030 = vcmp.eq.s32.totalorder %v1774, 1
    %vm2031 = vcmp.eq.s32.totalorder %v1775, 1
    %vm2032 = vcmp.eq.s32.totalorder %v1776, 1
    %vm2033 = vcmp.eq.s32.totalorder %v1777, 1
    %vm2034 = vcmp.eq.s32.totalorder %v1778, 1
    %vm2035 = vcmp.eq.s32.totalorder %v1779, 1
    %vm2036 = vcmp.eq.s32.totalorder %v1780, 1
    %vm2037 = vcmp.eq.s32.totalorder %v1781, 1
    %vm2038 = vcmp.eq.s32.totalorder %v1782, 1
    %vm2039 = vcmp.eq.s32.totalorder %v1783, 1
    %vm2040 = vcmp.eq.s32.totalorder %v1784, 1
    %vm2041 = vcmp.eq.s32.totalorder %v1785, 1
    %vm2042 = vcmp.eq.s32.totalorder %v1786, 1
    %vm2043 = vcmp.eq.s32.totalorder %v1787, 1
    %vm2044 = vcmp.eq.s32.totalorder %v1788, 1
    %vm2045 = vcmp.eq.s32.totalorder %v1789, 1
    %vm2046 = vcmp.eq.s32.totalorder %v1790, 1
    %vm2047 = vcmp.eq.s32.totalorder %v1791, 1
    %vm2048 = vcmp.eq.s32.totalorder %v1792, 1
    %vm2049 = vcmp.eq.s32.totalorder %v1793, 1
    %vm2050 = vcmp.eq.s32.totalorder %v1794, 1
    %vm2051 = vcmp.eq.s32.totalorder %v1795, 1
    %vm2052 = vcmp.eq.s32.totalorder %v1796, 1
    %vm2053 = vcmp.eq.s32.totalorder %v1797, 1
    %vm2054 = vcmp.eq.s32.totalorder %v1798, 1
    %vm2055 = vcmp.eq.s32.totalorder %v1799, 1
    %vm2056 = vcmp.eq.s32.totalorder %v1800, 1
    %vm2057 = vcmp.eq.s32.totalorder %v1801, 1
    %vm2058 = vcmp.eq.s32.totalorder %v1802, 1
    %vm2059 = vcmp.eq.s32.totalorder %v1803, 1
    %vm2060 = vcmp.eq.s32.totalorder %v1804, 1
    %vm2061 = vcmp.eq.s32.totalorder %v1805, 1
    %vm2062 = vcmp.eq.s32.totalorder %v1806, 1
    %vm2063 = vcmp.eq.s32.totalorder %v1807, 1
    %vm2064 = vcmp.eq.s32.totalorder %v1808, 1
    %vm2065 = vcmp.eq.s32.totalorder %v1809, 1
    %vm2066 = vcmp.eq.s32.totalorder %v1810, 1
    %vm2067 = vcmp.eq.s32.totalorder %v1811, 1
    %vm2068 = vcmp.eq.s32.totalorder %v1812, 1
    %vm2069 = vcmp.eq.s32.totalorder %v1813, 1
    %vm2070 = vcmp.eq.s32.totalorder %v1814, 1
    %vm2071 = vcmp.eq.s32.totalorder %v1815, 1
    %vm2072 = vcmp.eq.s32.totalorder %v1816, 1
    %vm2073 = vcmp.eq.s32.totalorder %v1817, 1
    %vm2074 = vcmp.eq.s32.totalorder %v1818, 1
    %vm2075 = vcmp.eq.s32.totalorder %v1819, 1
    %vm2076 = vcmp.eq.s32.totalorder %v1820, 1
    %vm2077 = vcmp.eq.s32.totalorder %v1821, 1
    %vm2078 = vcmp.eq.s32.totalorder %v1822, 1
    %vm2079 = vcmp.eq.s32.totalorder %v1823, 1
    %vm2080 = vcmp.eq.s32.totalorder %v1824, 1
    %vm2081 = vcmp.eq.s32.totalorder %v1825, 1
    %vm2082 = vcmp.eq.s32.totalorder %v1826, 1
    %vm2083 = vcmp.eq.s32.totalorder %v1827, 1
    %vm2084 = vcmp.eq.s32.totalorder %v1828, 1
    %vm2085 = vcmp.eq.s32.totalorder %v1829, 1
    %vm2086 = vcmp.eq.s32.totalorder %v1830, 1
    %vm2087 = vcmp.eq.s32.totalorder %v1831, 1
    %vm2088 = vcmp.eq.s32.totalorder %v1832, 1
    %vm2089 = vcmp.eq.s32.totalorder %v1833, 1
    %vm2090 = vcmp.eq.s32.totalorder %v1834, 1
    %vm2091 = vcmp.eq.s32.totalorder %v1835, 1
    %vm2092 = vcmp.eq.s32.totalorder %v1836, 1
    %vm2093 = vcmp.eq.s32.totalorder %v1837, 1
    %vm2094 = vcmp.eq.s32.totalorder %v1838, 1
    %vm2095 = vcmp.eq.s32.totalorder %v1839, 1
    %vm2096 = vcmp.eq.s32.totalorder %v1840, 1
    %vm2097 = vcmp.eq.s32.totalorder %v1841, 1
    %vm2098 = vcmp.eq.s32.totalorder %v1842, 1
    %vm2099 = vcmp.eq.s32.totalorder %v1843, 1
    %vm2100 = vcmp.eq.s32.totalorder %v1844, 1
    %vm2101 = vcmp.eq.s32.totalorder %v1845, 1
    %vm2102 = vcmp.eq.s32.totalorder %v1846, 1
    %vm2103 = vcmp.eq.s32.totalorder %v1847, 1
    %vm2104 = vcmp.eq.s32.totalorder %v1848, 1
    %vm2105 = vcmp.eq.s32.totalorder %v1849, 1
    %vm2106 = vcmp.eq.s32.totalorder %v1850, 1
    %vm2107 = vcmp.eq.s32.totalorder %v1851, 1
    %vm2108 = vcmp.eq.s32.totalorder %v1852, 1
    %vm2109 = vcmp.eq.s32.totalorder %v1853, 1
    %vm2110 = vcmp.eq.s32.totalorder %v1854, 1
    %vm2111 = vcmp.eq.s32.totalorder %v1855, 1
    %vm2112 = vcmp.eq.s32.totalorder %v1856, 1
    %vm2113 = vcmp.eq.s32.totalorder %v1857, 1
    %vm2114 = vcmp.eq.s32.totalorder %v1858, 1
    %vm2115 = vcmp.eq.s32.totalorder %v1859, 1
    %vm2116 = vcmp.eq.s32.totalorder %v1860, 1
    %vm2117 = vcmp.eq.s32.totalorder %v1861, 1
    %vm2118 = vcmp.eq.s32.totalorder %v1862, 1
    %vm2119 = vcmp.eq.s32.totalorder %v1863, 1
    %vm2120 = vcmp.eq.s32.totalorder %v1864, 1
    %vm2121 = vcmp.eq.s32.totalorder %v1865, 1
    %vm2122 = vcmp.eq.s32.totalorder %v1866, 1
    %vm2123 = vcmp.eq.s32.totalorder %v1867, 1
    %vm2124 = vcmp.eq.s32.totalorder %v1868, 1
    %vm2125 = vcmp.eq.s32.totalorder %v1869, 1
    %vm2126 = vcmp.eq.s32.totalorder %v1870, 1
    %vm2127 = vcmp.eq.s32.totalorder %v1871, 1
    %vm2128 = vcmp.eq.s32.totalorder %v1872, 1
    %vm2129 = vcmp.eq.s32.totalorder %v1873, 1
    %vm2130 = vcmp.eq.s32.totalorder %v1874, 1
    %vm2131 = vcmp.eq.s32.totalorder %v1875, 1
    %vm2132 = vcmp.eq.s32.totalorder %v1876, 1
    %vm2133 = vcmp.eq.s32.totalorder %v1877, 1
    %v2134 = vsel %vm1878, %v1366, 0.0
    %v2135 = vsel %vm1879, %v1367, 0.0
    %v2136 = vsel %vm1880, %v1368, 0.0
    %v2137 = vsel %vm1881, %v1369, 0.0
    %v2138 = vsel %vm1882, %v1370, 0.0
    %v2139 = vsel %vm1883, %v1371, 0.0
    %v2140 = vsel %vm1884, %v1372, 0.0
    %v2141 = vsel %vm1885, %v1373, 0.0
    %v2142 = vsel %vm1886, %v1374, 0.0
    %v2143 = vsel %vm1887, %v1375, 0.0
    %v2144 = vsel %vm1888, %v1376, 0.0
    %v2145 = vsel %vm1889, %v1377, 0.0
    %v2146 = vsel %vm1890, %v1378, 0.0
    %v2147 = vsel %vm1891, %v1379, 0.0
    %v2148 = vsel %vm1892, %v1380, 0.0
    %v2149 = vsel %vm1893, %v1381, 0.0
    %v2150 = vsel %vm1894, %v1382, 0.0
    %v2151 = vsel %vm1895, %v1383, 0.0
    %v2152 = vsel %vm1896, %v1384, 0.0
    %v2153 = vsel %vm1897, %v1385, 0.0
    %v2154 = vsel %vm1898, %v1386, 0.0
    %v2155 = vsel %vm1899, %v1387, 0.0
    %v2156 = vsel %vm1900, %v1388, 0.0
    %v2157 = vsel %vm1901, %v1389, 0.0
    %v2158 = vsel %vm1902, %v1390, 0.0
    %v2159 = vsel %vm1903, %v1391, 0.0
    %v2160 = vsel %vm1904, %v1392, 0.0
    %v2161 = vsel %vm1905, %v1393, 0.0
    %v2162 = vsel %vm1906, %v1394, 0.0
    %v2163 = vsel %vm1907, %v1395, 0.0
    %v2164 = vsel %vm1908, %v1396, 0.0
    %v2165 = vsel %vm1909, %v1397, 0.0
    %v2166 = vsel %vm1910, %v1398, 0.0
    %v2167 = vsel %vm1911, %v1399, 0.0
    %v2168 = vsel %vm1912, %v1400, 0.0
    %v2169 = vsel %vm1913, %v1401, 0.0
    %v2170 = vsel %vm1914, %v1402, 0.0
    %v2171 = vsel %vm1915, %v1403, 0.0
    %v2172 = vsel %vm1916, %v1404, 0.0
    %v2173 = vsel %vm1917, %v1405, 0.0
    %v2174 = vsel %vm1918, %v1406, 0.0
    %v2175 = vsel %vm1919, %v1407, 0.0
    %v2176 = vsel %vm1920, %v1408, 0.0
    %v2177 = vsel %vm1921, %v1409, 0.0
    %v2178 = vsel %vm1922, %v1410, 0.0
    %v2179 = vsel %vm1923, %v1411, 0.0
    %v2180 = vsel %vm1924, %v1412, 0.0
    %v2181 = vsel %vm1925, %v1413, 0.0
    %v2182 = vsel %vm1926, %v1414, 0.0
    %v2183 = vsel %vm1927, %v1415, 0.0
    %v2184 = vsel %vm1928, %v1416, 0.0
    %v2185 = vsel %vm1929, %v1417, 0.0
    %v2186 = vsel %vm1930, %v1418, 0.0
    %v2187 = vsel %vm1931, %v1419, 0.0
    %v2188 = vsel %vm1932, %v1420, 0.0
    %v2189 = vsel %vm1933, %v1421, 0.0
    %v2190 = vsel %vm1934, %v1422, 0.0
    %v2191 = vsel %vm1935, %v1423, 0.0
    %v2192 = vsel %vm1936, %v1424, 0.0
    %v2193 = vsel %vm1937, %v1425, 0.0
    %v2194 = vsel %vm1938, %v1426, 0.0
    %v2195 = vsel %vm1939, %v1427, 0.0
    %v2196 = vsel %vm1940, %v1428, 0.0
    %v2197 = vsel %vm1941, %v1429, 0.0
    %v2198 = vsel %vm1942, %v1430, 0.0
    %v2199 = vsel %vm1943, %v1431, 0.0
    %v2200 = vsel %vm1944, %v1432, 0.0
    %v2201 = vsel %vm1945, %v1433, 0.0
    %v2202 = vsel %vm1946, %v1434, 0.0
    %v2203 = vsel %vm1947, %v1435, 0.0
    %v2204 = vsel %vm1948, %v1436, 0.0
    %v2205 = vsel %vm1949, %v1437, 0.0
    %v2206 = vsel %vm1950, %v1438, 0.0
    %v2207 = vsel %vm1951, %v1439, 0.0
    %v2208 = vsel %vm1952, %v1440, 0.0
    %v2209 = vsel %vm1953, %v1441, 0.0
    %v2210 = vsel %vm1954, %v1442, 0.0
    %v2211 = vsel %vm1955, %v1443, 0.0
    %v2212 = vsel %vm1956, %v1444, 0.0
    %v2213 = vsel %vm1957, %v1445, 0.0
    %v2214 = vsel %vm1958, %v1446, 0.0
    %v2215 = vsel %vm1959, %v1447, 0.0
    %v2216 = vsel %vm1960, %v1448, 0.0
    %v2217 = vsel %vm1961, %v1449, 0.0
    %v2218 = vsel %vm1962, %v1450, 0.0
    %v2219 = vsel %vm1963, %v1451, 0.0
    %v2220 = vsel %vm1964, %v1452, 0.0
    %v2221 = vsel %vm1965, %v1453, 0.0
    %v2222 = vsel %vm1966, %v1454, 0.0
    %v2223 = vsel %vm1967, %v1455, 0.0
    %v2224 = vsel %vm1968, %v1456, 0.0
    %v2225 = vsel %vm1969, %v1457, 0.0
    %v2226 = vsel %vm1970, %v1458, 0.0
    %v2227 = vsel %vm1971, %v1459, 0.0
    %v2228 = vsel %vm1972, %v1460, 0.0
    %v2229 = vsel %vm1973, %v1461, 0.0
    %v2230 = vsel %vm1974, %v1462, 0.0
    %v2231 = vsel %vm1975, %v1463, 0.0
    %v2232 = vsel %vm1976, %v1464, 0.0
    %v2233 = vsel %vm1977, %v1465, 0.0
    %v2234 = vsel %vm1978, %v1466, 0.0
    %v2235 = vsel %vm1979, %v1467, 0.0
    %v2236 = vsel %vm1980, %v1468, 0.0
    %v2237 = vsel %vm1981, %v1469, 0.0
    %v2238 = vsel %vm1982, %v1470, 0.0
    %v2239 = vsel %vm1983, %v1471, 0.0
    %v2240 = vsel %vm1984, %v1472, 0.0
    %v2241 = vsel %vm1985, %v1473, 0.0
    %v2242 = vsel %vm1986, %v1474, 0.0
    %v2243 = vsel %vm1987, %v1475, 0.0
    %v2244 = vsel %vm1988, %v1476, 0.0
    %v2245 = vsel %vm1989, %v1477, 0.0
    %v2246 = vsel %vm1990, %v1478, 0.0
    %v2247 = vsel %vm1991, %v1479, 0.0
    %v2248 = vsel %vm1992, %v1480, 0.0
    %v2249 = vsel %vm1993, %v1481, 0.0
    %v2250 = vsel %vm1994, %v1482, 0.0
    %v2251 = vsel %vm1995, %v1483, 0.0
    %v2252 = vsel %vm1996, %v1484, 0.0
    %v2253 = vsel %vm1997, %v1485, 0.0
    %v2254 = vsel %vm1998, %v1486, 0.0
    %v2255 = vsel %vm1999, %v1487, 0.0
    %v2256 = vsel %vm2000, %v1488, 0.0
    %v2257 = vsel %vm2001, %v1489, 0.0
    %v2258 = vsel %vm2002, %v1490, 0.0
    %v2259 = vsel %vm2003, %v1491, 0.0
    %v2260 = vsel %vm2004, %v1492, 0.0
    %v2261 = vsel %vm2005, %v1493, 0.0
    %v2262 = vsel %vm2006, %v1494, 0.0
    %v2263 = vsel %vm2007, %v1495, 0.0
    %v2264 = vsel %vm2008, %v1496, 0.0
    %v2265 = vsel %vm2009, %v1497, 0.0
    %v2266 = vsel %vm2010, %v1498, 0.0
    %v2267 = vsel %vm2011, %v1499, 0.0
    %v2268 = vsel %vm2012, %v1500, 0.0
    %v2269 = vsel %vm2013, %v1501, 0.0
    %v2270 = vsel %vm2014, %v1502, 0.0
    %v2271 = vsel %vm2015, %v1503, 0.0
    %v2272 = vsel %vm2016, %v1504, 0.0
    %v2273 = vsel %vm2017, %v1505, 0.0
    %v2274 = vsel %vm2018, %v1506, 0.0
    %v2275 = vsel %vm2019, %v1507, 0.0
    %v2276 = vsel %vm2020, %v1508, 0.0
    %v2277 = vsel %vm2021, %v1509, 0.0
    %v2278 = vsel %vm2022, %v1510, 0.0
    %v2279 = vsel %vm2023, %v1511, 0.0
    %v2280 = vsel %vm2024, %v1512, 0.0
    %v2281 = vsel %vm2025, %v1513, 0.0
    %v2282 = vsel %vm2026, %v1514, 0.0
    %v2283 = vsel %vm2027, %v1515, 0.0
    %v2284 = vsel %vm2028, %v1516, 0.0
    %v2285 = vsel %vm2029, %v1517, 0.0
    %v2286 = vsel %vm2030, %v1518, 0.0
    %v2287 = vsel %vm2031, %v1519, 0.0
    %v2288 = vsel %vm2032, %v1520, 0.0
    %v2289 = vsel %vm2033, %v1521, 0.0
    %v2290 = vsel %vm2034, %v1522, 0.0
    %v2291 = vsel %vm2035, %v1523, 0.0
    %v2292 = vsel %vm2036, %v1524, 0.0
    %v2293 = vsel %vm2037, %v1525, 0.0
    %v2294 = vsel %vm2038, %v1526, 0.0
    %v2295 = vsel %vm2039, %v1527, 0.0
    %v2296 = vsel %vm2040, %v1528, 0.0
    %v2297 = vsel %vm2041, %v1529, 0.0
    %v2298 = vsel %vm2042, %v1530, 0.0
    %v2299 = vsel %vm2043, %v1531, 0.0
    %v2300 = vsel %vm2044, %v1532, 0.0
    %v2301 = vsel %vm2045, %v1533, 0.0
    %v2302 = vsel %vm2046, %v1534, 0.0
    %v2303 = vsel %vm2047, %v1535, 0.0
    %v2304 = vsel %vm2048, %v1536, 0.0
    %v2305 = vsel %vm2049, %v1537, 0.0
    %v2306 = vsel %vm2050, %v1538, 0.0
    %v2307 = vsel %vm2051, %v1539, 0.0
    %v2308 = vsel %vm2052, %v1540, 0.0
    %v2309 = vsel %vm2053, %v1541, 0.0
    %v2310 = vsel %vm2054, %v1542, 0.0
    %v2311 = vsel %vm2055, %v1543, 0.0
    %v2312 = vsel %vm2056, %v1544, 0.0
    %v2313 = vsel %vm2057, %v1545, 0.0
    %v2314 = vsel %vm2058, %v1546, 0.0
    %v2315 = vsel %vm2059, %v1547, 0.0
    %v2316 = vsel %vm2060, %v1548, 0.0
    %v2317 = vsel %vm2061, %v1549, 0.0
    %v2318 = vsel %vm2062, %v1550, 0.0
    %v2319 = vsel %vm2063, %v1551, 0.0
    %v2320 = vsel %vm2064, %v1552, 0.0
    %v2321 = vsel %vm2065, %v1553, 0.0
    %v2322 = vsel %vm2066, %v1554, 0.0
    %v2323 = vsel %vm2067, %v1555, 0.0
    %v2324 = vsel %vm2068, %v1556, 0.0
    %v2325 = vsel %vm2069, %v1557, 0.0
    %v2326 = vsel %vm2070, %v1558, 0.0
    %v2327 = vsel %vm2071, %v1559, 0.0
    %v2328 = vsel %vm2072, %v1560, 0.0
    %v2329 = vsel %vm2073, %v1561, 0.0
    %v2330 = vsel %vm2074, %v1562, 0.0
    %v2331 = vsel %vm2075, %v1563, 0.0
    %v2332 = vsel %vm2076, %v1564, 0.0
    %v2333 = vsel %vm2077, %v1565, 0.0
    %v2334 = vsel %vm2078, %v1566, 0.0
    %v2335 = vsel %vm2079, %v1567, 0.0
    %v2336 = vsel %vm2080, %v1568, 0.0
    %v2337 = vsel %vm2081, %v1569, 0.0
    %v2338 = vsel %vm2082, %v1570, 0.0
    %v2339 = vsel %vm2083, %v1571, 0.0
    %v2340 = vsel %vm2084, %v1572, 0.0
    %v2341 = vsel %vm2085, %v1573, 0.0
    %v2342 = vsel %vm2086, %v1574, 0.0
    %v2343 = vsel %vm2087, %v1575, 0.0
    %v2344 = vsel %vm2088, %v1576, 0.0
    %v2345 = vsel %vm2089, %v1577, 0.0
    %v2346 = vsel %vm2090, %v1578, 0.0
    %v2347 = vsel %vm2091, %v1579, 0.0
    %v2348 = vsel %vm2092, %v1580, 0.0
    %v2349 = vsel %vm2093, %v1581, 0.0
    %v2350 = vsel %vm2094, %v1582, 0.0
    %v2351 = vsel %vm2095, %v1583, 0.0
    %v2352 = vsel %vm2096, %v1584, 0.0
    %v2353 = vsel %vm2097, %v1585, 0.0
    %v2354 = vsel %vm2098, %v1586, 0.0
    %v2355 = vsel %vm2099, %v1587, 0.0
    %v2356 = vsel %vm2100, %v1588, 0.0
    %v2357 = vsel %vm2101, %v1589, 0.0
    %v2358 = vsel %vm2102, %v1590, 0.0
    %v2359 = vsel %vm2103, %v1591, 0.0
    %v2360 = vsel %vm2104, %v1592, 0.0
    %v2361 = vsel %vm2105, %v1593, 0.0
    %v2362 = vsel %vm2106, %v1594, 0.0
    %v2363 = vsel %vm2107, %v1595, 0.0
    %v2364 = vsel %vm2108, %v1596, 0.0
    %v2365 = vsel %vm2109, %v1597, 0.0
    %v2366 = vsel %vm2110, %v1598, 0.0
    %v2367 = vsel %vm2111, %v1599, 0.0
    %v2368 = vsel %vm2112, %v1600, 0.0
    %v2369 = vsel %vm2113, %v1601, 0.0
    %v2370 = vsel %vm2114, %v1602, 0.0
    %v2371 = vsel %vm2115, %v1603, 0.0
    %v2372 = vsel %vm2116, %v1604, 0.0
    %v2373 = vsel %vm2117, %v1605, 0.0
    %v2374 = vsel %vm2118, %v1606, 0.0
    %v2375 = vsel %vm2119, %v1607, 0.0
    %v2376 = vsel %vm2120, %v1608, 0.0
    %v2377 = vsel %vm2121, %v1609, 0.0
    %v2378 = vsel %vm2122, %v1610, 0.0
    %v2379 = vsel %vm2123, %v1611, 0.0
    %v2380 = vsel %vm2124, %v1612, 0.0
    %v2381 = vsel %vm2125, %v1613, 0.0
    %v2382 = vsel %vm2126, %v1614, 0.0
    %v2383 = vsel %vm2127, %v1615, 0.0
    %v2384 = vsel %vm2128, %v1616, 0.0
    %v2385 = vsel %vm2129, %v1617, 0.0
    %v2386 = vsel %vm2130, %v1618, 0.0
    %v2387 = vsel %vm2131, %v1619, 0.0
    %v2388 = vsel %vm2132, %v1620, 0.0
    %v2389 = vsel %vm2133, %v1621, 0.0
    %v2390 = vld [vmem:[#allocation2] sm:$0x1]
    %v2391 = vmul.f32 %v2134, %v2134
    %v2392 = vmul.f32 %v2135, %v2135
    %v2393 = vmul.f32 %v2136, %v2136
    %v2394 = vmul.f32 %v2137, %v2137
    %v2395 = vmul.f32 %v2138, %v2138
    %v2396 = vmul.f32 %v2139, %v2139
    %v2397 = vmul.f32 %v2140, %v2140
    %v2398 = vmul.f32 %v2141, %v2141
    %v2399 = vmul.f32 %v2142, %v2142
    %v2400 = vmul.f32 %v2143, %v2143
    %v2401 = vmul.f32 %v2144, %v2144
    %v2402 = vmul.f32 %v2145, %v2145
    %v2403 = vmul.f32 %v2146, %v2146
    %v2404 = vmul.f32 %v2147, %v2147
    %v2405 = vmul.f32 %v2148, %v2148
    %v2406 = vmul.f32 %v2149, %v2149
    %v2407 = vmul.f32 %v2150, %v2150
    %v2408 = vmul.f32 %v2151, %v2151
    %v2409 = vmul.f32 %v2152, %v2152
    %v2410 = vmul.f32 %v2153, %v2153
    %v2411 = vmul.f32 %v2154, %v2154
    %v2412 = vmul.f32 %v2155, %v2155
    %v2413 = vmul.f32 %v2156, %v2156
    %v2414 = vmul.f32 %v2157, %v2157
    %v2415 = vmul.f32 %v2158, %v2158
    %v2416 = vmul.f32 %v2159, %v2159
    %v2417 = vmul.f32 %v2160, %v2160
    %v2418 = vmul.f32 %v2161, %v2161
    %v2419 = vmul.f32 %v2162, %v2162
    %v2420 = vmul.f32 %v2163, %v2163
    %v2421 = vmul.f32 %v2164, %v2164
    %v2422 = vmul.f32 %v2165, %v2165
    %v2423 = vmul.f32 %v2166, %v2166
    %v2424 = vmul.f32 %v2167, %v2167
    %v2425 = vmul.f32 %v2168, %v2168
    %v2426 = vmul.f32 %v2169, %v2169
    %v2427 = vmul.f32 %v2170, %v2170
    %v2428 = vmul.f32 %v2171, %v2171
    %v2429 = vmul.f32 %v2172, %v2172
    %v2430 = vmul.f32 %v2173, %v2173
    %v2431 = vmul.f32 %v2174, %v2174
    %v2432 = vmul.f32 %v2175, %v2175
    %v2433 = vmul.f32 %v2176, %v2176
    %v2434 = vmul.f32 %v2177, %v2177
    %v2435 = vmul.f32 %v2178, %v2178
    %v2436 = vmul.f32 %v2179, %v2179
    %v2437 = vmul.f32 %v2180, %v2180
    %v2438 = vmul.f32 %v2181, %v2181
    %v2439 = vmul.f32 %v2182, %v2182
    %v2440 = vmul.f32 %v2183, %v2183
    %v2441 = vmul.f32 %v2184, %v2184
    %v2442 = vmul.f32 %v2185, %v2185
    %v2443 = vmul.f32 %v2186, %v2186
    %v2444 = vmul.f32 %v2187, %v2187
    %v2445 = vmul.f32 %v2188, %v2188
    %v2446 = vmul.f32 %v2189, %v2189
    %v2447 = vmul.f32 %v2190, %v2190
    %v2448 = vmul.f32 %v2191, %v2191
    %v2449 = vmul.f32 %v2192, %v2192
    %v2450 = vmul.f32 %v2193, %v2193
    %v2451 = vmul.f32 %v2194, %v2194
    %v2452 = vmul.f32 %v2195, %v2195
    %v2453 = vmul.f32 %v2196, %v2196
    %v2454 = vmul.f32 %v2197, %v2197
    %v2455 = vmul.f32 %v2198, %v2198
    %v2456 = vmul.f32 %v2199, %v2199
    %v2457 = vmul.f32 %v2200, %v2200
    %v2458 = vmul.f32 %v2201, %v2201
    %v2459 = vmul.f32 %v2202, %v2202
    %v2460 = vmul.f32 %v2203, %v2203
    %v2461 = vmul.f32 %v2204, %v2204
    %v2462 = vmul.f32 %v2205, %v2205
    %v2463 = vmul.f32 %v2206, %v2206
    %v2464 = vmul.f32 %v2207, %v2207
    %v2465 = vmul.f32 %v2208, %v2208
    %v2466 = vmul.f32 %v2209, %v2209
    %v2467 = vmul.f32 %v2210, %v2210
    %v2468 = vmul.f32 %v2211, %v2211
    %v2469 = vmul.f32 %v2212, %v2212
    %v2470 = vmul.f32 %v2213, %v2213
    %v2471 = vmul.f32 %v2214, %v2214
    %v2472 = vmul.f32 %v2215, %v2215
    %v2473 = vmul.f32 %v2216, %v2216
    %v2474 = vmul.f32 %v2217, %v2217
    %v2475 = vmul.f32 %v2218, %v2218
    %v2476 = vmul.f32 %v2219, %v2219
    %v2477 = vmul.f32 %v2220, %v2220
    %v2478 = vmul.f32 %v2221, %v2221
    %v2479 = vmul.f32 %v2222, %v2222
    %v2480 = vmul.f32 %v2223, %v2223
    %v2481 = vmul.f32 %v2224, %v2224
    %v2482 = vmul.f32 %v2225, %v2225
    %v2483 = vmul.f32 %v2226, %v2226
    %v2484 = vmul.f32 %v2227, %v2227
    %v2485 = vmul.f32 %v2228, %v2228
    %v2486 = vmul.f32 %v2229, %v2229
    %v2487 = vmul.f32 %v2230, %v2230
    %v2488 = vmul.f32 %v2231, %v2231
    %v2489 = vmul.f32 %v2232, %v2232
    %v2490 = vmul.f32 %v2233, %v2233
    %v2491 = vmul.f32 %v2234, %v2234
    %v2492 = vmul.f32 %v2235, %v2235
    %v2493 = vmul.f32 %v2236, %v2236
    %v2494 = vmul.f32 %v2237, %v2237
    %v2495 = vmul.f32 %v2238, %v2238
    %v2496 = vmul.f32 %v2239, %v2239
    %v2497 = vmul.f32 %v2240, %v2240
    %v2498 = vmul.f32 %v2241, %v2241
    %v2499 = vmul.f32 %v2242, %v2242
    %v2500 = vmul.f32 %v2243, %v2243
    %v2501 = vmul.f32 %v2244, %v2244
    %v2502 = vmul.f32 %v2245, %v2245
    %v2503 = vmul.f32 %v2246, %v2246
    %v2504 = vmul.f32 %v2247, %v2247
    %v2505 = vmul.f32 %v2248, %v2248
    %v2506 = vmul.f32 %v2249, %v2249
    %v2507 = vmul.f32 %v2250, %v2250
    %v2508 = vmul.f32 %v2251, %v2251
    %v2509 = vmul.f32 %v2252, %v2252
    %v2510 = vmul.f32 %v2253, %v2253
    %v2511 = vmul.f32 %v2254, %v2254
    %v2512 = vmul.f32 %v2255, %v2255
    %v2513 = vmul.f32 %v2256, %v2256
    %v2514 = vmul.f32 %v2257, %v2257
    %v2515 = vmul.f32 %v2258, %v2258
    %v2516 = vmul.f32 %v2259, %v2259
    %v2517 = vmul.f32 %v2260, %v2260
    %v2518 = vmul.f32 %v2261, %v2261
    %v2519 = vmul.f32 %v2262, %v2262
    %v2520 = vmul.f32 %v2263, %v2263
    %v2521 = vmul.f32 %v2264, %v2264
    %v2522 = vmul.f32 %v2265, %v2265
    %v2523 = vmul.f32 %v2266, %v2266
    %v2524 = vmul.f32 %v2267, %v2267
    %v2525 = vmul.f32 %v2268, %v2268
    %v2526 = vmul.f32 %v2269, %v2269
    %v2527 = vmul.f32 %v2270, %v2270
    %v2528 = vmul.f32 %v2271, %v2271
    %v2529 = vmul.f32 %v2272, %v2272
    %v2530 = vmul.f32 %v2273, %v2273
    %v2531 = vmul.f32 %v2274, %v2274
    %v2532 = vmul.f32 %v2275, %v2275
    %v2533 = vmul.f32 %v2276, %v2276
    %v2534 = vmul.f32 %v2277, %v2277
    %v2535 = vmul.f32 %v2278, %v2278
    %v2536 = vmul.f32 %v2279, %v2279
    %v2537 = vmul.f32 %v2280, %v2280
    %v2538 = vmul.f32 %v2281, %v2281
    %v2539 = vmul.f32 %v2282, %v2282
    %v2540 = vmul.f32 %v2283, %v2283
    %v2541 = vmul.f32 %v2284, %v2284
    %v2542 = vmul.f32 %v2285, %v2285
    %v2543 = vmul.f32 %v2286, %v2286
    %v2544 = vmul.f32 %v2287, %v2287
    %v2545 = vmul.f32 %v2288, %v2288
    %v2546 = vmul.f32 %v2289, %v2289
    %v2547 = vmul.f32 %v2290, %v2290
    %v2548 = vmul.f32 %v2291, %v2291
    %v2549 = vmul.f32 %v2292, %v2292
    %v2550 = vmul.f32 %v2293, %v2293
    %v2551 = vmul.f32 %v2294, %v2294
    %v2552 = vmul.f32 %v2295, %v2295
    %v2553 = vmul.f32 %v2296, %v2296
    %v2554 = vmul.f32 %v2297, %v2297
    %v2555 = vmul.f32 %v2298, %v2298
    %v2556 = vmul.f32 %v2299, %v2299
    %v2557 = vmul.f32 %v2300, %v2300
    %v2558 = vmul.f32 %v2301, %v2301
    %v2559 = vmul.f32 %v2302, %v2302
    %v2560 = vmul.f32 %v2303, %v2303
    %v2561 = vmul.f32 %v2304, %v2304
    %v2562 = vmul.f32 %v2305, %v2305
    %v2563 = vmul.f32 %v2306, %v2306
    %v2564 = vmul.f32 %v2307, %v2307
    %v2565 = vmul.f32 %v2308, %v2308
    %v2566 = vmul.f32 %v2309, %v2309
    %v2567 = vmul.f32 %v2310, %v2310
    %v2568 = vmul.f32 %v2311, %v2311
    %v2569 = vmul.f32 %v2312, %v2312
    %v2570 = vmul.f32 %v2313, %v2313
    %v2571 = vmul.f32 %v2314, %v2314
    %v2572 = vmul.f32 %v2315, %v2315
    %v2573 = vmul.f32 %v2316, %v2316
    %v2574 = vmul.f32 %v2317, %v2317
    %v2575 = vmul.f32 %v2318, %v2318
    %v2576 = vmul.f32 %v2319, %v2319
    %v2577 = vmul.f32 %v2320, %v2320
    %v2578 = vmul.f32 %v2321, %v2321
    %v2579 = vmul.f32 %v2322, %v2322
    %v2580 = vmul.f32 %v2323, %v2323
    %v2581 = vmul.f32 %v2324, %v2324
    %v2582 = vmul.f32 %v2325, %v2325
    %v2583 = vmul.f32 %v2326, %v2326
    %v2584 = vmul.f32 %v2327, %v2327
    %v2585 = vmul.f32 %v2328, %v2328
    %v2586 = vmul.f32 %v2329, %v2329
    %v2587 = vmul.f32 %v2330, %v2330
    %v2588 = vmul.f32 %v2331, %v2331
    %v2589 = vmul.f32 %v2332, %v2332
    %v2590 = vmul.f32 %v2333, %v2333
    %v2591 = vmul.f32 %v2334, %v2334
    %v2592 = vmul.f32 %v2335, %v2335
    %v2593 = vmul.f32 %v2336, %v2336
    %v2594 = vmul.f32 %v2337, %v2337
    %v2595 = vmul.f32 %v2338, %v2338
    %v2596 = vmul.f32 %v2339, %v2339
    %v2597 = vmul.f32 %v2340, %v2340
    %v2598 = vmul.f32 %v2341, %v2341
    %v2599 = vmul.f32 %v2342, %v2342
    %v2600 = vmul.f32 %v2343, %v2343
    %v2601 = vmul.f32 %v2344, %v2344
    %v2602 = vmul.f32 %v2345, %v2345
    %v2603 = vmul.f32 %v2346, %v2346
    %v2604 = vmul.f32 %v2347, %v2347
    %v2605 = vmul.f32 %v2348, %v2348
    %v2606 = vmul.f32 %v2349, %v2349
    %v2607 = vmul.f32 %v2350, %v2350
    %v2608 = vmul.f32 %v2351, %v2351
    %v2609 = vmul.f32 %v2352, %v2352
    %v2610 = vmul.f32 %v2353, %v2353
    %v2611 = vmul.f32 %v2354, %v2354
    %v2612 = vmul.f32 %v2355, %v2355
    %v2613 = vmul.f32 %v2356, %v2356
    %v2614 = vmul.f32 %v2357, %v2357
    %v2615 = vmul.f32 %v2358, %v2358
    %v2616 = vmul.f32 %v2359, %v2359
    %v2617 = vmul.f32 %v2360, %v2360
    %v2618 = vmul.f32 %v2361, %v2361
    %v2619 = vmul.f32 %v2362, %v2362
    %v2620 = vmul.f32 %v2363, %v2363
    %v2621 = vmul.f32 %v2364, %v2364
    %v2622 = vmul.f32 %v2365, %v2365
    %v2623 = vmul.f32 %v2366, %v2366
    %v2624 = vmul.f32 %v2367, %v2367
    %v2625 = vmul.f32 %v2368, %v2368
    %v2626 = vmul.f32 %v2369, %v2369
    %v2627 = vmul.f32 %v2370, %v2370
    %v2628 = vmul.f32 %v2371, %v2371
    %v2629 = vmul.f32 %v2372, %v2372
    %v2630 = vmul.f32 %v2373, %v2373
    %v2631 = vmul.f32 %v2374, %v2374
    %v2632 = vmul.f32 %v2375, %v2375
    %v2633 = vmul.f32 %v2376, %v2376
    %v2634 = vmul.f32 %v2377, %v2377
    %v2635 = vmul.f32 %v2378, %v2378
    %v2636 = vmul.f32 %v2379, %v2379
    %v2637 = vmul.f32 %v2380, %v2380
    %v2638 = vmul.f32 %v2381, %v2381
    %v2639 = vmul.f32 %v2382, %v2382
    %v2640 = vmul.f32 %v2383, %v2383
    %v2641 = vmul.f32 %v2384, %v2384
    %v2642 = vmul.f32 %v2385, %v2385
    %v2643 = vmul.f32 %v2386, %v2386
    %v2644 = vmul.f32 %v2387, %v2387
    %v2645 = vmul.f32 %v2388, %v2388
    %v2646 = vmul.f32 %v2389, %v2389
    %vm2647 = vcmask 261120
    %v2648 = vsel %vm2647, %v2391, 0.0
    %v2649 = vsel %vm2647, %v2392, 0.0
    %v2650 = vadd.f32 %v2648, %v2649
    %v2651 = vsel %vm2647, %v2393, 0.0
    %v2652 = vadd.f32 %v2650, %v2651
    %v2653 = vsel %vm2647, %v2394, 0.0
    %v2654 = vadd.f32 %v2652, %v2653
    %v2655 = vsel %vm2647, %v2395, 0.0
    %v2656 = vadd.f32 %v2654, %v2655
    %v2657 = vsel %vm2647, %v2396, 0.0
    %v2658 = vadd.f32 %v2656, %v2657
    %v2659 = vsel %vm2647, %v2397, 0.0
    %v2660 = vadd.f32 %v2658, %v2659
    %v2661 = vsel %vm2647, %v2398, 0.0
    %v2662 = vadd.f32 %v2660, %v2661
    %v2663 = vsel %vm2647, %v2399, 0.0
    %v2664 = vadd.f32 %v2662, %v2663
    %v2665 = vsel %vm2647, %v2400, 0.0
    %v2666 = vadd.f32 %v2664, %v2665
    %v2667 = vsel %vm2647, %v2401, 0.0
    %v2668 = vadd.f32 %v2666, %v2667
    %v2669 = vsel %vm2647, %v2402, 0.0
    %v2670 = vadd.f32 %v2668, %v2669
    %v2671 = vsel %vm2647, %v2403, 0.0
    %v2672 = vadd.f32 %v2670, %v2671
    %v2673 = vsel %vm2647, %v2404, 0.0
    %v2674 = vadd.f32 %v2672, %v2673
    %v2675 = vsel %vm2647, %v2405, 0.0
    %v2676 = vadd.f32 %v2674, %v2675
    %v2677 = vsel %vm2647, %v2406, 0.0
    %v2678 = vadd.f32 %v2676, %v2677
    %v2679 = vsel %vm2647, %v2407, 0.0
    %v2680 = vadd.f32 %v2678, %v2679
    %v2681 = vsel %vm2647, %v2408, 0.0
    %v2682 = vadd.f32 %v2680, %v2681
    %v2683 = vsel %vm2647, %v2409, 0.0
    %v2684 = vadd.f32 %v2682, %v2683
    %v2685 = vsel %vm2647, %v2410, 0.0
    %v2686 = vadd.f32 %v2684, %v2685
    %v2687 = vsel %vm2647, %v2411, 0.0
    %v2688 = vadd.f32 %v2686, %v2687
    %v2689 = vsel %vm2647, %v2412, 0.0
    %v2690 = vadd.f32 %v2688, %v2689
    %v2691 = vsel %vm2647, %v2413, 0.0
    %v2692 = vadd.f32 %v2690, %v2691
    %v2693 = vsel %vm2647, %v2414, 0.0
    %v2694 = vadd.f32 %v2692, %v2693
    %v2695 = vsel %vm2647, %v2415, 0.0
    %v2696 = vadd.f32 %v2694, %v2695
    %v2697 = vsel %vm2647, %v2416, 0.0
    %v2698 = vadd.f32 %v2696, %v2697
    %v2699 = vsel %vm2647, %v2417, 0.0
    %v2700 = vadd.f32 %v2698, %v2699
    %v2701 = vsel %vm2647, %v2418, 0.0
    %v2702 = vadd.f32 %v2700, %v2701
    %v2703 = vsel %vm2647, %v2419, 0.0
    %v2704 = vadd.f32 %v2702, %v2703
    %v2705 = vsel %vm2647, %v2420, 0.0
    %v2706 = vadd.f32 %v2704, %v2705
    %v2707 = vsel %vm2647, %v2421, 0.0
    %v2708 = vadd.f32 %v2706, %v2707
    %v2709 = vsel %vm2647, %v2422, 0.0
    %v2710 = vadd.f32 %v2708, %v2709
    %v2711 = vsel %vm2647, %v2423, 0.0
    %v2712 = vadd.f32 %v2710, %v2711
    %v2713 = vsel %vm2647, %v2424, 0.0
    %v2714 = vadd.f32 %v2712, %v2713
    %v2715 = vsel %vm2647, %v2425, 0.0
    %v2716 = vadd.f32 %v2714, %v2715
    %v2717 = vsel %vm2647, %v2426, 0.0
    %v2718 = vadd.f32 %v2716, %v2717
    %v2719 = vsel %vm2647, %v2427, 0.0
    %v2720 = vadd.f32 %v2718, %v2719
    %v2721 = vsel %vm2647, %v2428, 0.0
    %v2722 = vadd.f32 %v2720, %v2721
    %v2723 = vsel %vm2647, %v2429, 0.0
    %v2724 = vadd.f32 %v2722, %v2723
    %v2725 = vsel %vm2647, %v2430, 0.0
    %v2726 = vadd.f32 %v2724, %v2725
    %v2727 = vsel %vm2647, %v2431, 0.0
    %v2728 = vadd.f32 %v2726, %v2727
    %v2729 = vsel %vm2647, %v2432, 0.0
    %v2730 = vadd.f32 %v2728, %v2729
    %v2731 = vsel %vm2647, %v2433, 0.0
    %v2732 = vadd.f32 %v2730, %v2731
    %v2733 = vsel %vm2647, %v2434, 0.0
    %v2734 = vadd.f32 %v2732, %v2733
    %v2735 = vsel %vm2647, %v2435, 0.0
    %v2736 = vadd.f32 %v2734, %v2735
    %v2737 = vsel %vm2647, %v2436, 0.0
    %v2738 = vadd.f32 %v2736, %v2737
    %v2739 = vsel %vm2647, %v2437, 0.0
    %v2740 = vadd.f32 %v2738, %v2739
    %v2741 = vsel %vm2647, %v2438, 0.0
    %v2742 = vadd.f32 %v2740, %v2741
    %v2743 = vsel %vm2647, %v2439, 0.0
    %v2744 = vadd.f32 %v2742, %v2743
    %v2745 = vsel %vm2647, %v2440, 0.0
    %v2746 = vadd.f32 %v2744, %v2745
    %v2747 = vsel %vm2647, %v2441, 0.0
    %v2748 = vadd.f32 %v2746, %v2747
    %v2749 = vsel %vm2647, %v2442, 0.0
    %v2750 = vadd.f32 %v2748, %v2749
    %v2751 = vsel %vm2647, %v2443, 0.0
    %v2752 = vadd.f32 %v2750, %v2751
    %v2753 = vsel %vm2647, %v2444, 0.0
    %v2754 = vadd.f32 %v2752, %v2753
    %v2755 = vsel %vm2647, %v2445, 0.0
    %v2756 = vadd.f32 %v2754, %v2755
    %v2757 = vsel %vm2647, %v2446, 0.0
    %v2758 = vadd.f32 %v2756, %v2757
    %v2759 = vsel %vm2647, %v2447, 0.0
    %v2760 = vadd.f32 %v2758, %v2759
    %v2761 = vsel %vm2647, %v2448, 0.0
    %v2762 = vadd.f32 %v2760, %v2761
    %v2763 = vsel %vm2647, %v2449, 0.0
    %v2764 = vadd.f32 %v2762, %v2763
    %v2765 = vsel %vm2647, %v2450, 0.0
    %v2766 = vadd.f32 %v2764, %v2765
    %v2767 = vsel %vm2647, %v2451, 0.0
    %v2768 = vadd.f32 %v2766, %v2767
    %v2769 = vsel %vm2647, %v2452, 0.0
    %v2770 = vadd.f32 %v2768, %v2769
    %v2771 = vsel %vm2647, %v2453, 0.0
    %v2772 = vadd.f32 %v2770, %v2771
    %v2773 = vsel %vm2647, %v2454, 0.0
    %v2774 = vadd.f32 %v2772, %v2773
    %v2775 = vsel %vm2647, %v2455, 0.0
    %v2776 = vadd.f32 %v2774, %v2775
    %v2777 = vsel %vm2647, %v2456, 0.0
    %v2778 = vadd.f32 %v2776, %v2777
    %v2779 = vsel %vm2647, %v2457, 0.0
    %v2780 = vadd.f32 %v2778, %v2779
    %v2781 = vsel %vm2647, %v2458, 0.0
    %v2782 = vadd.f32 %v2780, %v2781
    %v2783 = vsel %vm2647, %v2459, 0.0
    %v2784 = vadd.f32 %v2782, %v2783
    %v2785 = vsel %vm2647, %v2460, 0.0
    %v2786 = vadd.f32 %v2784, %v2785
    %v2787 = vsel %vm2647, %v2461, 0.0
    %v2788 = vadd.f32 %v2786, %v2787
    %v2789 = vsel %vm2647, %v2462, 0.0
    %v2790 = vadd.f32 %v2788, %v2789
    %v2791 = vsel %vm2647, %v2463, 0.0
    %v2792 = vadd.f32 %v2790, %v2791
    %v2793 = vsel %vm2647, %v2464, 0.0
    %v2794 = vadd.f32 %v2792, %v2793
    %v2795 = vsel %vm2647, %v2465, 0.0
    %v2796 = vadd.f32 %v2794, %v2795
    %v2797 = vsel %vm2647, %v2466, 0.0
    %v2798 = vadd.f32 %v2796, %v2797
    %v2799 = vsel %vm2647, %v2467, 0.0
    %v2800 = vadd.f32 %v2798, %v2799
    %v2801 = vsel %vm2647, %v2468, 0.0
    %v2802 = vadd.f32 %v2800, %v2801
    %v2803 = vsel %vm2647, %v2469, 0.0
    %v2804 = vadd.f32 %v2802, %v2803
    %v2805 = vsel %vm2647, %v2470, 0.0
    %v2806 = vadd.f32 %v2804, %v2805
    %v2807 = vsel %vm2647, %v2471, 0.0
    %v2808 = vadd.f32 %v2806, %v2807
    %v2809 = vsel %vm2647, %v2472, 0.0
    %v2810 = vadd.f32 %v2808, %v2809
    %v2811 = vsel %vm2647, %v2473, 0.0
    %v2812 = vadd.f32 %v2810, %v2811
    %v2813 = vsel %vm2647, %v2474, 0.0
    %v2814 = vadd.f32 %v2812, %v2813
    %v2815 = vsel %vm2647, %v2475, 0.0
    %v2816 = vadd.f32 %v2814, %v2815
    %v2817 = vsel %vm2647, %v2476, 0.0
    %v2818 = vadd.f32 %v2816, %v2817
    %v2819 = vsel %vm2647, %v2477, 0.0
    %v2820 = vadd.f32 %v2818, %v2819
    %v2821 = vsel %vm2647, %v2478, 0.0
    %v2822 = vadd.f32 %v2820, %v2821
    %v2823 = vsel %vm2647, %v2479, 0.0
    %v2824 = vadd.f32 %v2822, %v2823
    %v2825 = vsel %vm2647, %v2480, 0.0
    %v2826 = vadd.f32 %v2824, %v2825
    %v2827 = vsel %vm2647, %v2481, 0.0
    %v2828 = vadd.f32 %v2826, %v2827
    %v2829 = vsel %vm2647, %v2482, 0.0
    %v2830 = vadd.f32 %v2828, %v2829
    %v2831 = vsel %vm2647, %v2483, 0.0
    %v2832 = vadd.f32 %v2830, %v2831
    %v2833 = vsel %vm2647, %v2484, 0.0
    %v2834 = vadd.f32 %v2832, %v2833
    %v2835 = vsel %vm2647, %v2485, 0.0
    %v2836 = vadd.f32 %v2834, %v2835
    %v2837 = vsel %vm2647, %v2486, 0.0
    %v2838 = vadd.f32 %v2836, %v2837
    %v2839 = vsel %vm2647, %v2487, 0.0
    %v2840 = vadd.f32 %v2838, %v2839
    %v2841 = vsel %vm2647, %v2488, 0.0
    %v2842 = vadd.f32 %v2840, %v2841
    %v2843 = vsel %vm2647, %v2489, 0.0
    %v2844 = vadd.f32 %v2842, %v2843
    %v2845 = vsel %vm2647, %v2490, 0.0
    %v2846 = vadd.f32 %v2844, %v2845
    %v2847 = vsel %vm2647, %v2491, 0.0
    %v2848 = vadd.f32 %v2846, %v2847
    %v2849 = vsel %vm2647, %v2492, 0.0
    %v2850 = vadd.f32 %v2848, %v2849
    %v2851 = vsel %vm2647, %v2493, 0.0
    %v2852 = vadd.f32 %v2850, %v2851
    %v2853 = vsel %vm2647, %v2494, 0.0
    %v2854 = vadd.f32 %v2852, %v2853
    %v2855 = vsel %vm2647, %v2495, 0.0
    %v2856 = vadd.f32 %v2854, %v2855
    %v2857 = vsel %vm2647, %v2496, 0.0
    %v2858 = vadd.f32 %v2856, %v2857
    %v2859 = vsel %vm2647, %v2497, 0.0
    %v2860 = vadd.f32 %v2858, %v2859
    %v2861 = vsel %vm2647, %v2498, 0.0
    %v2862 = vadd.f32 %v2860, %v2861
    %v2863 = vsel %vm2647, %v2499, 0.0
    %v2864 = vadd.f32 %v2862, %v2863
    %v2865 = vsel %vm2647, %v2500, 0.0
    %v2866 = vadd.f32 %v2864, %v2865
    %v2867 = vsel %vm2647, %v2501, 0.0
    %v2868 = vadd.f32 %v2866, %v2867
    %v2869 = vsel %vm2647, %v2502, 0.0
    %v2870 = vadd.f32 %v2868, %v2869
    %v2871 = vsel %vm2647, %v2503, 0.0
    %v2872 = vadd.f32 %v2870, %v2871
    %v2873 = vsel %vm2647, %v2504, 0.0
    %v2874 = vadd.f32 %v2872, %v2873
    %v2875 = vsel %vm2647, %v2505, 0.0
    %v2876 = vadd.f32 %v2874, %v2875
    %v2877 = vsel %vm2647, %v2506, 0.0
    %v2878 = vadd.f32 %v2876, %v2877
    %v2879 = vsel %vm2647, %v2507, 0.0
    %v2880 = vadd.f32 %v2878, %v2879
    %v2881 = vsel %vm2647, %v2508, 0.0
    %v2882 = vadd.f32 %v2880, %v2881
    %v2883 = vsel %vm2647, %v2509, 0.0
    %v2884 = vadd.f32 %v2882, %v2883
    %v2885 = vsel %vm2647, %v2510, 0.0
    %v2886 = vadd.f32 %v2884, %v2885
    %v2887 = vsel %vm2647, %v2511, 0.0
    %v2888 = vadd.f32 %v2886, %v2887
    %v2889 = vsel %vm2647, %v2512, 0.0
    %v2890 = vadd.f32 %v2888, %v2889
    %v2891 = vsel %vm2647, %v2513, 0.0
    %v2892 = vadd.f32 %v2890, %v2891
    %v2893 = vsel %vm2647, %v2514, 0.0
    %v2894 = vadd.f32 %v2892, %v2893
    %v2895 = vsel %vm2647, %v2515, 0.0
    %v2896 = vadd.f32 %v2894, %v2895
    %v2897 = vsel %vm2647, %v2516, 0.0
    %v2898 = vadd.f32 %v2896, %v2897
    %v2899 = vsel %vm2647, %v2517, 0.0
    %v2900 = vadd.f32 %v2898, %v2899
    %v2901 = vsel %vm2647, %v2518, 0.0
    %v2902 = vadd.f32 %v2900, %v2901
    %v2903 = vsel %vm2647, %v2519, 0.0
    %v2904 = vadd.f32 %v2902, %v2903
    %v2905 = vsel %vm2647, %v2520, 0.0
    %v2906 = vadd.f32 %v2904, %v2905
    %v2907 = vsel %vm2647, %v2521, 0.0
    %v2908 = vadd.f32 %v2906, %v2907
    %v2909 = vsel %vm2647, %v2522, 0.0
    %v2910 = vadd.f32 %v2908, %v2909
    %v2911 = vsel %vm2647, %v2523, 0.0
    %v2912 = vadd.f32 %v2910, %v2911
    %v2913 = vsel %vm2647, %v2524, 0.0
    %v2914 = vadd.f32 %v2912, %v2913
    %v2915 = vsel %vm2647, %v2525, 0.0
    %v2916 = vadd.f32 %v2914, %v2915
    %v2917 = vsel %vm2647, %v2526, 0.0
    %v2918 = vadd.f32 %v2916, %v2917
    %v2919 = vsel %vm2647, %v2527, 0.0
    %v2920 = vadd.f32 %v2918, %v2919
    %v2921 = vsel %vm2647, %v2528, 0.0
    %v2922 = vadd.f32 %v2920, %v2921
    %v2923 = vsel %vm2647, %v2529, 0.0
    %v2924 = vadd.f32 %v2922, %v2923
    %v2925 = vsel %vm2647, %v2530, 0.0
    %v2926 = vadd.f32 %v2924, %v2925
    %v2927 = vsel %vm2647, %v2531, 0.0
    %v2928 = vadd.f32 %v2926, %v2927
    %v2929 = vsel %vm2647, %v2532, 0.0
    %v2930 = vadd.f32 %v2928, %v2929
    %v2931 = vsel %vm2647, %v2533, 0.0
    %v2932 = vadd.f32 %v2930, %v2931
    %v2933 = vsel %vm2647, %v2534, 0.0
    %v2934 = vadd.f32 %v2932, %v2933
    %v2935 = vsel %vm2647, %v2535, 0.0
    %v2936 = vadd.f32 %v2934, %v2935
    %v2937 = vsel %vm2647, %v2536, 0.0
    %v2938 = vadd.f32 %v2936, %v2937
    %v2939 = vsel %vm2647, %v2537, 0.0
    %v2940 = vadd.f32 %v2938, %v2939
    %v2941 = vsel %vm2647, %v2538, 0.0
    %v2942 = vadd.f32 %v2940, %v2941
    %v2943 = vsel %vm2647, %v2539, 0.0
    %v2944 = vadd.f32 %v2942, %v2943
    %v2945 = vsel %vm2647, %v2540, 0.0
    %v2946 = vadd.f32 %v2944, %v2945
    %v2947 = vsel %vm2647, %v2541, 0.0
    %v2948 = vadd.f32 %v2946, %v2947
    %v2949 = vsel %vm2647, %v2542, 0.0
    %v2950 = vadd.f32 %v2948, %v2949
    %v2951 = vsel %vm2647, %v2543, 0.0
    %v2952 = vadd.f32 %v2950, %v2951
    %v2953 = vsel %vm2647, %v2544, 0.0
    %v2954 = vadd.f32 %v2952, %v2953
    %v2955 = vsel %vm2647, %v2545, 0.0
    %v2956 = vadd.f32 %v2954, %v2955
    %v2957 = vsel %vm2647, %v2546, 0.0
    %v2958 = vadd.f32 %v2956, %v2957
    %v2959 = vsel %vm2647, %v2547, 0.0
    %v2960 = vadd.f32 %v2958, %v2959
    %v2961 = vsel %vm2647, %v2548, 0.0
    %v2962 = vadd.f32 %v2960, %v2961
    %v2963 = vsel %vm2647, %v2549, 0.0
    %v2964 = vadd.f32 %v2962, %v2963
    %v2965 = vsel %vm2647, %v2550, 0.0
    %v2966 = vadd.f32 %v2964, %v2965
    %v2967 = vsel %vm2647, %v2551, 0.0
    %v2968 = vadd.f32 %v2966, %v2967
    %v2969 = vsel %vm2647, %v2552, 0.0
    %v2970 = vadd.f32 %v2968, %v2969
    %v2971 = vsel %vm2647, %v2553, 0.0
    %v2972 = vadd.f32 %v2970, %v2971
    %v2973 = vsel %vm2647, %v2554, 0.0
    %v2974 = vadd.f32 %v2972, %v2973
    %v2975 = vsel %vm2647, %v2555, 0.0
    %v2976 = vadd.f32 %v2974, %v2975
    %v2977 = vsel %vm2647, %v2556, 0.0
    %v2978 = vadd.f32 %v2976, %v2977
    %v2979 = vsel %vm2647, %v2557, 0.0
    %v2980 = vadd.f32 %v2978, %v2979
    %v2981 = vsel %vm2647, %v2558, 0.0
    %v2982 = vadd.f32 %v2980, %v2981
    %v2983 = vsel %vm2647, %v2559, 0.0
    %v2984 = vadd.f32 %v2982, %v2983
    %v2985 = vsel %vm2647, %v2560, 0.0
    %v2986 = vadd.f32 %v2984, %v2985
    %v2987 = vsel %vm2647, %v2561, 0.0
    %v2988 = vadd.f32 %v2986, %v2987
    %v2989 = vsel %vm2647, %v2562, 0.0
    %v2990 = vadd.f32 %v2988, %v2989
    %v2991 = vsel %vm2647, %v2563, 0.0
    %v2992 = vadd.f32 %v2990, %v2991
    %v2993 = vsel %vm2647, %v2564, 0.0
    %v2994 = vadd.f32 %v2992, %v2993
    %v2995 = vsel %vm2647, %v2565, 0.0
    %v2996 = vadd.f32 %v2994, %v2995
    %v2997 = vsel %vm2647, %v2566, 0.0
    %v2998 = vadd.f32 %v2996, %v2997
    %v2999 = vsel %vm2647, %v2567, 0.0
    %v3000 = vadd.f32 %v2998, %v2999
    %v3001 = vsel %vm2647, %v2568, 0.0
    %v3002 = vadd.f32 %v3000, %v3001
    %v3003 = vsel %vm2647, %v2569, 0.0
    %v3004 = vadd.f32 %v3002, %v3003
    %v3005 = vsel %vm2647, %v2570, 0.0
    %v3006 = vadd.f32 %v3004, %v3005
    %v3007 = vsel %vm2647, %v2571, 0.0
    %v3008 = vadd.f32 %v3006, %v3007
    %v3009 = vsel %vm2647, %v2572, 0.0
    %v3010 = vadd.f32 %v3008, %v3009
    %v3011 = vsel %vm2647, %v2573, 0.0
    %v3012 = vadd.f32 %v3010, %v3011
    %v3013 = vsel %vm2647, %v2574, 0.0
    %v3014 = vadd.f32 %v3012, %v3013
    %v3015 = vsel %vm2647, %v2575, 0.0
    %v3016 = vadd.f32 %v3014, %v3015
    %v3017 = vsel %vm2647, %v2576, 0.0
    %v3018 = vadd.f32 %v3016, %v3017
    %v3019 = vsel %vm2647, %v2577, 0.0
    %v3020 = vadd.f32 %v3018, %v3019
    %v3021 = vsel %vm2647, %v2578, 0.0
    %v3022 = vadd.f32 %v3020, %v3021
    %v3023 = vsel %vm2647, %v2579, 0.0
    %v3024 = vadd.f32 %v3022, %v3023
    %v3025 = vsel %vm2647, %v2580, 0.0
    %v3026 = vadd.f32 %v3024, %v3025
    %v3027 = vsel %vm2647, %v2581, 0.0
    %v3028 = vadd.f32 %v3026, %v3027
    %v3029 = vsel %vm2647, %v2582, 0.0
    %v3030 = vadd.f32 %v3028, %v3029
    %v3031 = vsel %vm2647, %v2583, 0.0
    %v3032 = vadd.f32 %v3030, %v3031
    %v3033 = vsel %vm2647, %v2584, 0.0
    %v3034 = vadd.f32 %v3032, %v3033
    %v3035 = vsel %vm2647, %v2585, 0.0
    %v3036 = vadd.f32 %v3034, %v3035
    %v3037 = vsel %vm2647, %v2586, 0.0
    %v3038 = vadd.f32 %v3036, %v3037
    %v3039 = vsel %vm2647, %v2587, 0.0
    %v3040 = vadd.f32 %v3038, %v3039
    %v3041 = vsel %vm2647, %v2588, 0.0
    %v3042 = vadd.f32 %v3040, %v3041
    %v3043 = vsel %vm2647, %v2589, 0.0
    %v3044 = vadd.f32 %v3042, %v3043
    %v3045 = vsel %vm2647, %v2590, 0.0
    %v3046 = vadd.f32 %v3044, %v3045
    %v3047 = vsel %vm2647, %v2591, 0.0
    %v3048 = vadd.f32 %v3046, %v3047
    %v3049 = vsel %vm2647, %v2592, 0.0
    %v3050 = vadd.f32 %v3048, %v3049
    %v3051 = vsel %vm2647, %v2593, 0.0
    %v3052 = vadd.f32 %v3050, %v3051
    %v3053 = vsel %vm2647, %v2594, 0.0
    %v3054 = vadd.f32 %v3052, %v3053
    %v3055 = vsel %vm2647, %v2595, 0.0
    %v3056 = vadd.f32 %v3054, %v3055
    %v3057 = vsel %vm2647, %v2596, 0.0
    %v3058 = vadd.f32 %v3056, %v3057
    %v3059 = vsel %vm2647, %v2597, 0.0
    %v3060 = vadd.f32 %v3058, %v3059
    %v3061 = vsel %vm2647, %v2598, 0.0
    %v3062 = vadd.f32 %v3060, %v3061
    %v3063 = vsel %vm2647, %v2599, 0.0
    %v3064 = vadd.f32 %v3062, %v3063
    %v3065 = vsel %vm2647, %v2600, 0.0
    %v3066 = vadd.f32 %v3064, %v3065
    %v3067 = vsel %vm2647, %v2601, 0.0
    %v3068 = vadd.f32 %v3066, %v3067
    %v3069 = vsel %vm2647, %v2602, 0.0
    %v3070 = vadd.f32 %v3068, %v3069
    %v3071 = vsel %vm2647, %v2603, 0.0
    %v3072 = vadd.f32 %v3070, %v3071
    %v3073 = vsel %vm2647, %v2604, 0.0
    %v3074 = vadd.f32 %v3072, %v3073
    %v3075 = vsel %vm2647, %v2605, 0.0
    %v3076 = vadd.f32 %v3074, %v3075
    %v3077 = vsel %vm2647, %v2606, 0.0
    %v3078 = vadd.f32 %v3076, %v3077
    %v3079 = vsel %vm2647, %v2607, 0.0
    %v3080 = vadd.f32 %v3078, %v3079
    %v3081 = vsel %vm2647, %v2608, 0.0
    %v3082 = vadd.f32 %v3080, %v3081
    %v3083 = vsel %vm2647, %v2609, 0.0
    %v3084 = vadd.f32 %v3082, %v3083
    %v3085 = vsel %vm2647, %v2610, 0.0
    %v3086 = vadd.f32 %v3084, %v3085
    %v3087 = vsel %vm2647, %v2611, 0.0
    %v3088 = vadd.f32 %v3086, %v3087
    %v3089 = vsel %vm2647, %v2612, 0.0
    %v3090 = vadd.f32 %v3088, %v3089
    %v3091 = vsel %vm2647, %v2613, 0.0
    %v3092 = vadd.f32 %v3090, %v3091
    %v3093 = vsel %vm2647, %v2614, 0.0
    %v3094 = vadd.f32 %v3092, %v3093
    %v3095 = vsel %vm2647, %v2615, 0.0
    %v3096 = vadd.f32 %v3094, %v3095
    %v3097 = vsel %vm2647, %v2616, 0.0
    %v3098 = vadd.f32 %v3096, %v3097
    %v3099 = vsel %vm2647, %v2617, 0.0
    %v3100 = vadd.f32 %v3098, %v3099
    %v3101 = vsel %vm2647, %v2618, 0.0
    %v3102 = vadd.f32 %v3100, %v3101
    %v3103 = vsel %vm2647, %v2619, 0.0
    %v3104 = vadd.f32 %v3102, %v3103
    %v3105 = vsel %vm2647, %v2620, 0.0
    %v3106 = vadd.f32 %v3104, %v3105
    %v3107 = vsel %vm2647, %v2621, 0.0
    %v3108 = vadd.f32 %v3106, %v3107
    %v3109 = vsel %vm2647, %v2622, 0.0
    %v3110 = vadd.f32 %v3108, %v3109
    %v3111 = vsel %vm2647, %v2623, 0.0
    %v3112 = vadd.f32 %v3110, %v3111
    %v3113 = vsel %vm2647, %v2624, 0.0
    %v3114 = vadd.f32 %v3112, %v3113
    %v3115 = vsel %vm2647, %v2625, 0.0
    %v3116 = vadd.f32 %v3114, %v3115
    %v3117 = vsel %vm2647, %v2626, 0.0
    %v3118 = vadd.f32 %v3116, %v3117
    %v3119 = vsel %vm2647, %v2627, 0.0
    %v3120 = vadd.f32 %v3118, %v3119
    %v3121 = vsel %vm2647, %v2628, 0.0
    %v3122 = vadd.f32 %v3120, %v3121
    %v3123 = vsel %vm2647, %v2629, 0.0
    %v3124 = vadd.f32 %v3122, %v3123
    %v3125 = vsel %vm2647, %v2630, 0.0
    %v3126 = vadd.f32 %v3124, %v3125
    %v3127 = vsel %vm2647, %v2631, 0.0
    %v3128 = vadd.f32 %v3126, %v3127
    %v3129 = vsel %vm2647, %v2632, 0.0
    %v3130 = vadd.f32 %v3128, %v3129
    %v3131 = vsel %vm2647, %v2633, 0.0
    %v3132 = vadd.f32 %v3130, %v3131
    %v3133 = vsel %vm2647, %v2634, 0.0
    %v3134 = vadd.f32 %v3132, %v3133
    %v3135 = vsel %vm2647, %v2635, 0.0
    %v3136 = vadd.f32 %v3134, %v3135
    %v3137 = vsel %vm2647, %v2636, 0.0
    %v3138 = vadd.f32 %v3136, %v3137
    %v3139 = vsel %vm2647, %v2637, 0.0
    %v3140 = vadd.f32 %v3138, %v3139
    %v3141 = vsel %vm2647, %v2638, 0.0
    %v3142 = vadd.f32 %v3140, %v3141
    %v3143 = vsel %vm2647, %v2639, 0.0
    %v3144 = vadd.f32 %v3142, %v3143
    %v3145 = vsel %vm2647, %v2640, 0.0
    %v3146 = vadd.f32 %v3144, %v3145
    %v3147 = vsel %vm2647, %v2641, 0.0
    %v3148 = vadd.f32 %v3146, %v3147
    %v3149 = vsel %vm2647, %v2642, 0.0
    %v3150 = vadd.f32 %v3148, %v3149
    %v3151 = vsel %vm2647, %v2643, 0.0
    %v3152 = vadd.f32 %v3150, %v3151
    %v3153 = vsel %vm2647, %v2644, 0.0
    %v3154 = vadd.f32 %v3152, %v3153
    %v3155 = vsel %vm2647, %v2645, 0.0
    %v3156 = vadd.f32 %v3154, %v3155
    %v3157 = vsel %vm2647, %v2646, 0.0
    %v3158 = vadd.f32 %v3156, %v3157
    %v3159 = vrot.slane %v3158, 4
    %v3160 = vadd.f32 %v3158, %v3159
    %v3161 = vrot.slane %v3160, 2
    %v3162 = vadd.f32 %v3160, %v3161
    %v3163 = vrot.slane %v3162, 1
    %v3164 = vadd.f32 %v3162, %v3163
    %v3165 = vadd.f32 %v2390, %v3164
    %vm3166 = vcmask 253952
    %3167 = vst.msk [vmem:[#allocation2] sm:$0x1] %vm3166, %v3165
    %v3168 = vld [vmem:[%s2] sm:$0xff]
    %v3169 = vld [vmem:[%s2 + $0x8] sm:$0xff]
    %v3170 = vld [vmem:[%s2 + $0x10] sm:$0xff]
    %v3171 = vld [vmem:[%s2 + $0x18] sm:$0xff]
    %v3172 = vld [vmem:[%s2 + $0x20] sm:$0xff]
    %v3173 = vld [vmem:[%s2 + $0x28] sm:$0xff]
    %v3174 = vld [vmem:[%s2 + $0x30] sm:$0xff]
    %v3175 = vld [vmem:[%s2 + $0x38] sm:$0xff]
    %v3176 = vld [vmem:[%s2 + $0x40] sm:$0xff]
    %v3177 = vld [vmem:[%s2 + $0x48] sm:$0xff]
    %v3178 = vld [vmem:[%s2 + $0x50] sm:$0xff]
    %v3179 = vld [vmem:[%s2 + $0x58] sm:$0xff]
    %v3180 = vld [vmem:[%s2 + $0x60] sm:$0xff]
    %v3181 = vld [vmem:[%s2 + $0x68] sm:$0xff]
    %v3182 = vld [vmem:[%s2 + $0x70] sm:$0xff]
    %v3183 = vld [vmem:[%s2 + $0x78] sm:$0xff]
    %v3184 = vld [vmem:[%s3] sm:$0xff]
    %v3185 = vld [vmem:[%s3 + $0x8] sm:$0xff]
    %v3186 = vld [vmem:[%s3 + $0x10] sm:$0xff]
    %v3187 = vld [vmem:[%s3 + $0x18] sm:$0xff]
    %v3188 = vld [vmem:[%s3 + $0x20] sm:$0xff]
    %v3189 = vld [vmem:[%s3 + $0x28] sm:$0xff]
    %v3190 = vld [vmem:[%s3 + $0x30] sm:$0xff]
    %v3191 = vld [vmem:[%s3 + $0x38] sm:$0xff]
    %v3192 = vld [vmem:[%s3 + $0x40] sm:$0xff]
    %v3193 = vld [vmem:[%s3 + $0x48] sm:$0xff]
    %v3194 = vld [vmem:[%s3 + $0x50] sm:$0xff]
    %v3195 = vld [vmem:[%s3 + $0x58] sm:$0xff]
    %v3196 = vld [vmem:[%s3 + $0x60] sm:$0xff]
    %v3197 = vld [vmem:[%s3 + $0x68] sm:$0xff]
    %v3198 = vld [vmem:[%s3 + $0x70] sm:$0xff]
    %v3199 = vld [vmem:[%s3 + $0x78] sm:$0xff]
    %v3200 = vsel %vm838, 1, 0
    %v3201 = vsel %vm839, 1, 0
    %v3202 = vsel %vm840, 1, 0
    %v3203 = vsel %vm841, 1, 0
    %v3204 = vsel %vm842, 1, 0
    %v3205 = vsel %vm843, 1, 0
    %v3206 = vsel %vm844, 1, 0
    %v3207 = vsel %vm845, 1, 0
    %v3208 = vsel %vm846, 1, 0
    %v3209 = vsel %vm847, 1, 0
    %v3210 = vsel %vm848, 1, 0
    %v3211 = vsel %vm849, 1, 0
    %v3212 = vsel %vm850, 1, 0
    %v3213 = vsel %vm851, 1, 0
    %v3214 = vsel %vm852, 1, 0
    %v3215 = vsel %vm853, 1, 0
    %vm3216 = vcmp.eq.s32.totalorder %v3200, 1
    %vm3217 = vcmp.eq.s32.totalorder %v3201, 1
    %vm3218 = vcmp.eq.s32.totalorder %v3202, 1
    %vm3219 = vcmp.eq.s32.totalorder %v3203, 1
    %vm3220 = vcmp.eq.s32.totalorder %v3204, 1
    %vm3221 = vcmp.eq.s32.totalorder %v3205, 1
    %vm3222 = vcmp.eq.s32.totalorder %v3206, 1
    %vm3223 = vcmp.eq.s32.totalorder %v3207, 1
    %vm3224 = vcmp.eq.s32.totalorder %v3208, 1
    %vm3225 = vcmp.eq.s32.totalorder %v3209, 1
    %vm3226 = vcmp.eq.s32.totalorder %v3210, 1
    %vm3227 = vcmp.eq.s32.totalorder %v3211, 1
    %vm3228 = vcmp.eq.s32.totalorder %v3212, 1
    %vm3229 = vcmp.eq.s32.totalorder %v3213, 1
    %vm3230 = vcmp.eq.s32.totalorder %v3214, 1
    %vm3231 = vcmp.eq.s32.totalorder %v3215, 1
    %v3232 = vsel %vm3216, %v3184, 0.0
    %v3233 = vsel %vm3217, %v3185, 0.0
    %v3234 = vsel %vm3218, %v3186, 0.0
    %v3235 = vsel %vm3219, %v3187, 0.0
    %v3236 = vsel %vm3220, %v3188, 0.0
    %v3237 = vsel %vm3221, %v3189, 0.0
    %v3238 = vsel %vm3222, %v3190, 0.0
    %v3239 = vsel %vm3223, %v3191, 0.0
    %v3240 = vsel %vm3224, %v3192, 0.0
    %v3241 = vsel %vm3225, %v3193, 0.0
    %v3242 = vsel %vm3226, %v3194, 0.0
    %v3243 = vsel %vm3227, %v3195, 0.0
    %v3244 = vsel %vm3228, %v3196, 0.0
    %v3245 = vsel %vm3229, %v3197, 0.0
    %v3246 = vsel %vm3230, %v3198, 0.0
    %v3247 = vsel %vm3231, %v3199, 0.0
    %v3248 = vsel %vm3216, %v3168, 1.0
    %v3249 = vsel %vm3217, %v3169, 1.0
    %v3250 = vsel %vm3218, %v3170, 1.0
    %v3251 = vsel %vm3219, %v3171, 1.0
    %v3252 = vsel %vm3220, %v3172, 1.0
    %v3253 = vsel %vm3221, %v3173, 1.0
    %v3254 = vsel %vm3222, %v3174, 1.0
    %v3255 = vsel %vm3223, %v3175, 1.0
    %v3256 = vsel %vm3224, %v3176, 1.0
    %v3257 = vsel %vm3225, %v3177, 1.0
    %v3258 = vsel %vm3226, %v3178, 1.0
    %v3259 = vsel %vm3227, %v3179, 1.0
    %v3260 = vsel %vm3228, %v3180, 1.0
    %v3261 = vsel %vm3229, %v3181, 1.0
    %v3262 = vsel %vm3230, %v3182, 1.0
    %v3263 = vsel %vm3231, %v3183, 1.0
    %v3264 = vadd.f32 %v3248, 1e-08
    %v3265 = vadd.f32 %v3249, 1e-08
    %v3266 = vadd.f32 %v3250, 1e-08
    %v3267 = vadd.f32 %v3251, 1e-08
    %v3268 = vadd.f32 %v3252, 1e-08
    %v3269 = vadd.f32 %v3253, 1e-08
    %v3270 = vadd.f32 %v3254, 1e-08
    %v3271 = vadd.f32 %v3255, 1e-08
    %v3272 = vadd.f32 %v3256, 1e-08
    %v3273 = vadd.f32 %v3257, 1e-08
    %v3274 = vadd.f32 %v3258, 1e-08
    %v3275 = vadd.f32 %v3259, 1e-08
    %v3276 = vadd.f32 %v3260, 1e-08
    %v3277 = vadd.f32 %v3261, 1e-08
    %v3278 = vadd.f32 %v3262, 1e-08
    %v3279 = vadd.f32 %v3263, 1e-08
    %v3280 = vlog2.pop %v3264
    %v3281 = vmul.f32 %v3280, 0.6931472
    %v3282 = vlog2.pop %v3265
    %v3283 = vmul.f32 %v3282, 0.6931472
    %v3284 = vlog2.pop %v3266
    %v3285 = vmul.f32 %v3284, 0.6931472
    %v3286 = vlog2.pop %v3267
    %v3287 = vmul.f32 %v3286, 0.6931472
    %v3288 = vlog2.pop %v3268
    %v3289 = vmul.f32 %v3288, 0.6931472
    %v3290 = vlog2.pop %v3269
    %v3291 = vmul.f32 %v3290, 0.6931472
    %v3292 = vlog2.pop %v3270
    %v3293 = vmul.f32 %v3292, 0.6931472
    %v3294 = vlog2.pop %v3271
    %v3295 = vmul.f32 %v3294, 0.6931472
    %v3296 = vlog2.pop %v3272
    %v3297 = vmul.f32 %v3296, 0.6931472
    %v3298 = vlog2.pop %v3273
    %v3299 = vmul.f32 %v3298, 0.6931472
    %v3300 = vlog2.pop %v3274
    %v3301 = vmul.f32 %v3300, 0.6931472
    %v3302 = vlog2.pop %v3275
    %v3303 = vmul.f32 %v3302, 0.6931472
    %v3304 = vlog2.pop %v3276
    %v3305 = vmul.f32 %v3304, 0.6931472
    %v3306 = vlog2.pop %v3277
    %v3307 = vmul.f32 %v3306, 0.6931472
    %v3308 = vlog2.pop %v3278
    %v3309 = vmul.f32 %v3308, 0.6931472
    %v3310 = vlog2.pop %v3279
    %v3311 = vmul.f32 %v3310, 0.6931472
    %vm3312 = vcmp.gt.f32.partialorder %v3232, 0.0
    %vm3313 = vcmp.gt.f32.partialorder %v3233, 0.0
    %vm3314 = vcmp.gt.f32.partialorder %v3234, 0.0
    %vm3315 = vcmp.gt.f32.partialorder %v3235, 0.0
    %vm3316 = vcmp.gt.f32.partialorder %v3236, 0.0
    %vm3317 = vcmp.gt.f32.partialorder %v3237, 0.0
    %vm3318 = vcmp.gt.f32.partialorder %v3238, 0.0
    %vm3319 = vcmp.gt.f32.partialorder %v3239, 0.0
    %vm3320 = vcmp.gt.f32.partialorder %v3240, 0.0
    %vm3321 = vcmp.gt.f32.partialorder %v3241, 0.0
    %vm3322 = vcmp.gt.f32.partialorder %v3242, 0.0
    %vm3323 = vcmp.gt.f32.partialorder %v3243, 0.0
    %vm3324 = vcmp.gt.f32.partialorder %v3244, 0.0
    %vm3325 = vcmp.gt.f32.partialorder %v3245, 0.0
    %vm3326 = vcmp.gt.f32.partialorder %v3246, 0.0
    %vm3327 = vcmp.gt.f32.partialorder %v3247, 0.0
    %v3328 = vsel %vm3312, %v3232, 1.0
    %v3329 = vsel %vm3313, %v3233, 1.0
    %v3330 = vsel %vm3314, %v3234, 1.0
    %v3331 = vsel %vm3315, %v3235, 1.0
    %v3332 = vsel %vm3316, %v3236, 1.0
    %v3333 = vsel %vm3317, %v3237, 1.0
    %v3334 = vsel %vm3318, %v3238, 1.0
    %v3335 = vsel %vm3319, %v3239, 1.0
    %v3336 = vsel %vm3320, %v3240, 1.0
    %v3337 = vsel %vm3321, %v3241, 1.0
    %v3338 = vsel %vm3322, %v3242, 1.0
    %v3339 = vsel %vm3323, %v3243, 1.0
    %v3340 = vsel %vm3324, %v3244, 1.0
    %v3341 = vsel %vm3325, %v3245, 1.0
    %v3342 = vsel %vm3326, %v3246, 1.0
    %v3343 = vsel %vm3327, %v3247, 1.0
    %v3344 = vlog2.pop %v3328
    %v3345 = vmul.f32 %v3344, 0.6931472
    %v3346 = vlog2.pop %v3329
    %v3347 = vmul.f32 %v3346, 0.6931472
    %v3348 = vlog2.pop %v3330
    %v3349 = vmul.f32 %v3348, 0.6931472
    %v3350 = vlog2.pop %v3331
    %v3351 = vmul.f32 %v3350, 0.6931472
    %v3352 = vlog2.pop %v3332
    %v3353 = vmul.f32 %v3352, 0.6931472
    %v3354 = vlog2.pop %v3333
    %v3355 = vmul.f32 %v3354, 0.6931472
    %v3356 = vlog2.pop %v3334
    %v3357 = vmul.f32 %v3356, 0.6931472
    %v3358 = vlog2.pop %v3335
    %v3359 = vmul.f32 %v3358, 0.6931472
    %v3360 = vlog2.pop %v3336
    %v3361 = vmul.f32 %v3360, 0.6931472
    %v3362 = vlog2.pop %v3337
    %v3363 = vmul.f32 %v3362, 0.6931472
    %v3364 = vlog2.pop %v3338
    %v3365 = vmul.f32 %v3364, 0.6931472
    %v3366 = vlog2.pop %v3339
    %v3367 = vmul.f32 %v3366, 0.6931472
    %v3368 = vlog2.pop %v3340
    %v3369 = vmul.f32 %v3368, 0.6931472
    %v3370 = vlog2.pop %v3341
    %v3371 = vmul.f32 %v3370, 0.6931472
    %v3372 = vlog2.pop %v3342
    %v3373 = vmul.f32 %v3372, 0.6931472
    %v3374 = vlog2.pop %v3343
    %v3375 = vmul.f32 %v3374, 0.6931472
    %v3376 = vld [vmem:[#allocation3] sm:$0xff]
    %v3377 = vld [vmem:[#allocation3 + $0x8] sm:$0xff]
    %v3378 = vsub.f32 %v3345, %v3281
    %v3379 = vsub.f32 %v3347, %v3283
    %v3380 = vsub.f32 %v3349, %v3285
    %v3381 = vsub.f32 %v3351, %v3287
    %v3382 = vsub.f32 %v3353, %v3289
    %v3383 = vsub.f32 %v3355, %v3291
    %v3384 = vsub.f32 %v3357, %v3293
    %v3385 = vsub.f32 %v3359, %v3295
    %v3386 = vsub.f32 %v3361, %v3297
    %v3387 = vsub.f32 %v3363, %v3299
    %v3388 = vsub.f32 %v3365, %v3301
    %v3389 = vsub.f32 %v3367, %v3303
    %v3390 = vsub.f32 %v3369, %v3305
    %v3391 = vsub.f32 %v3371, %v3307
    %v3392 = vsub.f32 %v3373, %v3309
    %v3393 = vsub.f32 %v3375, %v3311
    %v3394 = vmul.f32 %v3232, %v3378
    %v3395 = vmul.f32 %v3233, %v3379
    %v3396 = vmul.f32 %v3234, %v3380
    %v3397 = vmul.f32 %v3235, %v3381
    %v3398 = vmul.f32 %v3236, %v3382
    %v3399 = vmul.f32 %v3237, %v3383
    %v3400 = vmul.f32 %v3238, %v3384
    %v3401 = vmul.f32 %v3239, %v3385
    %v3402 = vmul.f32 %v3240, %v3386
    %v3403 = vmul.f32 %v3241, %v3387
    %v3404 = vmul.f32 %v3242, %v3388
    %v3405 = vmul.f32 %v3243, %v3389
    %v3406 = vmul.f32 %v3244, %v3390
    %v3407 = vmul.f32 %v3245, %v3391
    %v3408 = vmul.f32 %v3246, %v3392
    %v3409 = vmul.f32 %v3247, %v3393
    %v3410 = vrot.slane %v3394, 4
    %v3411 = vadd.f32 %v3394, %v3410
    %v3412 = vrot.slane %v3411, 2
    %v3413 = vadd.f32 %v3411, %v3412
    %v3414 = vrot.slane %v3413, 1
    %v3415 = vadd.f32 %v3413, %v3414
    %v3416 = vrot.slane %v3395, 4
    %v3417 = vadd.f32 %v3395, %v3416
    %v3418 = vrot.slane %v3417, 2
    %v3419 = vadd.f32 %v3417, %v3418
    %v3420 = vrot.slane %v3419, 1
    %v3421 = vadd.f32 %v3419, %v3420
    %v3422 = vrot.slane %v3396, 4
    %v3423 = vadd.f32 %v3396, %v3422
    %v3424 = vrot.slane %v3423, 2
    %v3425 = vadd.f32 %v3423, %v3424
    %v3426 = vrot.slane %v3425, 1
    %v3427 = vadd.f32 %v3425, %v3426
    %v3428 = vrot.slane %v3397, 4
    %v3429 = vadd.f32 %v3397, %v3428
    %v3430 = vrot.slane %v3429, 2
    %v3431 = vadd.f32 %v3429, %v3430
    %v3432 = vrot.slane %v3431, 1
    %v3433 = vadd.f32 %v3431, %v3432
    %v3434 = vrot.slane %v3398, 4
    %v3435 = vadd.f32 %v3398, %v3434
    %v3436 = vrot.slane %v3435, 2
    %v3437 = vadd.f32 %v3435, %v3436
    %v3438 = vrot.slane %v3437, 1
    %v3439 = vadd.f32 %v3437, %v3438
    %v3440 = vrot.slane %v3399, 4
    %v3441 = vadd.f32 %v3399, %v3440
    %v3442 = vrot.slane %v3441, 2
    %v3443 = vadd.f32 %v3441, %v3442
    %v3444 = vrot.slane %v3443, 1
    %v3445 = vadd.f32 %v3443, %v3444
    %v3446 = vrot.slane %v3400, 4
    %v3447 = vadd.f32 %v3400, %v3446
    %v3448 = vrot.slane %v3447, 2
    %v3449 = vadd.f32 %v3447, %v3448
    %v3450 = vrot.slane %v3449, 1
    %v3451 = vadd.f32 %v3449, %v3450
    %v3452 = vrot.slane %v3401, 4
    %v3453 = vadd.f32 %v3401, %v3452
    %v3454 = vrot.slane %v3453, 2
    %v3455 = vadd.f32 %v3453, %v3454
    %v3456 = vrot.slane %v3455, 1
    %v3457 = vadd.f32 %v3455, %v3456
    %v3458 = vrot.slane %v3402, 4
    %v3459 = vadd.f32 %v3402, %v3458
    %v3460 = vrot.slane %v3459, 2
    %v3461 = vadd.f32 %v3459, %v3460
    %v3462 = vrot.slane %v3461, 1
    %v3463 = vadd.f32 %v3461, %v3462
    %v3464 = vrot.slane %v3403, 4
    %v3465 = vadd.f32 %v3403, %v3464
    %v3466 = vrot.slane %v3465, 2
    %v3467 = vadd.f32 %v3465, %v3466
    %v3468 = vrot.slane %v3467, 1
    %v3469 = vadd.f32 %v3467, %v3468
    %v3470 = vrot.slane %v3404, 4
    %v3471 = vadd.f32 %v3404, %v3470
    %v3472 = vrot.slane %v3471, 2
    %v3473 = vadd.f32 %v3471, %v3472
    %v3474 = vrot.slane %v3473, 1
    %v3475 = vadd.f32 %v3473, %v3474
    %v3476 = vrot.slane %v3405, 4
    %v3477 = vadd.f32 %v3405, %v3476
    %v3478 = vrot.slane %v3477, 2
    %v3479 = vadd.f32 %v3477, %v3478
    %v3480 = vrot.slane %v3479, 1
    %v3481 = vadd.f32 %v3479, %v3480
    %v3482 = vrot.slane %v3406, 4
    %v3483 = vadd.f32 %v3406, %v3482
    %v3484 = vrot.slane %v3483, 2
    %v3485 = vadd.f32 %v3483, %v3484
    %v3486 = vrot.slane %v3485, 1
    %v3487 = vadd.f32 %v3485, %v3486
    %v3488 = vrot.slane %v3407, 4
    %v3489 = vadd.f32 %v3407, %v3488
    %v3490 = vrot.slane %v3489, 2
    %v3491 = vadd.f32 %v3489, %v3490
    %v3492 = vrot.slane %v3491, 1
    %v3493 = vadd.f32 %v3491, %v3492
    %v3494 = vrot.slane %v3408, 4
    %v3495 = vadd.f32 %v3408, %v3494
    %v3496 = vrot.slane %v3495, 2
    %v3497 = vadd.f32 %v3495, %v3496
    %v3498 = vrot.slane %v3497, 1
    %v3499 = vadd.f32 %v3497, %v3498
    %v3500 = vrot.slane %v3409, 4
    %v3501 = vadd.f32 %v3409, %v3500
    %v3502 = vrot.slane %v3501, 2
    %v3503 = vadd.f32 %v3501, %v3502
    %v3504 = vrot.slane %v3503, 1
    %v3505 = vadd.f32 %v3503, %v3504
    %v3522 = vcombine.low %v3415, %v3421
    %v3523 = vcombine.low %v3427, %v3433
    %v3524 = vcombine.low %v3439, %v3445
    %v3525 = vcombine.low %v3451, %v3457
    %v3527 = vunpack.c.l.s4 1966171168
    %v3528 = vunpack.c.0.s8 %v3527
    %v3529 = vlaneseq
    %v3530 = vshrl.u32 %v3529, 7
    %v3531 = vsub.s32 %v3528, %v3530
    %v3532 = vrot.slane %v3522, %v3531
    %v3534 = vunpack.c.l.s4 1966171168
    %v3535 = vunpack.c.0.s8 %v3534
    %v3536 = vlaneseq
    %v3537 = vshrl.u32 %v3536, 7
    %v3538 = vsub.s32 %v3535, %v3537
    %v3539 = vrot.slane %v3523, %v3538
    %v3541 = vunpack.c.l.s4 1966171168
    %v3542 = vunpack.c.0.s8 %v3541
    %v3543 = vlaneseq
    %v3544 = vshrl.u32 %v3543, 7
    %v3545 = vsub.s32 %v3542, %v3544
    %v3546 = vrot.slane %v3524, %v3545
    %v3548 = vunpack.c.l.s4 1966171168
    %v3549 = vunpack.c.0.s8 %v3548
    %v3550 = vlaneseq
    %v3551 = vshrl.u32 %v3550, 7
    %v3552 = vsub.s32 %v3549, %v3551
    %v3553 = vrot.slane %v3525, %v3552
    %v3554 = vcombine.low %v3532, %v3539
    %v3555 = vcombine.low %v3546, %v3553
    %v3557 = vunpack.c.l.s4 1966171168
    %v3558 = vunpack.c.0.s8 %v3557
    %v3559 = vlaneseq
    %v3560 = vshrl.u32 %v3559, 7
    %v3561 = vsub.s32 %v3558, %v3560
    %v3562 = vrot.slane %v3554, %v3561
    %v3564 = vunpack.c.l.s4 1966171168
    %v3565 = vunpack.c.0.s8 %v3564
    %v3566 = vlaneseq
    %v3567 = vshrl.u32 %v3566, 7
    %v3568 = vsub.s32 %v3565, %v3567
    %v3569 = vrot.slane %v3555, %v3568
    %v3570 = vcombine.low %v3562, %v3569
    %v3571 = vcombine.low %v3463, %v3469
    %v3572 = vcombine.low %v3475, %v3481
    %v3573 = vcombine.low %v3487, %v3493
    %v3574 = vcombine.low %v3499, %v3505
    %v3576 = vunpack.c.l.s4 1966171168
    %v3577 = vunpack.c.0.s8 %v3576
    %v3578 = vlaneseq
    %v3579 = vshrl.u32 %v3578, 7
    %v3580 = vsub.s32 %v3577, %v3579
    %v3581 = vrot.slane %v3571, %v3580
    %v3583 = vunpack.c.l.s4 1966171168
    %v3584 = vunpack.c.0.s8 %v3583
    %v3585 = vlaneseq
    %v3586 = vshrl.u32 %v3585, 7
    %v3587 = vsub.s32 %v3584, %v3586
    %v3588 = vrot.slane %v3572, %v3587
    %v3590 = vunpack.c.l.s4 1966171168
    %v3591 = vunpack.c.0.s8 %v3590
    %v3592 = vlaneseq
    %v3593 = vshrl.u32 %v3592, 7
    %v3594 = vsub.s32 %v3591, %v3593
    %v3595 = vrot.slane %v3573, %v3594
    %v3597 = vunpack.c.l.s4 1966171168
    %v3598 = vunpack.c.0.s8 %v3597
    %v3599 = vlaneseq
    %v3600 = vshrl.u32 %v3599, 7
    %v3601 = vsub.s32 %v3598, %v3600
    %v3602 = vrot.slane %v3574, %v3601
    %v3603 = vcombine.low %v3581, %v3588
    %v3604 = vcombine.low %v3595, %v3602
    %v3606 = vunpack.c.l.s4 1966171168
    %v3607 = vunpack.c.0.s8 %v3606
    %v3608 = vlaneseq
    %v3609 = vshrl.u32 %v3608, 7
    %v3610 = vsub.s32 %v3607, %v3609
    %v3611 = vrot.slane %v3603, %v3610
    %v3613 = vunpack.c.l.s4 1966171168
    %v3614 = vunpack.c.0.s8 %v3613
    %v3615 = vlaneseq
    %v3616 = vshrl.u32 %v3615, 7
    %v3617 = vsub.s32 %v3614, %v3616
    %v3618 = vrot.slane %v3604, %v3617
    %v3619 = vcombine.low %v3611, %v3618
    %v3622 = vadd.f32 %v3376, %v3570
    %v3623 = vadd.f32 %v3377, %v3619
    %3624 = vst [vmem:[#allocation3] sm:$0xff] %v3622
    %3625 = vst [vmem:[#allocation3 + $0x8] sm:$0xff] %v3623
    %v3626 = vsel %vm3216, %v3168, 0.0
    %v3627 = vsel %vm3217, %v3169, 0.0
    %v3628 = vsel %vm3218, %v3170, 0.0
    %v3629 = vsel %vm3219, %v3171, 0.0
    %v3630 = vsel %vm3220, %v3172, 0.0
    %v3631 = vsel %vm3221, %v3173, 0.0
    %v3632 = vsel %vm3222, %v3174, 0.0
    %v3633 = vsel %vm3223, %v3175, 0.0
    %v3634 = vsel %vm3224, %v3176, 0.0
    %v3635 = vsel %vm3225, %v3177, 0.0
    %v3636 = vsel %vm3226, %v3178, 0.0
    %v3637 = vsel %vm3227, %v3179, 0.0
    %v3638 = vsel %vm3228, %v3180, 0.0
    %v3639 = vsel %vm3229, %v3181, 0.0
    %v3640 = vsel %vm3230, %v3182, 0.0
    %v3641 = vsel %vm3231, %v3183, 0.0
    %v3642 = vld [vmem:[%s4] sm:$0xff]
    %v3643 = vld [vmem:[%s4 + $0x8] sm:$0xff]
    %v3644 = vld [vmem:[%s4 + $0x10] sm:$0xff]
    %v3645 = vld [vmem:[%s4 + $0x18] sm:$0xff]
    %v3646 = vld [vmem:[%s4 + $0x20] sm:$0xff]
    %v3647 = vld [vmem:[%s4 + $0x28] sm:$0xff]
    %v3648 = vld [vmem:[%s4 + $0x30] sm:$0xff]
    %v3649 = vld [vmem:[%s4 + $0x38] sm:$0xff]
    %v3650 = vld [vmem:[%s4 + $0x40] sm:$0xff]
    %v3651 = vld [vmem:[%s4 + $0x48] sm:$0xff]
    %v3652 = vld [vmem:[%s4 + $0x50] sm:$0xff]
    %v3653 = vld [vmem:[%s4 + $0x58] sm:$0xff]
    %v3654 = vld [vmem:[%s4 + $0x60] sm:$0xff]
    %v3655 = vld [vmem:[%s4 + $0x68] sm:$0xff]
    %v3656 = vld [vmem:[%s4 + $0x70] sm:$0xff]
    %v3657 = vld [vmem:[%s4 + $0x78] sm:$0xff]
    %v3658 = vld [vmem:[%s4 + $0x80] sm:$0xff]
    %v3659 = vld [vmem:[%s4 + $0x88] sm:$0xff]
    %v3660 = vld [vmem:[%s4 + $0x90] sm:$0xff]
    %v3661 = vld [vmem:[%s4 + $0x98] sm:$0xff]
    %v3662 = vld [vmem:[%s4 + $0xa0] sm:$0xff]
    %v3663 = vld [vmem:[%s4 + $0xa8] sm:$0xff]
    %v3664 = vld [vmem:[%s4 + $0xb0] sm:$0xff]
    %v3665 = vld [vmem:[%s4 + $0xb8] sm:$0xff]
    %v3666 = vld [vmem:[%s4 + $0xc0] sm:$0xff]
    %v3667 = vld [vmem:[%s4 + $0xc8] sm:$0xff]
    %v3668 = vld [vmem:[%s4 + $0xd0] sm:$0xff]
    %v3669 = vld [vmem:[%s4 + $0xd8] sm:$0xff]
    %v3670 = vld [vmem:[%s4 + $0xe0] sm:$0xff]
    %v3671 = vld [vmem:[%s4 + $0xe8] sm:$0xff]
    %v3672 = vld [vmem:[%s4 + $0xf0] sm:$0xff]
    %v3673 = vld [vmem:[%s4 + $0xf8] sm:$0xff]
    %v3674 = vld [vmem:[%s4 + $0x100] sm:$0xff]
    %v3675 = vld [vmem:[%s4 + $0x108] sm:$0xff]
    %v3676 = vld [vmem:[%s4 + $0x110] sm:$0xff]
    %v3677 = vld [vmem:[%s4 + $0x118] sm:$0xff]
    %v3678 = vld [vmem:[%s4 + $0x120] sm:$0xff]
    %v3679 = vld [vmem:[%s4 + $0x128] sm:$0xff]
    %v3680 = vld [vmem:[%s4 + $0x130] sm:$0xff]
    %v3681 = vld [vmem:[%s4 + $0x138] sm:$0xff]
    %v3682 = vld [vmem:[%s4 + $0x140] sm:$0xff]
    %v3683 = vld [vmem:[%s4 + $0x148] sm:$0xff]
    %v3684 = vld [vmem:[%s4 + $0x150] sm:$0xff]
    %v3685 = vld [vmem:[%s4 + $0x158] sm:$0xff]
    %v3686 = vld [vmem:[%s4 + $0x160] sm:$0xff]
    %v3687 = vld [vmem:[%s4 + $0x168] sm:$0xff]
    %v3688 = vld [vmem:[%s4 + $0x170] sm:$0xff]
    %v3689 = vld [vmem:[%s4 + $0x178] sm:$0xff]
    %v3690 = vld [vmem:[%s4 + $0x180] sm:$0xff]
    %v3691 = vld [vmem:[%s4 + $0x188] sm:$0xff]
    %v3692 = vld [vmem:[%s4 + $0x190] sm:$0xff]
    %v3693 = vld [vmem:[%s4 + $0x198] sm:$0xff]
    %v3694 = vld [vmem:[%s4 + $0x1a0] sm:$0xff]
    %v3695 = vld [vmem:[%s4 + $0x1a8] sm:$0xff]
    %v3696 = vld [vmem:[%s4 + $0x1b0] sm:$0xff]
    %v3697 = vld [vmem:[%s4 + $0x1b8] sm:$0xff]
    %v3698 = vld [vmem:[%s4 + $0x1c0] sm:$0xff]
    %v3699 = vld [vmem:[%s4 + $0x1c8] sm:$0xff]
    %v3700 = vld [vmem:[%s4 + $0x1d0] sm:$0xff]
    %v3701 = vld [vmem:[%s4 + $0x1d8] sm:$0xff]
    %v3702 = vld [vmem:[%s4 + $0x1e0] sm:$0xff]
    %v3703 = vld [vmem:[%s4 + $0x1e8] sm:$0xff]
    %v3704 = vld [vmem:[%s4 + $0x1f0] sm:$0xff]
    %v3705 = vld [vmem:[%s4 + $0x1f8] sm:$0xff]
    %v3706 = vld [vmem:[%s4 + $0x200] sm:$0xff]
    %v3707 = vld [vmem:[%s4 + $0x208] sm:$0xff]
    %v3708 = vld [vmem:[%s4 + $0x210] sm:$0xff]
    %v3709 = vld [vmem:[%s4 + $0x218] sm:$0xff]
    %v3710 = vld [vmem:[%s4 + $0x220] sm:$0xff]
    %v3711 = vld [vmem:[%s4 + $0x228] sm:$0xff]
    %v3712 = vld [vmem:[%s4 + $0x230] sm:$0xff]
    %v3713 = vld [vmem:[%s4 + $0x238] sm:$0xff]
    %v3714 = vld [vmem:[%s4 + $0x240] sm:$0xff]
    %v3715 = vld [vmem:[%s4 + $0x248] sm:$0xff]
    %v3716 = vld [vmem:[%s4 + $0x250] sm:$0xff]
    %v3717 = vld [vmem:[%s4 + $0x258] sm:$0xff]
    %v3718 = vld [vmem:[%s4 + $0x260] sm:$0xff]
    %v3719 = vld [vmem:[%s4 + $0x268] sm:$0xff]
    %v3720 = vld [vmem:[%s4 + $0x270] sm:$0xff]
    %v3721 = vld [vmem:[%s4 + $0x278] sm:$0xff]
    %v3722 = vld [vmem:[%s4 + $0x280] sm:$0xff]
    %v3723 = vld [vmem:[%s4 + $0x288] sm:$0xff]
    %v3724 = vld [vmem:[%s4 + $0x290] sm:$0xff]
    %v3725 = vld [vmem:[%s4 + $0x298] sm:$0xff]
    %v3726 = vld [vmem:[%s4 + $0x2a0] sm:$0xff]
    %v3727 = vld [vmem:[%s4 + $0x2a8] sm:$0xff]
    %v3728 = vld [vmem:[%s4 + $0x2b0] sm:$0xff]
    %v3729 = vld [vmem:[%s4 + $0x2b8] sm:$0xff]
    %v3730 = vld [vmem:[%s4 + $0x2c0] sm:$0xff]
    %v3731 = vld [vmem:[%s4 + $0x2c8] sm:$0xff]
    %v3732 = vld [vmem:[%s4 + $0x2d0] sm:$0xff]
    %v3733 = vld [vmem:[%s4 + $0x2d8] sm:$0xff]
    %v3734 = vld [vmem:[%s4 + $0x2e0] sm:$0xff]
    %v3735 = vld [vmem:[%s4 + $0x2e8] sm:$0xff]
    %v3736 = vld [vmem:[%s4 + $0x2f0] sm:$0xff]
    %v3737 = vld [vmem:[%s4 + $0x2f8] sm:$0xff]
    %v3738 = vld [vmem:[%s4 + $0x300] sm:$0xff]
    %v3739 = vld [vmem:[%s4 + $0x308] sm:$0xff]
    %v3740 = vld [vmem:[%s4 + $0x310] sm:$0xff]
    %v3741 = vld [vmem:[%s4 + $0x318] sm:$0xff]
    %v3742 = vld [vmem:[%s4 + $0x320] sm:$0xff]
    %v3743 = vld [vmem:[%s4 + $0x328] sm:$0xff]
    %v3744 = vld [vmem:[%s4 + $0x330] sm:$0xff]
    %v3745 = vld [vmem:[%s4 + $0x338] sm:$0xff]
    %v3746 = vld [vmem:[%s4 + $0x340] sm:$0xff]
    %v3747 = vld [vmem:[%s4 + $0x348] sm:$0xff]
    %v3748 = vld [vmem:[%s4 + $0x350] sm:$0xff]
    %v3749 = vld [vmem:[%s4 + $0x358] sm:$0xff]
    %v3750 = vld [vmem:[%s4 + $0x360] sm:$0xff]
    %v3751 = vld [vmem:[%s4 + $0x368] sm:$0xff]
    %v3752 = vld [vmem:[%s4 + $0x370] sm:$0xff]
    %v3753 = vld [vmem:[%s4 + $0x378] sm:$0xff]
    %v3754 = vld [vmem:[%s4 + $0x380] sm:$0xff]
    %v3755 = vld [vmem:[%s4 + $0x388] sm:$0xff]
    %v3756 = vld [vmem:[%s4 + $0x390] sm:$0xff]
    %v3757 = vld [vmem:[%s4 + $0x398] sm:$0xff]
    %v3758 = vld [vmem:[%s4 + $0x3a0] sm:$0xff]
    %v3759 = vld [vmem:[%s4 + $0x3a8] sm:$0xff]
    %v3760 = vld [vmem:[%s4 + $0x3b0] sm:$0xff]
    %v3761 = vld [vmem:[%s4 + $0x3b8] sm:$0xff]
    %v3762 = vld [vmem:[%s4 + $0x3c0] sm:$0xff]
    %v3763 = vld [vmem:[%s4 + $0x3c8] sm:$0xff]
    %v3764 = vld [vmem:[%s4 + $0x3d0] sm:$0xff]
    %v3765 = vld [vmem:[%s4 + $0x3d8] sm:$0xff]
    %v3766 = vld [vmem:[%s4 + $0x3e0] sm:$0xff]
    %v3767 = vld [vmem:[%s4 + $0x3e8] sm:$0xff]
    %v3768 = vld [vmem:[%s4 + $0x3f0] sm:$0xff]
    %v3769 = vld [vmem:[%s4 + $0x3f8] sm:$0xff]
    %v3770 = vld [vmem:[%s4 + $0x400] sm:$0xff]
    %v3771 = vld [vmem:[%s4 + $0x408] sm:$0xff]
    %v3772 = vld [vmem:[%s4 + $0x410] sm:$0xff]
    %v3773 = vld [vmem:[%s4 + $0x418] sm:$0xff]
    %v3774 = vld [vmem:[%s4 + $0x420] sm:$0xff]
    %v3775 = vld [vmem:[%s4 + $0x428] sm:$0xff]
    %v3776 = vld [vmem:[%s4 + $0x430] sm:$0xff]
    %v3777 = vld [vmem:[%s4 + $0x438] sm:$0xff]
    %v3778 = vld [vmem:[%s4 + $0x440] sm:$0xff]
    %v3779 = vld [vmem:[%s4 + $0x448] sm:$0xff]
    %v3780 = vld [vmem:[%s4 + $0x450] sm:$0xff]
    %v3781 = vld [vmem:[%s4 + $0x458] sm:$0xff]
    %v3782 = vld [vmem:[%s4 + $0x460] sm:$0xff]
    %v3783 = vld [vmem:[%s4 + $0x468] sm:$0xff]
    %v3784 = vld [vmem:[%s4 + $0x470] sm:$0xff]
    %v3785 = vld [vmem:[%s4 + $0x478] sm:$0xff]
    %v3786 = vld [vmem:[%s4 + $0x480] sm:$0xff]
    %v3787 = vld [vmem:[%s4 + $0x488] sm:$0xff]
    %v3788 = vld [vmem:[%s4 + $0x490] sm:$0xff]
    %v3789 = vld [vmem:[%s4 + $0x498] sm:$0xff]
    %v3790 = vld [vmem:[%s4 + $0x4a0] sm:$0xff]
    %v3791 = vld [vmem:[%s4 + $0x4a8] sm:$0xff]
    %v3792 = vld [vmem:[%s4 + $0x4b0] sm:$0xff]
    %v3793 = vld [vmem:[%s4 + $0x4b8] sm:$0xff]
    %v3794 = vld [vmem:[%s4 + $0x4c0] sm:$0xff]
    %v3795 = vld [vmem:[%s4 + $0x4c8] sm:$0xff]
    %v3796 = vld [vmem:[%s4 + $0x4d0] sm:$0xff]
    %v3797 = vld [vmem:[%s4 + $0x4d8] sm:$0xff]
    %v3798 = vld [vmem:[%s4 + $0x4e0] sm:$0xff]
    %v3799 = vld [vmem:[%s4 + $0x4e8] sm:$0xff]
    %v3800 = vld [vmem:[%s4 + $0x4f0] sm:$0xff]
    %v3801 = vld [vmem:[%s4 + $0x4f8] sm:$0xff]
    %v3802 = vld [vmem:[%s4 + $0x500] sm:$0xff]
    %v3803 = vld [vmem:[%s4 + $0x508] sm:$0xff]
    %v3804 = vld [vmem:[%s4 + $0x510] sm:$0xff]
    %v3805 = vld [vmem:[%s4 + $0x518] sm:$0xff]
    %v3806 = vld [vmem:[%s4 + $0x520] sm:$0xff]
    %v3807 = vld [vmem:[%s4 + $0x528] sm:$0xff]
    %v3808 = vld [vmem:[%s4 + $0x530] sm:$0xff]
    %v3809 = vld [vmem:[%s4 + $0x538] sm:$0xff]
    %v3810 = vld [vmem:[%s4 + $0x540] sm:$0xff]
    %v3811 = vld [vmem:[%s4 + $0x548] sm:$0xff]
    %v3812 = vld [vmem:[%s4 + $0x550] sm:$0xff]
    %v3813 = vld [vmem:[%s4 + $0x558] sm:$0xff]
    %v3814 = vld [vmem:[%s4 + $0x560] sm:$0xff]
    %v3815 = vld [vmem:[%s4 + $0x568] sm:$0xff]
    %v3816 = vld [vmem:[%s4 + $0x570] sm:$0xff]
    %v3817 = vld [vmem:[%s4 + $0x578] sm:$0xff]
    %v3818 = vld [vmem:[%s4 + $0x580] sm:$0xff]
    %v3819 = vld [vmem:[%s4 + $0x588] sm:$0xff]
    %v3820 = vld [vmem:[%s4 + $0x590] sm:$0xff]
    %v3821 = vld [vmem:[%s4 + $0x598] sm:$0xff]
    %v3822 = vld [vmem:[%s4 + $0x5a0] sm:$0xff]
    %v3823 = vld [vmem:[%s4 + $0x5a8] sm:$0xff]
    %v3824 = vld [vmem:[%s4 + $0x5b0] sm:$0xff]
    %v3825 = vld [vmem:[%s4 + $0x5b8] sm:$0xff]
    %v3826 = vld [vmem:[%s4 + $0x5c0] sm:$0xff]
    %v3827 = vld [vmem:[%s4 + $0x5c8] sm:$0xff]
    %v3828 = vld [vmem:[%s4 + $0x5d0] sm:$0xff]
    %v3829 = vld [vmem:[%s4 + $0x5d8] sm:$0xff]
    %v3830 = vld [vmem:[%s4 + $0x5e0] sm:$0xff]
    %v3831 = vld [vmem:[%s4 + $0x5e8] sm:$0xff]
    %v3832 = vld [vmem:[%s4 + $0x5f0] sm:$0xff]
    %v3833 = vld [vmem:[%s4 + $0x5f8] sm:$0xff]
    %v3834 = vld [vmem:[%s4 + $0x600] sm:$0xff]
    %v3835 = vld [vmem:[%s4 + $0x608] sm:$0xff]
    %v3836 = vld [vmem:[%s4 + $0x610] sm:$0xff]
    %v3837 = vld [vmem:[%s4 + $0x618] sm:$0xff]
    %v3838 = vld [vmem:[%s4 + $0x620] sm:$0xff]
    %v3839 = vld [vmem:[%s4 + $0x628] sm:$0xff]
    %v3840 = vld [vmem:[%s4 + $0x630] sm:$0xff]
    %v3841 = vld [vmem:[%s4 + $0x638] sm:$0xff]
    %v3842 = vld [vmem:[%s4 + $0x640] sm:$0xff]
    %v3843 = vld [vmem:[%s4 + $0x648] sm:$0xff]
    %v3844 = vld [vmem:[%s4 + $0x650] sm:$0xff]
    %v3845 = vld [vmem:[%s4 + $0x658] sm:$0xff]
    %v3846 = vld [vmem:[%s4 + $0x660] sm:$0xff]
    %v3847 = vld [vmem:[%s4 + $0x668] sm:$0xff]
    %v3848 = vld [vmem:[%s4 + $0x670] sm:$0xff]
    %v3849 = vld [vmem:[%s4 + $0x678] sm:$0xff]
    %v3850 = vld [vmem:[%s4 + $0x680] sm:$0xff]
    %v3851 = vld [vmem:[%s4 + $0x688] sm:$0xff]
    %v3852 = vld [vmem:[%s4 + $0x690] sm:$0xff]
    %v3853 = vld [vmem:[%s4 + $0x698] sm:$0xff]
    %v3854 = vld [vmem:[%s4 + $0x6a0] sm:$0xff]
    %v3855 = vld [vmem:[%s4 + $0x6a8] sm:$0xff]
    %v3856 = vld [vmem:[%s4 + $0x6b0] sm:$0xff]
    %v3857 = vld [vmem:[%s4 + $0x6b8] sm:$0xff]
    %v3858 = vld [vmem:[%s4 + $0x6c0] sm:$0xff]
    %v3859 = vld [vmem:[%s4 + $0x6c8] sm:$0xff]
    %v3860 = vld [vmem:[%s4 + $0x6d0] sm:$0xff]
    %v3861 = vld [vmem:[%s4 + $0x6d8] sm:$0xff]
    %v3862 = vld [vmem:[%s4 + $0x6e0] sm:$0xff]
    %v3863 = vld [vmem:[%s4 + $0x6e8] sm:$0xff]
    %v3864 = vld [vmem:[%s4 + $0x6f0] sm:$0xff]
    %v3865 = vld [vmem:[%s4 + $0x6f8] sm:$0xff]
    %v3866 = vld [vmem:[%s4 + $0x700] sm:$0xff]
    %v3867 = vld [vmem:[%s4 + $0x708] sm:$0xff]
    %v3868 = vld [vmem:[%s4 + $0x710] sm:$0xff]
    %v3869 = vld [vmem:[%s4 + $0x718] sm:$0xff]
    %v3870 = vld [vmem:[%s4 + $0x720] sm:$0xff]
    %v3871 = vld [vmem:[%s4 + $0x728] sm:$0xff]
    %v3872 = vld [vmem:[%s4 + $0x730] sm:$0xff]
    %v3873 = vld [vmem:[%s4 + $0x738] sm:$0xff]
    %v3874 = vld [vmem:[%s4 + $0x740] sm:$0xff]
    %v3875 = vld [vmem:[%s4 + $0x748] sm:$0xff]
    %v3876 = vld [vmem:[%s4 + $0x750] sm:$0xff]
    %v3877 = vld [vmem:[%s4 + $0x758] sm:$0xff]
    %v3878 = vld [vmem:[%s4 + $0x760] sm:$0xff]
    %v3879 = vld [vmem:[%s4 + $0x768] sm:$0xff]
    %v3880 = vld [vmem:[%s4 + $0x770] sm:$0xff]
    %v3881 = vld [vmem:[%s4 + $0x778] sm:$0xff]
    %v3882 = vld [vmem:[%s4 + $0x780] sm:$0xff]
    %v3883 = vld [vmem:[%s4 + $0x788] sm:$0xff]
    %v3884 = vld [vmem:[%s4 + $0x790] sm:$0xff]
    %v3885 = vld [vmem:[%s4 + $0x798] sm:$0xff]
    %v3886 = vld [vmem:[%s4 + $0x7a0] sm:$0xff]
    %v3887 = vld [vmem:[%s4 + $0x7a8] sm:$0xff]
    %v3888 = vld [vmem:[%s4 + $0x7b0] sm:$0xff]
    %v3889 = vld [vmem:[%s4 + $0x7b8] sm:$0xff]
    %v3890 = vld [vmem:[%s4 + $0x7c0] sm:$0xff]
    %v3891 = vld [vmem:[%s4 + $0x7c8] sm:$0xff]
    %v3892 = vld [vmem:[%s4 + $0x7d0] sm:$0xff]
    %v3893 = vld [vmem:[%s4 + $0x7d8] sm:$0xff]
    %v3894 = vld [vmem:[%s4 + $0x7e0] sm:$0xff]
    %v3895 = vld [vmem:[%s4 + $0x7e8] sm:$0xff]
    %v3896 = vld [vmem:[%s4 + $0x7f0] sm:$0xff]
    %v3897 = vld [vmem:[%s4 + $0x7f8] sm:$0xff]
    %v3898 = vsel %vm1878, %v3642, 0.0
    %v3899 = vsel %vm1879, %v3643, 0.0
    %v3900 = vsel %vm1880, %v3644, 0.0
    %v3901 = vsel %vm1881, %v3645, 0.0
    %v3902 = vsel %vm1882, %v3646, 0.0
    %v3903 = vsel %vm1883, %v3647, 0.0
    %v3904 = vsel %vm1884, %v3648, 0.0
    %v3905 = vsel %vm1885, %v3649, 0.0
    %v3906 = vsel %vm1886, %v3650, 0.0
    %v3907 = vsel %vm1887, %v3651, 0.0
    %v3908 = vsel %vm1888, %v3652, 0.0
    %v3909 = vsel %vm1889, %v3653, 0.0
    %v3910 = vsel %vm1890, %v3654, 0.0
    %v3911 = vsel %vm1891, %v3655, 0.0
    %v3912 = vsel %vm1892, %v3656, 0.0
    %v3913 = vsel %vm1893, %v3657, 0.0
    %v3914 = vsel %vm1894, %v3658, 0.0
    %v3915 = vsel %vm1895, %v3659, 0.0
    %v3916 = vsel %vm1896, %v3660, 0.0
    %v3917 = vsel %vm1897, %v3661, 0.0
    %v3918 = vsel %vm1898, %v3662, 0.0
    %v3919 = vsel %vm1899, %v3663, 0.0
    %v3920 = vsel %vm1900, %v3664, 0.0
    %v3921 = vsel %vm1901, %v3665, 0.0
    %v3922 = vsel %vm1902, %v3666, 0.0
    %v3923 = vsel %vm1903, %v3667, 0.0
    %v3924 = vsel %vm1904, %v3668, 0.0
    %v3925 = vsel %vm1905, %v3669, 0.0
    %v3926 = vsel %vm1906, %v3670, 0.0
    %v3927 = vsel %vm1907, %v3671, 0.0
    %v3928 = vsel %vm1908, %v3672, 0.0
    %v3929 = vsel %vm1909, %v3673, 0.0
    %v3930 = vsel %vm1910, %v3674, 0.0
    %v3931 = vsel %vm1911, %v3675, 0.0
    %v3932 = vsel %vm1912, %v3676, 0.0
    %v3933 = vsel %vm1913, %v3677, 0.0
    %v3934 = vsel %vm1914, %v3678, 0.0
    %v3935 = vsel %vm1915, %v3679, 0.0
    %v3936 = vsel %vm1916, %v3680, 0.0
    %v3937 = vsel %vm1917, %v3681, 0.0
    %v3938 = vsel %vm1918, %v3682, 0.0
    %v3939 = vsel %vm1919, %v3683, 0.0
    %v3940 = vsel %vm1920, %v3684, 0.0
    %v3941 = vsel %vm1921, %v3685, 0.0
    %v3942 = vsel %vm1922, %v3686, 0.0
    %v3943 = vsel %vm1923, %v3687, 0.0
    %v3944 = vsel %vm1924, %v3688, 0.0
    %v3945 = vsel %vm1925, %v3689, 0.0
    %v3946 = vsel %vm1926, %v3690, 0.0
    %v3947 = vsel %vm1927, %v3691, 0.0
    %v3948 = vsel %vm1928, %v3692, 0.0
    %v3949 = vsel %vm1929, %v3693, 0.0
    %v3950 = vsel %vm1930, %v3694, 0.0
    %v3951 = vsel %vm1931, %v3695, 0.0
    %v3952 = vsel %vm1932, %v3696, 0.0
    %v3953 = vsel %vm1933, %v3697, 0.0
    %v3954 = vsel %vm1934, %v3698, 0.0
    %v3955 = vsel %vm1935, %v3699, 0.0
    %v3956 = vsel %vm1936, %v3700, 0.0
    %v3957 = vsel %vm1937, %v3701, 0.0
    %v3958 = vsel %vm1938, %v3702, 0.0
    %v3959 = vsel %vm1939, %v3703, 0.0
    %v3960 = vsel %vm1940, %v3704, 0.0
    %v3961 = vsel %vm1941, %v3705, 0.0
    %v3962 = vsel %vm1942, %v3706, 0.0
    %v3963 = vsel %vm1943, %v3707, 0.0
    %v3964 = vsel %vm1944, %v3708, 0.0
    %v3965 = vsel %vm1945, %v3709, 0.0
    %v3966 = vsel %vm1946, %v3710, 0.0
    %v3967 = vsel %vm1947, %v3711, 0.0
    %v3968 = vsel %vm1948, %v3712, 0.0
    %v3969 = vsel %vm1949, %v3713, 0.0
    %v3970 = vsel %vm1950, %v3714, 0.0
    %v3971 = vsel %vm1951, %v3715, 0.0
    %v3972 = vsel %vm1952, %v3716, 0.0
    %v3973 = vsel %vm1953, %v3717, 0.0
    %v3974 = vsel %vm1954, %v3718, 0.0
    %v3975 = vsel %vm1955, %v3719, 0.0
    %v3976 = vsel %vm1956, %v3720, 0.0
    %v3977 = vsel %vm1957, %v3721, 0.0
    %v3978 = vsel %vm1958, %v3722, 0.0
    %v3979 = vsel %vm1959, %v3723, 0.0
    %v3980 = vsel %vm1960, %v3724, 0.0
    %v3981 = vsel %vm1961, %v3725, 0.0
    %v3982 = vsel %vm1962, %v3726, 0.0
    %v3983 = vsel %vm1963, %v3727, 0.0
    %v3984 = vsel %vm1964, %v3728, 0.0
    %v3985 = vsel %vm1965, %v3729, 0.0
    %v3986 = vsel %vm1966, %v3730, 0.0
    %v3987 = vsel %vm1967, %v3731, 0.0
    %v3988 = vsel %vm1968, %v3732, 0.0
    %v3989 = vsel %vm1969, %v3733, 0.0
    %v3990 = vsel %vm1970, %v3734, 0.0
    %v3991 = vsel %vm1971, %v3735, 0.0
    %v3992 = vsel %vm1972, %v3736, 0.0
    %v3993 = vsel %vm1973, %v3737, 0.0
    %v3994 = vsel %vm1974, %v3738, 0.0
    %v3995 = vsel %vm1975, %v3739, 0.0
    %v3996 = vsel %vm1976, %v3740, 0.0
    %v3997 = vsel %vm1977, %v3741, 0.0
    %v3998 = vsel %vm1978, %v3742, 0.0
    %v3999 = vsel %vm1979, %v3743, 0.0
    %v4000 = vsel %vm1980, %v3744, 0.0
    %v4001 = vsel %vm1981, %v3745, 0.0
    %v4002 = vsel %vm1982, %v3746, 0.0
    %v4003 = vsel %vm1983, %v3747, 0.0
    %v4004 = vsel %vm1984, %v3748, 0.0
    %v4005 = vsel %vm1985, %v3749, 0.0
    %v4006 = vsel %vm1986, %v3750, 0.0
    %v4007 = vsel %vm1987, %v3751, 0.0
    %v4008 = vsel %vm1988, %v3752, 0.0
    %v4009 = vsel %vm1989, %v3753, 0.0
    %v4010 = vsel %vm1990, %v3754, 0.0
    %v4011 = vsel %vm1991, %v3755, 0.0
    %v4012 = vsel %vm1992, %v3756, 0.0
    %v4013 = vsel %vm1993, %v3757, 0.0
    %v4014 = vsel %vm1994, %v3758, 0.0
    %v4015 = vsel %vm1995, %v3759, 0.0
    %v4016 = vsel %vm1996, %v3760, 0.0
    %v4017 = vsel %vm1997, %v3761, 0.0
    %v4018 = vsel %vm1998, %v3762, 0.0
    %v4019 = vsel %vm1999, %v3763, 0.0
    %v4020 = vsel %vm2000, %v3764, 0.0
    %v4021 = vsel %vm2001, %v3765, 0.0
    %v4022 = vsel %vm2002, %v3766, 0.0
    %v4023 = vsel %vm2003, %v3767, 0.0
    %v4024 = vsel %vm2004, %v3768, 0.0
    %v4025 = vsel %vm2005, %v3769, 0.0
    %v4026 = vsel %vm2006, %v3770, 0.0
    %v4027 = vsel %vm2007, %v3771, 0.0
    %v4028 = vsel %vm2008, %v3772, 0.0
    %v4029 = vsel %vm2009, %v3773, 0.0
    %v4030 = vsel %vm2010, %v3774, 0.0
    %v4031 = vsel %vm2011, %v3775, 0.0
    %v4032 = vsel %vm2012, %v3776, 0.0
    %v4033 = vsel %vm2013, %v3777, 0.0
    %v4034 = vsel %vm2014, %v3778, 0.0
    %v4035 = vsel %vm2015, %v3779, 0.0
    %v4036 = vsel %vm2016, %v3780, 0.0
    %v4037 = vsel %vm2017, %v3781, 0.0
    %v4038 = vsel %vm2018, %v3782, 0.0
    %v4039 = vsel %vm2019, %v3783, 0.0
    %v4040 = vsel %vm2020, %v3784, 0.0
    %v4041 = vsel %vm2021, %v3785, 0.0
    %v4042 = vsel %vm2022, %v3786, 0.0
    %v4043 = vsel %vm2023, %v3787, 0.0
    %v4044 = vsel %vm2024, %v3788, 0.0
    %v4045 = vsel %vm2025, %v3789, 0.0
    %v4046 = vsel %vm2026, %v3790, 0.0
    %v4047 = vsel %vm2027, %v3791, 0.0
    %v4048 = vsel %vm2028, %v3792, 0.0
    %v4049 = vsel %vm2029, %v3793, 0.0
    %v4050 = vsel %vm2030, %v3794, 0.0
    %v4051 = vsel %vm2031, %v3795, 0.0
    %v4052 = vsel %vm2032, %v3796, 0.0
    %v4053 = vsel %vm2033, %v3797, 0.0
    %v4054 = vsel %vm2034, %v3798, 0.0
    %v4055 = vsel %vm2035, %v3799, 0.0
    %v4056 = vsel %vm2036, %v3800, 0.0
    %v4057 = vsel %vm2037, %v3801, 0.0
    %v4058 = vsel %vm2038, %v3802, 0.0
    %v4059 = vsel %vm2039, %v3803, 0.0
    %v4060 = vsel %vm2040, %v3804, 0.0
    %v4061 = vsel %vm2041, %v3805, 0.0
    %v4062 = vsel %vm2042, %v3806, 0.0
    %v4063 = vsel %vm2043, %v3807, 0.0
    %v4064 = vsel %vm2044, %v3808, 0.0
    %v4065 = vsel %vm2045, %v3809, 0.0
    %v4066 = vsel %vm2046, %v3810, 0.0
    %v4067 = vsel %vm2047, %v3811, 0.0
    %v4068 = vsel %vm2048, %v3812, 0.0
    %v4069 = vsel %vm2049, %v3813, 0.0
    %v4070 = vsel %vm2050, %v3814, 0.0
    %v4071 = vsel %vm2051, %v3815, 0.0
    %v4072 = vsel %vm2052, %v3816, 0.0
    %v4073 = vsel %vm2053, %v3817, 0.0
    %v4074 = vsel %vm2054, %v3818, 0.0
    %v4075 = vsel %vm2055, %v3819, 0.0
    %v4076 = vsel %vm2056, %v3820, 0.0
    %v4077 = vsel %vm2057, %v3821, 0.0
    %v4078 = vsel %vm2058, %v3822, 0.0
    %v4079 = vsel %vm2059, %v3823, 0.0
    %v4080 = vsel %vm2060, %v3824, 0.0
    %v4081 = vsel %vm2061, %v3825, 0.0
    %v4082 = vsel %vm2062, %v3826, 0.0
    %v4083 = vsel %vm2063, %v3827, 0.0
    %v4084 = vsel %vm2064, %v3828, 0.0
    %v4085 = vsel %vm2065, %v3829, 0.0
    %v4086 = vsel %vm2066, %v3830, 0.0
    %v4087 = vsel %vm2067, %v3831, 0.0
    %v4088 = vsel %vm2068, %v3832, 0.0
    %v4089 = vsel %vm2069, %v3833, 0.0
    %v4090 = vsel %vm2070, %v3834, 0.0
    %v4091 = vsel %vm2071, %v3835, 0.0
    %v4092 = vsel %vm2072, %v3836, 0.0
    %v4093 = vsel %vm2073, %v3837, 0.0
    %v4094 = vsel %vm2074, %v3838, 0.0
    %v4095 = vsel %vm2075, %v3839, 0.0
    %v4096 = vsel %vm2076, %v3840, 0.0
    %v4097 = vsel %vm2077, %v3841, 0.0
    %v4098 = vsel %vm2078, %v3842, 0.0
    %v4099 = vsel %vm2079, %v3843, 0.0
    %v4100 = vsel %vm2080, %v3844, 0.0
    %v4101 = vsel %vm2081, %v3845, 0.0
    %v4102 = vsel %vm2082, %v3846, 0.0
    %v4103 = vsel %vm2083, %v3847, 0.0
    %v4104 = vsel %vm2084, %v3848, 0.0
    %v4105 = vsel %vm2085, %v3849, 0.0
    %v4106 = vsel %vm2086, %v3850, 0.0
    %v4107 = vsel %vm2087, %v3851, 0.0
    %v4108 = vsel %vm2088, %v3852, 0.0
    %v4109 = vsel %vm2089, %v3853, 0.0
    %v4110 = vsel %vm2090, %v3854, 0.0
    %v4111 = vsel %vm2091, %v3855, 0.0
    %v4112 = vsel %vm2092, %v3856, 0.0
    %v4113 = vsel %vm2093, %v3857, 0.0
    %v4114 = vsel %vm2094, %v3858, 0.0
    %v4115 = vsel %vm2095, %v3859, 0.0
    %v4116 = vsel %vm2096, %v3860, 0.0
    %v4117 = vsel %vm2097, %v3861, 0.0
    %v4118 = vsel %vm2098, %v3862, 0.0
    %v4119 = vsel %vm2099, %v3863, 0.0
    %v4120 = vsel %vm2100, %v3864, 0.0
    %v4121 = vsel %vm2101, %v3865, 0.0
    %v4122 = vsel %vm2102, %v3866, 0.0
    %v4123 = vsel %vm2103, %v3867, 0.0
    %v4124 = vsel %vm2104, %v3868, 0.0
    %v4125 = vsel %vm2105, %v3869, 0.0
    %v4126 = vsel %vm2106, %v3870, 0.0
    %v4127 = vsel %vm2107, %v3871, 0.0
    %v4128 = vsel %vm2108, %v3872, 0.0
    %v4129 = vsel %vm2109, %v3873, 0.0
    %v4130 = vsel %vm2110, %v3874, 0.0
    %v4131 = vsel %vm2111, %v3875, 0.0
    %v4132 = vsel %vm2112, %v3876, 0.0
    %v4133 = vsel %vm2113, %v3877, 0.0
    %v4134 = vsel %vm2114, %v3878, 0.0
    %v4135 = vsel %vm2115, %v3879, 0.0
    %v4136 = vsel %vm2116, %v3880, 0.0
    %v4137 = vsel %vm2117, %v3881, 0.0
    %v4138 = vsel %vm2118, %v3882, 0.0
    %v4139 = vsel %vm2119, %v3883, 0.0
    %v4140 = vsel %vm2120, %v3884, 0.0
    %v4141 = vsel %vm2121, %v3885, 0.0
    %v4142 = vsel %vm2122, %v3886, 0.0
    %v4143 = vsel %vm2123, %v3887, 0.0
    %v4144 = vsel %vm2124, %v3888, 0.0
    %v4145 = vsel %vm2125, %v3889, 0.0
    %v4146 = vsel %vm2126, %v3890, 0.0
    %v4147 = vsel %vm2127, %v3891, 0.0
    %v4148 = vsel %vm2128, %v3892, 0.0
    %v4149 = vsel %vm2129, %v3893, 0.0
    %v4150 = vsel %vm2130, %v3894, 0.0
    %v4151 = vsel %vm2131, %v3895, 0.0
    %v4152 = vsel %vm2132, %v3896, 0.0
    %v4153 = vsel %vm2133, %v3897, 0.0
    %v4154 = vld [vmem:[#allocation4] sm:$0xff]
    %v4155 = vadd.f32 %v3626, %v3627
    %v4156 = vadd.f32 %v4155, %v3628
    %v4157 = vadd.f32 %v4156, %v3629
    %v4158 = vadd.f32 %v4157, %v3630
    %v4159 = vadd.f32 %v4158, %v3631
    %v4160 = vadd.f32 %v4159, %v3632
    %v4161 = vadd.f32 %v4160, %v3633
    %v4162 = vadd.f32 %v4161, %v3634
    %v4163 = vadd.f32 %v4162, %v3635
    %v4164 = vadd.f32 %v4163, %v3636
    %v4165 = vadd.f32 %v4164, %v3637
    %v4166 = vadd.f32 %v4165, %v3638
    %v4167 = vadd.f32 %v4166, %v3639
    %v4168 = vadd.f32 %v4167, %v3640
    %v4169 = vadd.f32 %v4168, %v3641
    %4170 = vadd.xlane.f32.xlu0 %v4169
    %v4171 = vpop.xlane.xlu0 %4170
    %v4172 = vadd.f32 %v4154, %v4171
    %vm4173 = vcmask 7168
    %4174 = vst.msk [vmem:[#allocation4] sm:$0xff] %vm4173, %v4172
    %v4175 = vld [vmem:[#allocation5] sm:$0xff]
    %4176 = vmatprep.subr.mxu0 0.0
    %4177 = vmatpush1.msra.mxu0 %v3913
    %4178 = vmatprep.subr.mxu0 0.0
    %4179 = vmatpush1.msra.mxu0 %v3912
    %4180 = vmatprep.subr.mxu0 0.0
    %4181 = vmatpush1.msra.mxu0 %v3911
    %4182 = vmatprep.subr.mxu0 0.0
    %4183 = vmatpush1.msra.mxu0 %v3910
    %4184 = vmatprep.subr.mxu0 0.0
    %4185 = vmatpush1.msra.mxu0 %v3909
    %4186 = vmatprep.subr.mxu0 0.0
    %4187 = vmatpush1.msra.mxu0 %v3908
    %4188 = vmatprep.subr.mxu0 0.0
    %4189 = vmatpush1.msra.mxu0 %v3907
    %4190 = vmatprep.subr.mxu0 0.0
    %4191 = vmatpush1.msra.mxu0 %v3906
    %4192 = vmatprep.subr.mxu0 0.0
    %4193 = vmatpush1.msra.mxu0 %v3905
    %4194 = vmatprep.subr.mxu0 0.0
    %4195 = vmatpush1.msra.mxu0 %v3904
    %4196 = vmatprep.subr.mxu0 0.0
    %4197 = vmatpush1.msra.mxu0 %v3903
    %4198 = vmatprep.subr.mxu0 0.0
    %4199 = vmatpush1.msra.mxu0 %v3902
    %4200 = vmatprep.subr.mxu0 0.0
    %4201 = vmatpush1.msra.mxu0 %v3901
    %4202 = vmatprep.subr.mxu0 0.0
    %4203 = vmatpush1.msra.mxu0 %v3900
    %4204 = vmatprep.subr.mxu0 0.0
    %4205 = vmatpush1.msra.mxu0 %v3899
    %4206 = vmatprep.subr.mxu0 0.0
    %4207 = vmatpush1.msra.mxu0 %v3898
    %4208 = vmatprep.subr.mxu0 0.0
    %4209 = vmatpush2.msra.mxu0 %v3929
    %4210 = vmatprep.subr.mxu0 0.0
    %4211 = vmatpush2.msra.mxu0 %v3928
    %4212 = vmatprep.subr.mxu0 0.0
    %4213 = vmatpush2.msra.mxu0 %v3927
    %4214 = vmatprep.subr.mxu0 0.0
    %4215 = vmatpush2.msra.mxu0 %v3926
    %4216 = vmatprep.subr.mxu0 0.0
    %4217 = vmatpush2.msra.mxu0 %v3925
    %4218 = vmatprep.subr.mxu0 0.0
    %4219 = vmatpush2.msra.mxu0 %v3924
    %4220 = vmatprep.subr.mxu0 0.0
    %4221 = vmatpush2.msra.mxu0 %v3923
    %4222 = vmatprep.subr.mxu0 0.0
    %4223 = vmatpush2.msra.mxu0 %v3922
    %4224 = vmatprep.subr.mxu0 0.0
    %4225 = vmatpush2.msra.mxu0 %v3921
    %4226 = vmatprep.subr.mxu0 0.0
    %4227 = vmatpush2.msra.mxu0 %v3920
    %4228 = vmatprep.subr.mxu0 0.0
    %4229 = vmatpush2.msra.mxu0 %v3919
    %4230 = vmatprep.subr.mxu0 0.0
    %4231 = vmatpush2.msra.mxu0 %v3918
    %4232 = vmatprep.subr.mxu0 0.0
    %4233 = vmatpush2.msra.mxu0 %v3917
    %4234 = vmatprep.subr.mxu0 0.0
    %4235 = vmatpush2.msra.mxu0 %v3916
    %4236 = vmatprep.subr.mxu0 0.0
    %4237 = vmatpush2.msra.mxu0 %v3915
    %4238 = vmatprep.subr.mxu0 0.0
    %4239 = vmatpush2.msra.mxu0 %v3914
    %4240 = vmatprep.mubr.f32.mxu0 %v3627
    %4241 = vmatmul.mubr.f32.gmra.mxu0 %v3626
    %v4242 = vpop.f32.mrf.mxu0
    %v4243 = vadd.f32 0.0, %v4242
    %v4244 = vpop.f32.mrf.mxu0
    %4245 = vdwg.mxu0
    %4246 = vmatprep.subr.mxu0 0.0
    %4247 = vmatpush1.msra.mxu0 %v3945
    %4248 = vmatprep.subr.mxu0 0.0
    %4249 = vmatpush1.msra.mxu0 %v3944
    %4250 = vmatprep.subr.mxu0 0.0
    %4251 = vmatpush1.msra.mxu0 %v3943
    %4252 = vmatprep.subr.mxu0 0.0
    %4253 = vmatpush1.msra.mxu0 %v3942
    %4254 = vmatprep.subr.mxu0 0.0
    %4255 = vmatpush1.msra.mxu0 %v3941
    %4256 = vmatprep.subr.mxu0 0.0
    %4257 = vmatpush1.msra.mxu0 %v3940
    %4258 = vmatprep.subr.mxu0 0.0
    %4259 = vmatpush1.msra.mxu0 %v3939
    %4260 = vmatprep.subr.mxu0 0.0
    %4261 = vmatpush1.msra.mxu0 %v3938
    %4262 = vmatprep.subr.mxu0 0.0
    %4263 = vmatpush1.msra.mxu0 %v3937
    %4264 = vmatprep.subr.mxu0 0.0
    %4265 = vmatpush1.msra.mxu0 %v3936
    %4266 = vmatprep.subr.mxu0 0.0
    %4267 = vmatpush1.msra.mxu0 %v3935
    %4268 = vmatprep.subr.mxu0 0.0
    %4269 = vmatpush1.msra.mxu0 %v3934
    %4270 = vmatprep.subr.mxu0 0.0
    %4271 = vmatpush1.msra.mxu0 %v3933
    %4272 = vmatprep.subr.mxu0 0.0
    %4273 = vmatpush1.msra.mxu0 %v3932
    %4274 = vmatprep.subr.mxu0 0.0
    %4275 = vmatpush1.msra.mxu0 %v3931
    %4276 = vmatprep.subr.mxu0 0.0
    %4277 = vmatpush1.msra.mxu0 %v3930
    %4278 = vmatprep.subr.mxu0 0.0
    %4279 = vmatpush2.msra.mxu0 %v3961
    %4280 = vmatprep.subr.mxu0 0.0
    %4281 = vmatpush2.msra.mxu0 %v3960
    %4282 = vmatprep.subr.mxu0 0.0
    %4283 = vmatpush2.msra.mxu0 %v3959
    %4284 = vmatprep.subr.mxu0 0.0
    %4285 = vmatpush2.msra.mxu0 %v3958
    %4286 = vmatprep.subr.mxu0 0.0
    %4287 = vmatpush2.msra.mxu0 %v3957
    %4288 = vmatprep.subr.mxu0 0.0
    %4289 = vmatpush2.msra.mxu0 %v3956
    %4290 = vmatprep.subr.mxu0 0.0
    %4291 = vmatpush2.msra.mxu0 %v3955
    %4292 = vmatprep.subr.mxu0 0.0
    %4293 = vmatpush2.msra.mxu0 %v3954
    %4294 = vmatprep.subr.mxu0 0.0
    %4295 = vmatpush2.msra.mxu0 %v3953
    %4296 = vmatprep.subr.mxu0 0.0
    %4297 = vmatpush2.msra.mxu0 %v3952
    %4298 = vmatprep.subr.mxu0 0.0
    %4299 = vmatpush2.msra.mxu0 %v3951
    %4300 = vmatprep.subr.mxu0 0.0
    %4301 = vmatpush2.msra.mxu0 %v3950
    %4302 = vmatprep.subr.mxu0 0.0
    %4303 = vmatpush2.msra.mxu0 %v3949
    %4304 = vmatprep.subr.mxu0 0.0
    %4305 = vmatpush2.msra.mxu0 %v3948
    %4306 = vmatprep.subr.mxu0 0.0
    %4307 = vmatpush2.msra.mxu0 %v3947
    %4308 = vmatprep.subr.mxu0 0.0
    %4309 = vmatpush2.msra.mxu0 %v3946
    %4310 = vmatprep.mubr.f32.mxu0 %v3629
    %4311 = vmatmul.mubr.f32.gmra.mxu0 %v3628
    %v4312 = vpop.f32.mrf.mxu0
    %v4313 = vadd.f32 %v4243, %v4312
    %v4314 = vpop.f32.mrf.mxu0
    %4315 = vdwg.mxu0
    %4316 = vmatprep.subr.mxu0 0.0
    %4317 = vmatpush1.msra.mxu0 %v3977
    %4318 = vmatprep.subr.mxu0 0.0
    %4319 = vmatpush1.msra.mxu0 %v3976
    %4320 = vmatprep.subr.mxu0 0.0
    %4321 = vmatpush1.msra.mxu0 %v3975
    %4322 = vmatprep.subr.mxu0 0.0
    %4323 = vmatpush1.msra.mxu0 %v3974
    %4324 = vmatprep.subr.mxu0 0.0
    %4325 = vmatpush1.msra.mxu0 %v3973
    %4326 = vmatprep.subr.mxu0 0.0
    %4327 = vmatpush1.msra.mxu0 %v3972
    %4328 = vmatprep.subr.mxu0 0.0
    %4329 = vmatpush1.msra.mxu0 %v3971
    %4330 = vmatprep.subr.mxu0 0.0
    %4331 = vmatpush1.msra.mxu0 %v3970
    %4332 = vmatprep.subr.mxu0 0.0
    %4333 = vmatpush1.msra.mxu0 %v3969
    %4334 = vmatprep.subr.mxu0 0.0
    %4335 = vmatpush1.msra.mxu0 %v3968
    %4336 = vmatprep.subr.mxu0 0.0
    %4337 = vmatpush1.msra.mxu0 %v3967
    %4338 = vmatprep.subr.mxu0 0.0
    %4339 = vmatpush1.msra.mxu0 %v3966
    %4340 = vmatprep.subr.mxu0 0.0
    %4341 = vmatpush1.msra.mxu0 %v3965
    %4342 = vmatprep.subr.mxu0 0.0
    %4343 = vmatpush1.msra.mxu0 %v3964
    %4344 = vmatprep.subr.mxu0 0.0
    %4345 = vmatpush1.msra.mxu0 %v3963
    %4346 = vmatprep.subr.mxu0 0.0
    %4347 = vmatpush1.msra.mxu0 %v3962
    %4348 = vmatprep.subr.mxu0 0.0
    %4349 = vmatpush2.msra.mxu0 %v3993
    %4350 = vmatprep.subr.mxu0 0.0
    %4351 = vmatpush2.msra.mxu0 %v3992
    %4352 = vmatprep.subr.mxu0 0.0
    %4353 = vmatpush2.msra.mxu0 %v3991
    %4354 = vmatprep.subr.mxu0 0.0
    %4355 = vmatpush2.msra.mxu0 %v3990
    %4356 = vmatprep.subr.mxu0 0.0
    %4357 = vmatpush2.msra.mxu0 %v3989
    %4358 = vmatprep.subr.mxu0 0.0
    %4359 = vmatpush2.msra.mxu0 %v3988
    %4360 = vmatprep.subr.mxu0 0.0
    %4361 = vmatpush2.msra.mxu0 %v3987
    %4362 = vmatprep.subr.mxu0 0.0
    %4363 = vmatpush2.msra.mxu0 %v3986
    %4364 = vmatprep.subr.mxu0 0.0
    %4365 = vmatpush2.msra.mxu0 %v3985
    %4366 = vmatprep.subr.mxu0 0.0
    %4367 = vmatpush2.msra.mxu0 %v3984
    %4368 = vmatprep.subr.mxu0 0.0
    %4369 = vmatpush2.msra.mxu0 %v3983
    %4370 = vmatprep.subr.mxu0 0.0
    %4371 = vmatpush2.msra.mxu0 %v3982
    %4372 = vmatprep.subr.mxu0 0.0
    %4373 = vmatpush2.msra.mxu0 %v3981
    %4374 = vmatprep.subr.mxu0 0.0
    %4375 = vmatpush2.msra.mxu0 %v3980
    %4376 = vmatprep.subr.mxu0 0.0
    %4377 = vmatpush2.msra.mxu0 %v3979
    %4378 = vmatprep.subr.mxu0 0.0
    %4379 = vmatpush2.msra.mxu0 %v3978
    %4380 = vmatprep.mubr.f32.mxu0 %v3631
    %4381 = vmatmul.mubr.f32.gmra.mxu0 %v3630
    %v4382 = vpop.f32.mrf.mxu0
    %v4383 = vadd.f32 %v4313, %v4382
    %v4384 = vpop.f32.mrf.mxu0
    %4385 = vdwg.mxu0
    %4386 = vmatprep.subr.mxu0 0.0
    %4387 = vmatpush1.msra.mxu0 %v4009
    %4388 = vmatprep.subr.mxu0 0.0
    %4389 = vmatpush1.msra.mxu0 %v4008
    %4390 = vmatprep.subr.mxu0 0.0
    %4391 = vmatpush1.msra.mxu0 %v4007
    %4392 = vmatprep.subr.mxu0 0.0
    %4393 = vmatpush1.msra.mxu0 %v4006
    %4394 = vmatprep.subr.mxu0 0.0
    %4395 = vmatpush1.msra.mxu0 %v4005
    %4396 = vmatprep.subr.mxu0 0.0
    %4397 = vmatpush1.msra.mxu0 %v4004
    %4398 = vmatprep.subr.mxu0 0.0
    %4399 = vmatpush1.msra.mxu0 %v4003
    %4400 = vmatprep.subr.mxu0 0.0
    %4401 = vmatpush1.msra.mxu0 %v4002
    %4402 = vmatprep.subr.mxu0 0.0
    %4403 = vmatpush1.msra.mxu0 %v4001
    %4404 = vmatprep.subr.mxu0 0.0
    %4405 = vmatpush1.msra.mxu0 %v4000
    %4406 = vmatprep.subr.mxu0 0.0
    %4407 = vmatpush1.msra.mxu0 %v3999
    %4408 = vmatprep.subr.mxu0 0.0
    %4409 = vmatpush1.msra.mxu0 %v3998
    %4410 = vmatprep.subr.mxu0 0.0
    %4411 = vmatpush1.msra.mxu0 %v3997
    %4412 = vmatprep.subr.mxu0 0.0
    %4413 = vmatpush1.msra.mxu0 %v3996
    %4414 = vmatprep.subr.mxu0 0.0
    %4415 = vmatpush1.msra.mxu0 %v3995
    %4416 = vmatprep.subr.mxu0 0.0
    %4417 = vmatpush1.msra.mxu0 %v3994
    %4418 = vmatprep.subr.mxu0 0.0
    %4419 = vmatpush2.msra.mxu0 %v4025
    %4420 = vmatprep.subr.mxu0 0.0
    %4421 = vmatpush2.msra.mxu0 %v4024
    %4422 = vmatprep.subr.mxu0 0.0
    %4423 = vmatpush2.msra.mxu0 %v4023
    %4424 = vmatprep.subr.mxu0 0.0
    %4425 = vmatpush2.msra.mxu0 %v4022
    %4426 = vmatprep.subr.mxu0 0.0
    %4427 = vmatpush2.msra.mxu0 %v4021
    %4428 = vmatprep.subr.mxu0 0.0
    %4429 = vmatpush2.msra.mxu0 %v4020
    %4430 = vmatprep.subr.mxu0 0.0
    %4431 = vmatpush2.msra.mxu0 %v4019
    %4432 = vmatprep.subr.mxu0 0.0
    %4433 = vmatpush2.msra.mxu0 %v4018
    %4434 = vmatprep.subr.mxu0 0.0
    %4435 = vmatpush2.msra.mxu0 %v4017
    %4436 = vmatprep.subr.mxu0 0.0
    %4437 = vmatpush2.msra.mxu0 %v4016
    %4438 = vmatprep.subr.mxu0 0.0
    %4439 = vmatpush2.msra.mxu0 %v4015
    %4440 = vmatprep.subr.mxu0 0.0
    %4441 = vmatpush2.msra.mxu0 %v4014
    %4442 = vmatprep.subr.mxu0 0.0
    %4443 = vmatpush2.msra.mxu0 %v4013
    %4444 = vmatprep.subr.mxu0 0.0
    %4445 = vmatpush2.msra.mxu0 %v4012
    %4446 = vmatprep.subr.mxu0 0.0
    %4447 = vmatpush2.msra.mxu0 %v4011
    %4448 = vmatprep.subr.mxu0 0.0
    %4449 = vmatpush2.msra.mxu0 %v4010
    %4450 = vmatprep.mubr.f32.mxu0 %v3633
    %4451 = vmatmul.mubr.f32.gmra.mxu0 %v3632
    %v4452 = vpop.f32.mrf.mxu0
    %v4453 = vadd.f32 %v4383, %v4452
    %v4454 = vpop.f32.mrf.mxu0
    %4455 = vdwg.mxu0
    %4456 = vmatprep.subr.mxu0 0.0
    %4457 = vmatpush1.msra.mxu0 %v4041
    %4458 = vmatprep.subr.mxu0 0.0
    %4459 = vmatpush1.msra.mxu0 %v4040
    %4460 = vmatprep.subr.mxu0 0.0
    %4461 = vmatpush1.msra.mxu0 %v4039
    %4462 = vmatprep.subr.mxu0 0.0
    %4463 = vmatpush1.msra.mxu0 %v4038
    %4464 = vmatprep.subr.mxu0 0.0
    %4465 = vmatpush1.msra.mxu0 %v4037
    %4466 = vmatprep.subr.mxu0 0.0
    %4467 = vmatpush1.msra.mxu0 %v4036
    %4468 = vmatprep.subr.mxu0 0.0
    %4469 = vmatpush1.msra.mxu0 %v4035
    %4470 = vmatprep.subr.mxu0 0.0
    %4471 = vmatpush1.msra.mxu0 %v4034
    %4472 = vmatprep.subr.mxu0 0.0
    %4473 = vmatpush1.msra.mxu0 %v4033
    %4474 = vmatprep.subr.mxu0 0.0
    %4475 = vmatpush1.msra.mxu0 %v4032
    %4476 = vmatprep.subr.mxu0 0.0
    %4477 = vmatpush1.msra.mxu0 %v4031
    %4478 = vmatprep.subr.mxu0 0.0
    %4479 = vmatpush1.msra.mxu0 %v4030
    %4480 = vmatprep.subr.mxu0 0.0
    %4481 = vmatpush1.msra.mxu0 %v4029
    %4482 = vmatprep.subr.mxu0 0.0
    %4483 = vmatpush1.msra.mxu0 %v4028
    %4484 = vmatprep.subr.mxu0 0.0
    %4485 = vmatpush1.msra.mxu0 %v4027
    %4486 = vmatprep.subr.mxu0 0.0
    %4487 = vmatpush1.msra.mxu0 %v4026
    %4488 = vmatprep.subr.mxu0 0.0
    %4489 = vmatpush2.msra.mxu0 %v4057
    %4490 = vmatprep.subr.mxu0 0.0
    %4491 = vmatpush2.msra.mxu0 %v4056
    %4492 = vmatprep.subr.mxu0 0.0
    %4493 = vmatpush2.msra.mxu0 %v4055
    %4494 = vmatprep.subr.mxu0 0.0
    %4495 = vmatpush2.msra.mxu0 %v4054
    %4496 = vmatprep.subr.mxu0 0.0
    %4497 = vmatpush2.msra.mxu0 %v4053
    %4498 = vmatprep.subr.mxu0 0.0
    %4499 = vmatpush2.msra.mxu0 %v4052
    %4500 = vmatprep.subr.mxu0 0.0
    %4501 = vmatpush2.msra.mxu0 %v4051
    %4502 = vmatprep.subr.mxu0 0.0
    %4503 = vmatpush2.msra.mxu0 %v4050
    %4504 = vmatprep.subr.mxu0 0.0
    %4505 = vmatpush2.msra.mxu0 %v4049
    %4506 = vmatprep.subr.mxu0 0.0
    %4507 = vmatpush2.msra.mxu0 %v4048
    %4508 = vmatprep.subr.mxu0 0.0
    %4509 = vmatpush2.msra.mxu0 %v4047
    %4510 = vmatprep.subr.mxu0 0.0
    %4511 = vmatpush2.msra.mxu0 %v4046
    %4512 = vmatprep.subr.mxu0 0.0
    %4513 = vmatpush2.msra.mxu0 %v4045
    %4514 = vmatprep.subr.mxu0 0.0
    %4515 = vmatpush2.msra.mxu0 %v4044
    %4516 = vmatprep.subr.mxu0 0.0
    %4517 = vmatpush2.msra.mxu0 %v4043
    %4518 = vmatprep.subr.mxu0 0.0
    %4519 = vmatpush2.msra.mxu0 %v4042
    %4520 = vmatprep.mubr.f32.mxu0 %v3635
    %4521 = vmatmul.mubr.f32.gmra.mxu0 %v3634
    %v4522 = vpop.f32.mrf.mxu0
    %v4523 = vadd.f32 %v4453, %v4522
    %v4524 = vpop.f32.mrf.mxu0
    %4525 = vdwg.mxu0
    %4526 = vmatprep.subr.mxu0 0.0
    %4527 = vmatpush1.msra.mxu0 %v4073
    %4528 = vmatprep.subr.mxu0 0.0
    %4529 = vmatpush1.msra.mxu0 %v4072
    %4530 = vmatprep.subr.mxu0 0.0
    %4531 = vmatpush1.msra.mxu0 %v4071
    %4532 = vmatprep.subr.mxu0 0.0
    %4533 = vmatpush1.msra.mxu0 %v4070
    %4534 = vmatprep.subr.mxu0 0.0
    %4535 = vmatpush1.msra.mxu0 %v4069
    %4536 = vmatprep.subr.mxu0 0.0
    %4537 = vmatpush1.msra.mxu0 %v4068
    %4538 = vmatprep.subr.mxu0 0.0
    %4539 = vmatpush1.msra.mxu0 %v4067
    %4540 = vmatprep.subr.mxu0 0.0
    %4541 = vmatpush1.msra.mxu0 %v4066
    %4542 = vmatprep.subr.mxu0 0.0
    %4543 = vmatpush1.msra.mxu0 %v4065
    %4544 = vmatprep.subr.mxu0 0.0
    %4545 = vmatpush1.msra.mxu0 %v4064
    %4546 = vmatprep.subr.mxu0 0.0
    %4547 = vmatpush1.msra.mxu0 %v4063
    %4548 = vmatprep.subr.mxu0 0.0
    %4549 = vmatpush1.msra.mxu0 %v4062
    %4550 = vmatprep.subr.mxu0 0.0
    %4551 = vmatpush1.msra.mxu0 %v4061
    %4552 = vmatprep.subr.mxu0 0.0
    %4553 = vmatpush1.msra.mxu0 %v4060
    %4554 = vmatprep.subr.mxu0 0.0
    %4555 = vmatpush1.msra.mxu0 %v4059
    %4556 = vmatprep.subr.mxu0 0.0
    %4557 = vmatpush1.msra.mxu0 %v4058
    %4558 = vmatprep.subr.mxu0 0.0
    %4559 = vmatpush2.msra.mxu0 %v4089
    %4560 = vmatprep.subr.mxu0 0.0
    %4561 = vmatpush2.msra.mxu0 %v4088
    %4562 = vmatprep.subr.mxu0 0.0
    %4563 = vmatpush2.msra.mxu0 %v4087
    %4564 = vmatprep.subr.mxu0 0.0
    %4565 = vmatpush2.msra.mxu0 %v4086
    %4566 = vmatprep.subr.mxu0 0.0
    %4567 = vmatpush2.msra.mxu0 %v4085
    %4568 = vmatprep.subr.mxu0 0.0
    %4569 = vmatpush2.msra.mxu0 %v4084
    %4570 = vmatprep.subr.mxu0 0.0
    %4571 = vmatpush2.msra.mxu0 %v4083
    %4572 = vmatprep.subr.mxu0 0.0
    %4573 = vmatpush2.msra.mxu0 %v4082
    %4574 = vmatprep.subr.mxu0 0.0
    %4575 = vmatpush2.msra.mxu0 %v4081
    %4576 = vmatprep.subr.mxu0 0.0
    %4577 = vmatpush2.msra.mxu0 %v4080
    %4578 = vmatprep.subr.mxu0 0.0
    %4579 = vmatpush2.msra.mxu0 %v4079
    %4580 = vmatprep.subr.mxu0 0.0
    %4581 = vmatpush2.msra.mxu0 %v4078
    %4582 = vmatprep.subr.mxu0 0.0
    %4583 = vmatpush2.msra.mxu0 %v4077
    %4584 = vmatprep.subr.mxu0 0.0
    %4585 = vmatpush2.msra.mxu0 %v4076
    %4586 = vmatprep.subr.mxu0 0.0
    %4587 = vmatpush2.msra.mxu0 %v4075
    %4588 = vmatprep.subr.mxu0 0.0
    %4589 = vmatpush2.msra.mxu0 %v4074
    %4590 = vmatprep.mubr.f32.mxu0 %v3637
    %4591 = vmatmul.mubr.f32.gmra.mxu0 %v3636
    %v4592 = vpop.f32.mrf.mxu0
    %v4593 = vadd.f32 %v4523, %v4592
    %v4594 = vpop.f32.mrf.mxu0
    %4595 = vdwg.mxu0
    %4596 = vmatprep.subr.mxu0 0.0
    %4597 = vmatpush1.msra.mxu0 %v4105
    %4598 = vmatprep.subr.mxu0 0.0
    %4599 = vmatpush1.msra.mxu0 %v4104
    %4600 = vmatprep.subr.mxu0 0.0
    %4601 = vmatpush1.msra.mxu0 %v4103
    %4602 = vmatprep.subr.mxu0 0.0
    %4603 = vmatpush1.msra.mxu0 %v4102
    %4604 = vmatprep.subr.mxu0 0.0
    %4605 = vmatpush1.msra.mxu0 %v4101
    %4606 = vmatprep.subr.mxu0 0.0
    %4607 = vmatpush1.msra.mxu0 %v4100
    %4608 = vmatprep.subr.mxu0 0.0
    %4609 = vmatpush1.msra.mxu0 %v4099
    %4610 = vmatprep.subr.mxu0 0.0
    %4611 = vmatpush1.msra.mxu0 %v4098
    %4612 = vmatprep.subr.mxu0 0.0
    %4613 = vmatpush1.msra.mxu0 %v4097
    %4614 = vmatprep.subr.mxu0 0.0
    %4615 = vmatpush1.msra.mxu0 %v4096
    %4616 = vmatprep.subr.mxu0 0.0
    %4617 = vmatpush1.msra.mxu0 %v4095
    %4618 = vmatprep.subr.mxu0 0.0
    %4619 = vmatpush1.msra.mxu0 %v4094
    %4620 = vmatprep.subr.mxu0 0.0
    %4621 = vmatpush1.msra.mxu0 %v4093
    %4622 = vmatprep.subr.mxu0 0.0
    %4623 = vmatpush1.msra.mxu0 %v4092
    %4624 = vmatprep.subr.mxu0 0.0
    %4625 = vmatpush1.msra.mxu0 %v4091
    %4626 = vmatprep.subr.mxu0 0.0
    %4627 = vmatpush1.msra.mxu0 %v4090
    %4628 = vmatprep.subr.mxu0 0.0
    %4629 = vmatpush2.msra.mxu0 %v4121
    %4630 = vmatprep.subr.mxu0 0.0
    %4631 = vmatpush2.msra.mxu0 %v4120
    %4632 = vmatprep.subr.mxu0 0.0
    %4633 = vmatpush2.msra.mxu0 %v4119
    %4634 = vmatprep.subr.mxu0 0.0
    %4635 = vmatpush2.msra.mxu0 %v4118
    %4636 = vmatprep.subr.mxu0 0.0
    %4637 = vmatpush2.msra.mxu0 %v4117
    %4638 = vmatprep.subr.mxu0 0.0
    %4639 = vmatpush2.msra.mxu0 %v4116
    %4640 = vmatprep.subr.mxu0 0.0
    %4641 = vmatpush2.msra.mxu0 %v4115
    %4642 = vmatprep.subr.mxu0 0.0
    %4643 = vmatpush2.msra.mxu0 %v4114
    %4644 = vmatprep.subr.mxu0 0.0
    %4645 = vmatpush2.msra.mxu0 %v4113
    %4646 = vmatprep.subr.mxu0 0.0
    %4647 = vmatpush2.msra.mxu0 %v4112
    %4648 = vmatprep.subr.mxu0 0.0
    %4649 = vmatpush2.msra.mxu0 %v4111
    %4650 = vmatprep.subr.mxu0 0.0
    %4651 = vmatpush2.msra.mxu0 %v4110
    %4652 = vmatprep.subr.mxu0 0.0
    %4653 = vmatpush2.msra.mxu0 %v4109
    %4654 = vmatprep.subr.mxu0 0.0
    %4655 = vmatpush2.msra.mxu0 %v4108
    %4656 = vmatprep.subr.mxu0 0.0
    %4657 = vmatpush2.msra.mxu0 %v4107
    %4658 = vmatprep.subr.mxu0 0.0
    %4659 = vmatpush2.msra.mxu0 %v4106
    %4660 = vmatprep.mubr.f32.mxu0 %v3639
    %4661 = vmatmul.mubr.f32.gmra.mxu0 %v3638
    %v4662 = vpop.f32.mrf.mxu0
    %v4663 = vadd.f32 %v4593, %v4662
    %v4664 = vpop.f32.mrf.mxu0
    %4665 = vdwg.mxu0
    %4666 = vmatprep.subr.mxu0 0.0
    %4667 = vmatpush1.msra.mxu0 %v4137
    %4668 = vmatprep.subr.mxu0 0.0
    %4669 = vmatpush1.msra.mxu0 %v4136
    %4670 = vmatprep.subr.mxu0 0.0
    %4671 = vmatpush1.msra.mxu0 %v4135
    %4672 = vmatprep.subr.mxu0 0.0
    %4673 = vmatpush1.msra.mxu0 %v4134
    %4674 = vmatprep.subr.mxu0 0.0
    %4675 = vmatpush1.msra.mxu0 %v4133
    %4676 = vmatprep.subr.mxu0 0.0
    %4677 = vmatpush1.msra.mxu0 %v4132
    %4678 = vmatprep.subr.mxu0 0.0
    %4679 = vmatpush1.msra.mxu0 %v4131
    %4680 = vmatprep.subr.mxu0 0.0
    %4681 = vmatpush1.msra.mxu0 %v4130
    %4682 = vmatprep.subr.mxu0 0.0
    %4683 = vmatpush1.msra.mxu0 %v4129
    %4684 = vmatprep.subr.mxu0 0.0
    %4685 = vmatpush1.msra.mxu0 %v4128
    %4686 = vmatprep.subr.mxu0 0.0
    %4687 = vmatpush1.msra.mxu0 %v4127
    %4688 = vmatprep.subr.mxu0 0.0
    %4689 = vmatpush1.msra.mxu0 %v4126
    %4690 = vmatprep.subr.mxu0 0.0
    %4691 = vmatpush1.msra.mxu0 %v4125
    %4692 = vmatprep.subr.mxu0 0.0
    %4693 = vmatpush1.msra.mxu0 %v4124
    %4694 = vmatprep.subr.mxu0 0.0
    %4695 = vmatpush1.msra.mxu0 %v4123
    %4696 = vmatprep.subr.mxu0 0.0
    %4697 = vmatpush1.msra.mxu0 %v4122
    %4698 = vmatprep.subr.mxu0 0.0
    %4699 = vmatpush2.msra.mxu0 %v4153
    %4700 = vmatprep.subr.mxu0 0.0
    %4701 = vmatpush2.msra.mxu0 %v4152
    %4702 = vmatprep.subr.mxu0 0.0
    %4703 = vmatpush2.msra.mxu0 %v4151
    %4704 = vmatprep.subr.mxu0 0.0
    %4705 = vmatpush2.msra.mxu0 %v4150
    %4706 = vmatprep.subr.mxu0 0.0
    %4707 = vmatpush2.msra.mxu0 %v4149
    %4708 = vmatprep.subr.mxu0 0.0
    %4709 = vmatpush2.msra.mxu0 %v4148
    %4710 = vmatprep.subr.mxu0 0.0
    %4711 = vmatpush2.msra.mxu0 %v4147
    %4712 = vmatprep.subr.mxu0 0.0
    %4713 = vmatpush2.msra.mxu0 %v4146
    %4714 = vmatprep.subr.mxu0 0.0
    %4715 = vmatpush2.msra.mxu0 %v4145
    %4716 = vmatprep.subr.mxu0 0.0
    %4717 = vmatpush2.msra.mxu0 %v4144
    %4718 = vmatprep.subr.mxu0 0.0
    %4719 = vmatpush2.msra.mxu0 %v4143
    %4720 = vmatprep.subr.mxu0 0.0
    %4721 = vmatpush2.msra.mxu0 %v4142
    %4722 = vmatprep.subr.mxu0 0.0
    %4723 = vmatpush2.msra.mxu0 %v4141
    %4724 = vmatprep.subr.mxu0 0.0
    %4725 = vmatpush2.msra.mxu0 %v4140
    %4726 = vmatprep.subr.mxu0 0.0
    %4727 = vmatpush2.msra.mxu0 %v4139
    %4728 = vmatprep.subr.mxu0 0.0
    %4729 = vmatpush2.msra.mxu0 %v4138
    %4730 = vmatprep.mubr.f32.mxu0 %v3641
    %4731 = vmatmul.mubr.f32.gmra.mxu0 %v3640
    %v4732 = vpop.f32.mrf.mxu0
    %v4733 = vadd.f32 %v4663, %v4732
    %v4734 = vpop.f32.mrf.mxu0
    %4735 = vdwg.mxu0
    %v4736 = vadd.f32 %v4175, %v4733
    %vm4737 = vcmask 31744
    %4738 = vst.msk [vmem:[#allocation5] sm:$0xff] %vm4737, %v4736
    %v4739 = vld [vmem:[#allocation6] sm:$0xff]
    %v4740 = vmul.f32 %v3898, %v3898
    %v4741 = vmul.f32 %v3899, %v3899
    %v4742 = vmul.f32 %v3900, %v3900
    %v4743 = vmul.f32 %v3901, %v3901
    %v4744 = vmul.f32 %v3902, %v3902
    %v4745 = vmul.f32 %v3903, %v3903
    %v4746 = vmul.f32 %v3904, %v3904
    %v4747 = vmul.f32 %v3905, %v3905
    %v4748 = vmul.f32 %v3906, %v3906
    %v4749 = vmul.f32 %v3907, %v3907
    %v4750 = vmul.f32 %v3908, %v3908
    %v4751 = vmul.f32 %v3909, %v3909
    %v4752 = vmul.f32 %v3910, %v3910
    %v4753 = vmul.f32 %v3911, %v3911
    %v4754 = vmul.f32 %v3912, %v3912
    %v4755 = vmul.f32 %v3913, %v3913
    %v4756 = vmul.f32 %v3914, %v3914
    %v4757 = vmul.f32 %v3915, %v3915
    %v4758 = vmul.f32 %v3916, %v3916
    %v4759 = vmul.f32 %v3917, %v3917
    %v4760 = vmul.f32 %v3918, %v3918
    %v4761 = vmul.f32 %v3919, %v3919
    %v4762 = vmul.f32 %v3920, %v3920
    %v4763 = vmul.f32 %v3921, %v3921
    %v4764 = vmul.f32 %v3922, %v3922
    %v4765 = vmul.f32 %v3923, %v3923
    %v4766 = vmul.f32 %v3924, %v3924
    %v4767 = vmul.f32 %v3925, %v3925
    %v4768 = vmul.f32 %v3926, %v3926
    %v4769 = vmul.f32 %v3927, %v3927
    %v4770 = vmul.f32 %v3928, %v3928
    %v4771 = vmul.f32 %v3929, %v3929
    %v4772 = vmul.f32 %v3930, %v3930
    %v4773 = vmul.f32 %v3931, %v3931
    %v4774 = vmul.f32 %v3932, %v3932
    %v4775 = vmul.f32 %v3933, %v3933
    %v4776 = vmul.f32 %v3934, %v3934
    %v4777 = vmul.f32 %v3935, %v3935
    %v4778 = vmul.f32 %v3936, %v3936
    %v4779 = vmul.f32 %v3937, %v3937
    %v4780 = vmul.f32 %v3938, %v3938
    %v4781 = vmul.f32 %v3939, %v3939
    %v4782 = vmul.f32 %v3940, %v3940
    %v4783 = vmul.f32 %v3941, %v3941
    %v4784 = vmul.f32 %v3942, %v3942
    %v4785 = vmul.f32 %v3943, %v3943
    %v4786 = vmul.f32 %v3944, %v3944
    %v4787 = vmul.f32 %v3945, %v3945
    %v4788 = vmul.f32 %v3946, %v3946
    %v4789 = vmul.f32 %v3947, %v3947
    %v4790 = vmul.f32 %v3948, %v3948
    %v4791 = vmul.f32 %v3949, %v3949
    %v4792 = vmul.f32 %v3950, %v3950
    %v4793 = vmul.f32 %v3951, %v3951
    %v4794 = vmul.f32 %v3952, %v3952
    %v4795 = vmul.f32 %v3953, %v3953
    %v4796 = vmul.f32 %v3954, %v3954
    %v4797 = vmul.f32 %v3955, %v3955
    %v4798 = vmul.f32 %v3956, %v3956
    %v4799 = vmul.f32 %v3957, %v3957
    %v4800 = vmul.f32 %v3958, %v3958
    %v4801 = vmul.f32 %v3959, %v3959
    %v4802 = vmul.f32 %v3960, %v3960
    %v4803 = vmul.f32 %v3961, %v3961
    %v4804 = vmul.f32 %v3962, %v3962
    %v4805 = vmul.f32 %v3963, %v3963
    %v4806 = vmul.f32 %v3964, %v3964
    %v4807 = vmul.f32 %v3965, %v3965
    %v4808 = vmul.f32 %v3966, %v3966
    %v4809 = vmul.f32 %v3967, %v3967
    %v4810 = vmul.f32 %v3968, %v3968
    %v4811 = vmul.f32 %v3969, %v3969
    %v4812 = vmul.f32 %v3970, %v3970
    %v4813 = vmul.f32 %v3971, %v3971
    %v4814 = vmul.f32 %v3972, %v3972
    %v4815 = vmul.f32 %v3973, %v3973
    %v4816 = vmul.f32 %v3974, %v3974
    %v4817 = vmul.f32 %v3975, %v3975
    %v4818 = vmul.f32 %v3976, %v3976
    %v4819 = vmul.f32 %v3977, %v3977
    %v4820 = vmul.f32 %v3978, %v3978
    %v4821 = vmul.f32 %v3979, %v3979
    %v4822 = vmul.f32 %v3980, %v3980
    %v4823 = vmul.f32 %v3981, %v3981
    %v4824 = vmul.f32 %v3982, %v3982
    %v4825 = vmul.f32 %v3983, %v3983
    %v4826 = vmul.f32 %v3984, %v3984
    %v4827 = vmul.f32 %v3985, %v3985
    %v4828 = vmul.f32 %v3986, %v3986
    %v4829 = vmul.f32 %v3987, %v3987
    %v4830 = vmul.f32 %v3988, %v3988
    %v4831 = vmul.f32 %v3989, %v3989
    %v4832 = vmul.f32 %v3990, %v3990
    %v4833 = vmul.f32 %v3991, %v3991
    %v4834 = vmul.f32 %v3992, %v3992
    %v4835 = vmul.f32 %v3993, %v3993
    %v4836 = vmul.f32 %v3994, %v3994
    %v4837 = vmul.f32 %v3995, %v3995
    %v4838 = vmul.f32 %v3996, %v3996
    %v4839 = vmul.f32 %v3997, %v3997
    %v4840 = vmul.f32 %v3998, %v3998
    %v4841 = vmul.f32 %v3999, %v3999
    %v4842 = vmul.f32 %v4000, %v4000
    %v4843 = vmul.f32 %v4001, %v4001
    %v4844 = vmul.f32 %v4002, %v4002
    %v4845 = vmul.f32 %v4003, %v4003
    %v4846 = vmul.f32 %v4004, %v4004
    %v4847 = vmul.f32 %v4005, %v4005
    %v4848 = vmul.f32 %v4006, %v4006
    %v4849 = vmul.f32 %v4007, %v4007
    %v4850 = vmul.f32 %v4008, %v4008
    %v4851 = vmul.f32 %v4009, %v4009
    %v4852 = vmul.f32 %v4010, %v4010
    %v4853 = vmul.f32 %v4011, %v4011
    %v4854 = vmul.f32 %v4012, %v4012
    %v4855 = vmul.f32 %v4013, %v4013
    %v4856 = vmul.f32 %v4014, %v4014
    %v4857 = vmul.f32 %v4015, %v4015
    %v4858 = vmul.f32 %v4016, %v4016
    %v4859 = vmul.f32 %v4017, %v4017
    %v4860 = vmul.f32 %v4018, %v4018
    %v4861 = vmul.f32 %v4019, %v4019
    %v4862 = vmul.f32 %v4020, %v4020
    %v4863 = vmul.f32 %v4021, %v4021
    %v4864 = vmul.f32 %v4022, %v4022
    %v4865 = vmul.f32 %v4023, %v4023
    %v4866 = vmul.f32 %v4024, %v4024
    %v4867 = vmul.f32 %v4025, %v4025
    %v4868 = vmul.f32 %v4026, %v4026
    %v4869 = vmul.f32 %v4027, %v4027
    %v4870 = vmul.f32 %v4028, %v4028
    %v4871 = vmul.f32 %v4029, %v4029
    %v4872 = vmul.f32 %v4030, %v4030
    %v4873 = vmul.f32 %v4031, %v4031
    %v4874 = vmul.f32 %v4032, %v4032
    %v4875 = vmul.f32 %v4033, %v4033
    %v4876 = vmul.f32 %v4034, %v4034
    %v4877 = vmul.f32 %v4035, %v4035
    %v4878 = vmul.f32 %v4036, %v4036
    %v4879 = vmul.f32 %v4037, %v4037
    %v4880 = vmul.f32 %v4038, %v4038
    %v4881 = vmul.f32 %v4039, %v4039
    %v4882 = vmul.f32 %v4040, %v4040
    %v4883 = vmul.f32 %v4041, %v4041
    %v4884 = vmul.f32 %v4042, %v4042
    %v4885 = vmul.f32 %v4043, %v4043
    %v4886 = vmul.f32 %v4044, %v4044
    %v4887 = vmul.f32 %v4045, %v4045
    %v4888 = vmul.f32 %v4046, %v4046
    %v4889 = vmul.f32 %v4047, %v4047
    %v4890 = vmul.f32 %v4048, %v4048
    %v4891 = vmul.f32 %v4049, %v4049
    %v4892 = vmul.f32 %v4050, %v4050
    %v4893 = vmul.f32 %v4051, %v4051
    %v4894 = vmul.f32 %v4052, %v4052
    %v4895 = vmul.f32 %v4053, %v4053
    %v4896 = vmul.f32 %v4054, %v4054
    %v4897 = vmul.f32 %v4055, %v4055
    %v4898 = vmul.f32 %v4056, %v4056
    %v4899 = vmul.f32 %v4057, %v4057
    %v4900 = vmul.f32 %v4058, %v4058
    %v4901 = vmul.f32 %v4059, %v4059
    %v4902 = vmul.f32 %v4060, %v4060
    %v4903 = vmul.f32 %v4061, %v4061
    %v4904 = vmul.f32 %v4062, %v4062
    %v4905 = vmul.f32 %v4063, %v4063
    %v4906 = vmul.f32 %v4064, %v4064
    %v4907 = vmul.f32 %v4065, %v4065
    %v4908 = vmul.f32 %v4066, %v4066
    %v4909 = vmul.f32 %v4067, %v4067
    %v4910 = vmul.f32 %v4068, %v4068
    %v4911 = vmul.f32 %v4069, %v4069
    %v4912 = vmul.f32 %v4070, %v4070
    %v4913 = vmul.f32 %v4071, %v4071
    %v4914 = vmul.f32 %v4072, %v4072
    %v4915 = vmul.f32 %v4073, %v4073
    %v4916 = vmul.f32 %v4074, %v4074
    %v4917 = vmul.f32 %v4075, %v4075
    %v4918 = vmul.f32 %v4076, %v4076
    %v4919 = vmul.f32 %v4077, %v4077
    %v4920 = vmul.f32 %v4078, %v4078
    %v4921 = vmul.f32 %v4079, %v4079
    %v4922 = vmul.f32 %v4080, %v4080
    %v4923 = vmul.f32 %v4081, %v4081
    %v4924 = vmul.f32 %v4082, %v4082
    %v4925 = vmul.f32 %v4083, %v4083
    %v4926 = vmul.f32 %v4084, %v4084
    %v4927 = vmul.f32 %v4085, %v4085
    %v4928 = vmul.f32 %v4086, %v4086
    %v4929 = vmul.f32 %v4087, %v4087
    %v4930 = vmul.f32 %v4088, %v4088
    %v4931 = vmul.f32 %v4089, %v4089
    %v4932 = vmul.f32 %v4090, %v4090
    %v4933 = vmul.f32 %v4091, %v4091
    %v4934 = vmul.f32 %v4092, %v4092
    %v4935 = vmul.f32 %v4093, %v4093
    %v4936 = vmul.f32 %v4094, %v4094
    %v4937 = vmul.f32 %v4095, %v4095
    %v4938 = vmul.f32 %v4096, %v4096
    %v4939 = vmul.f32 %v4097, %v4097
    %v4940 = vmul.f32 %v4098, %v4098
    %v4941 = vmul.f32 %v4099, %v4099
    %v4942 = vmul.f32 %v4100, %v4100
    %v4943 = vmul.f32 %v4101, %v4101
    %v4944 = vmul.f32 %v4102, %v4102
    %v4945 = vmul.f32 %v4103, %v4103
    %v4946 = vmul.f32 %v4104, %v4104
    %v4947 = vmul.f32 %v4105, %v4105
    %v4948 = vmul.f32 %v4106, %v4106
    %v4949 = vmul.f32 %v4107, %v4107
    %v4950 = vmul.f32 %v4108, %v4108
    %v4951 = vmul.f32 %v4109, %v4109
    %v4952 = vmul.f32 %v4110, %v4110
    %v4953 = vmul.f32 %v4111, %v4111
    %v4954 = vmul.f32 %v4112, %v4112
    %v4955 = vmul.f32 %v4113, %v4113
    %v4956 = vmul.f32 %v4114, %v4114
    %v4957 = vmul.f32 %v4115, %v4115
    %v4958 = vmul.f32 %v4116, %v4116
    %v4959 = vmul.f32 %v4117, %v4117
    %v4960 = vmul.f32 %v4118, %v4118
    %v4961 = vmul.f32 %v4119, %v4119
    %v4962 = vmul.f32 %v4120, %v4120
    %v4963 = vmul.f32 %v4121, %v4121
    %v4964 = vmul.f32 %v4122, %v4122
    %v4965 = vmul.f32 %v4123, %v4123
    %v4966 = vmul.f32 %v4124, %v4124
    %v4967 = vmul.f32 %v4125, %v4125
    %v4968 = vmul.f32 %v4126, %v4126
    %v4969 = vmul.f32 %v4127, %v4127
    %v4970 = vmul.f32 %v4128, %v4128
    %v4971 = vmul.f32 %v4129, %v4129
    %v4972 = vmul.f32 %v4130, %v4130
    %v4973 = vmul.f32 %v4131, %v4131
    %v4974 = vmul.f32 %v4132, %v4132
    %v4975 = vmul.f32 %v4133, %v4133
    %v4976 = vmul.f32 %v4134, %v4134
    %v4977 = vmul.f32 %v4135, %v4135
    %v4978 = vmul.f32 %v4136, %v4136
    %v4979 = vmul.f32 %v4137, %v4137
    %v4980 = vmul.f32 %v4138, %v4138
    %v4981 = vmul.f32 %v4139, %v4139
    %v4982 = vmul.f32 %v4140, %v4140
    %v4983 = vmul.f32 %v4141, %v4141
    %v4984 = vmul.f32 %v4142, %v4142
    %v4985 = vmul.f32 %v4143, %v4143
    %v4986 = vmul.f32 %v4144, %v4144
    %v4987 = vmul.f32 %v4145, %v4145
    %v4988 = vmul.f32 %v4146, %v4146
    %v4989 = vmul.f32 %v4147, %v4147
    %v4990 = vmul.f32 %v4148, %v4148
    %v4991 = vmul.f32 %v4149, %v4149
    %v4992 = vmul.f32 %v4150, %v4150
    %v4993 = vmul.f32 %v4151, %v4151
    %v4994 = vmul.f32 %v4152, %v4152
    %v4995 = vmul.f32 %v4153, %v4153
    %4996 = vmatprep.subr.mxu0 0.0
    %4997 = vmatpush1.msra.mxu0 %v4755
    %4998 = vmatprep.subr.mxu0 0.0
    %4999 = vmatpush1.msra.mxu0 %v4754
    %5000 = vmatprep.subr.mxu0 0.0
    %5001 = vmatpush1.msra.mxu0 %v4753
    %5002 = vmatprep.subr.mxu0 0.0
    %5003 = vmatpush1.msra.mxu0 %v4752
    %5004 = vmatprep.subr.mxu0 0.0
    %5005 = vmatpush1.msra.mxu0 %v4751
    %5006 = vmatprep.subr.mxu0 0.0
    %5007 = vmatpush1.msra.mxu0 %v4750
    %5008 = vmatprep.subr.mxu0 0.0
    %5009 = vmatpush1.msra.mxu0 %v4749
    %5010 = vmatprep.subr.mxu0 0.0
    %5011 = vmatpush1.msra.mxu0 %v4748
    %5012 = vmatprep.subr.mxu0 0.0
    %5013 = vmatpush1.msra.mxu0 %v4747
    %5014 = vmatprep.subr.mxu0 0.0
    %5015 = vmatpush1.msra.mxu0 %v4746
    %5016 = vmatprep.subr.mxu0 0.0
    %5017 = vmatpush1.msra.mxu0 %v4745
    %5018 = vmatprep.subr.mxu0 0.0
    %5019 = vmatpush1.msra.mxu0 %v4744
    %5020 = vmatprep.subr.mxu0 0.0
    %5021 = vmatpush1.msra.mxu0 %v4743
    %5022 = vmatprep.subr.mxu0 0.0
    %5023 = vmatpush1.msra.mxu0 %v4742
    %5024 = vmatprep.subr.mxu0 0.0
    %5025 = vmatpush1.msra.mxu0 %v4741
    %5026 = vmatprep.subr.mxu0 0.0
    %5027 = vmatpush1.msra.mxu0 %v4740
    %5028 = vmatprep.subr.mxu0 0.0
    %5029 = vmatpush2.msra.mxu0 %v4771
    %5030 = vmatprep.subr.mxu0 0.0
    %5031 = vmatpush2.msra.mxu0 %v4770
    %5032 = vmatprep.subr.mxu0 0.0
    %5033 = vmatpush2.msra.mxu0 %v4769
    %5034 = vmatprep.subr.mxu0 0.0
    %5035 = vmatpush2.msra.mxu0 %v4768
    %5036 = vmatprep.subr.mxu0 0.0
    %5037 = vmatpush2.msra.mxu0 %v4767
    %5038 = vmatprep.subr.mxu0 0.0
    %5039 = vmatpush2.msra.mxu0 %v4766
    %5040 = vmatprep.subr.mxu0 0.0
    %5041 = vmatpush2.msra.mxu0 %v4765
    %5042 = vmatprep.subr.mxu0 0.0
    %5043 = vmatpush2.msra.mxu0 %v4764
    %5044 = vmatprep.subr.mxu0 0.0
    %5045 = vmatpush2.msra.mxu0 %v4763
    %5046 = vmatprep.subr.mxu0 0.0
    %5047 = vmatpush2.msra.mxu0 %v4762
    %5048 = vmatprep.subr.mxu0 0.0
    %5049 = vmatpush2.msra.mxu0 %v4761
    %5050 = vmatprep.subr.mxu0 0.0
    %5051 = vmatpush2.msra.mxu0 %v4760
    %5052 = vmatprep.subr.mxu0 0.0
    %5053 = vmatpush2.msra.mxu0 %v4759
    %5054 = vmatprep.subr.mxu0 0.0
    %5055 = vmatpush2.msra.mxu0 %v4758
    %5056 = vmatprep.subr.mxu0 0.0
    %5057 = vmatpush2.msra.mxu0 %v4757
    %5058 = vmatprep.subr.mxu0 0.0
    %5059 = vmatpush2.msra.mxu0 %v4756
    %5060 = vmatprep.mubr.f32.mxu0 %v3627
    %5061 = vmatmul.mubr.f32.gmra.mxu0 %v3626
    %v5062 = vpop.f32.mrf.mxu0
    %v5063 = vadd.f32 0.0, %v5062
    %v5064 = vpop.f32.mrf.mxu0
    %5065 = vdwg.mxu0
    %5066 = vmatprep.subr.mxu0 0.0
    %5067 = vmatpush1.msra.mxu0 %v4787
    %5068 = vmatprep.subr.mxu0 0.0
    %5069 = vmatpush1.msra.mxu0 %v4786
    %5070 = vmatprep.subr.mxu0 0.0
    %5071 = vmatpush1.msra.mxu0 %v4785
    %5072 = vmatprep.subr.mxu0 0.0
    %5073 = vmatpush1.msra.mxu0 %v4784
    %5074 = vmatprep.subr.mxu0 0.0
    %5075 = vmatpush1.msra.mxu0 %v4783
    %5076 = vmatprep.subr.mxu0 0.0
    %5077 = vmatpush1.msra.mxu0 %v4782
    %5078 = vmatprep.subr.mxu0 0.0
    %5079 = vmatpush1.msra.mxu0 %v4781
    %5080 = vmatprep.subr.mxu0 0.0
    %5081 = vmatpush1.msra.mxu0 %v4780
    %5082 = vmatprep.subr.mxu0 0.0
    %5083 = vmatpush1.msra.mxu0 %v4779
    %5084 = vmatprep.subr.mxu0 0.0
    %5085 = vmatpush1.msra.mxu0 %v4778
    %5086 = vmatprep.subr.mxu0 0.0
    %5087 = vmatpush1.msra.mxu0 %v4777
    %5088 = vmatprep.subr.mxu0 0.0
    %5089 = vmatpush1.msra.mxu0 %v4776
    %5090 = vmatprep.subr.mxu0 0.0
    %5091 = vmatpush1.msra.mxu0 %v4775
    %5092 = vmatprep.subr.mxu0 0.0
    %5093 = vmatpush1.msra.mxu0 %v4774
    %5094 = vmatprep.subr.mxu0 0.0
    %5095 = vmatpush1.msra.mxu0 %v4773
    %5096 = vmatprep.subr.mxu0 0.0
    %5097 = vmatpush1.msra.mxu0 %v4772
    %5098 = vmatprep.subr.mxu0 0.0
    %5099 = vmatpush2.msra.mxu0 %v4803
    %5100 = vmatprep.subr.mxu0 0.0
    %5101 = vmatpush2.msra.mxu0 %v4802
    %5102 = vmatprep.subr.mxu0 0.0
    %5103 = vmatpush2.msra.mxu0 %v4801
    %5104 = vmatprep.subr.mxu0 0.0
    %5105 = vmatpush2.msra.mxu0 %v4800
    %5106 = vmatprep.subr.mxu0 0.0
    %5107 = vmatpush2.msra.mxu0 %v4799
    %5108 = vmatprep.subr.mxu0 0.0
    %5109 = vmatpush2.msra.mxu0 %v4798
    %5110 = vmatprep.subr.mxu0 0.0
    %5111 = vmatpush2.msra.mxu0 %v4797
    %5112 = vmatprep.subr.mxu0 0.0
    %5113 = vmatpush2.msra.mxu0 %v4796
    %5114 = vmatprep.subr.mxu0 0.0
    %5115 = vmatpush2.msra.mxu0 %v4795
    %5116 = vmatprep.subr.mxu0 0.0
    %5117 = vmatpush2.msra.mxu0 %v4794
    %5118 = vmatprep.subr.mxu0 0.0
    %5119 = vmatpush2.msra.mxu0 %v4793
    %5120 = vmatprep.subr.mxu0 0.0
    %5121 = vmatpush2.msra.mxu0 %v4792
    %5122 = vmatprep.subr.mxu0 0.0
    %5123 = vmatpush2.msra.mxu0 %v4791
    %5124 = vmatprep.subr.mxu0 0.0
    %5125 = vmatpush2.msra.mxu0 %v4790
    %5126 = vmatprep.subr.mxu0 0.0
    %5127 = vmatpush2.msra.mxu0 %v4789
    %5128 = vmatprep.subr.mxu0 0.0
    %5129 = vmatpush2.msra.mxu0 %v4788
    %5130 = vmatprep.mubr.f32.mxu0 %v3629
    %5131 = vmatmul.mubr.f32.gmra.mxu0 %v3628
    %v5132 = vpop.f32.mrf.mxu0
    %v5133 = vadd.f32 %v5063, %v5132
    %v5134 = vpop.f32.mrf.mxu0
    %5135 = vdwg.mxu0
    %5136 = vmatprep.subr.mxu0 0.0
    %5137 = vmatpush1.msra.mxu0 %v4819
    %5138 = vmatprep.subr.mxu0 0.0
    %5139 = vmatpush1.msra.mxu0 %v4818
    %5140 = vmatprep.subr.mxu0 0.0
    %5141 = vmatpush1.msra.mxu0 %v4817
    %5142 = vmatprep.subr.mxu0 0.0
    %5143 = vmatpush1.msra.mxu0 %v4816
    %5144 = vmatprep.subr.mxu0 0.0
    %5145 = vmatpush1.msra.mxu0 %v4815
    %5146 = vmatprep.subr.mxu0 0.0
    %5147 = vmatpush1.msra.mxu0 %v4814
    %5148 = vmatprep.subr.mxu0 0.0
    %5149 = vmatpush1.msra.mxu0 %v4813
    %5150 = vmatprep.subr.mxu0 0.0
    %5151 = vmatpush1.msra.mxu0 %v4812
    %5152 = vmatprep.subr.mxu0 0.0
    %5153 = vmatpush1.msra.mxu0 %v4811
    %5154 = vmatprep.subr.mxu0 0.0
    %5155 = vmatpush1.msra.mxu0 %v4810
    %5156 = vmatprep.subr.mxu0 0.0
    %5157 = vmatpush1.msra.mxu0 %v4809
    %5158 = vmatprep.subr.mxu0 0.0
    %5159 = vmatpush1.msra.mxu0 %v4808
    %5160 = vmatprep.subr.mxu0 0.0
    %5161 = vmatpush1.msra.mxu0 %v4807
    %5162 = vmatprep.subr.mxu0 0.0
    %5163 = vmatpush1.msra.mxu0 %v4806
    %5164 = vmatprep.subr.mxu0 0.0
    %5165 = vmatpush1.msra.mxu0 %v4805
    %5166 = vmatprep.subr.mxu0 0.0
    %5167 = vmatpush1.msra.mxu0 %v4804
    %5168 = vmatprep.subr.mxu0 0.0
    %5169 = vmatpush2.msra.mxu0 %v4835
    %5170 = vmatprep.subr.mxu0 0.0
    %5171 = vmatpush2.msra.mxu0 %v4834
    %5172 = vmatprep.subr.mxu0 0.0
    %5173 = vmatpush2.msra.mxu0 %v4833
    %5174 = vmatprep.subr.mxu0 0.0
    %5175 = vmatpush2.msra.mxu0 %v4832
    %5176 = vmatprep.subr.mxu0 0.0
    %5177 = vmatpush2.msra.mxu0 %v4831
    %5178 = vmatprep.subr.mxu0 0.0
    %5179 = vmatpush2.msra.mxu0 %v4830
    %5180 = vmatprep.subr.mxu0 0.0
    %5181 = vmatpush2.msra.mxu0 %v4829
    %5182 = vmatprep.subr.mxu0 0.0
    %5183 = vmatpush2.msra.mxu0 %v4828
    %5184 = vmatprep.subr.mxu0 0.0
    %5185 = vmatpush2.msra.mxu0 %v4827
    %5186 = vmatprep.subr.mxu0 0.0
    %5187 = vmatpush2.msra.mxu0 %v4826
    %5188 = vmatprep.subr.mxu0 0.0
    %5189 = vmatpush2.msra.mxu0 %v4825
    %5190 = vmatprep.subr.mxu0 0.0
    %5191 = vmatpush2.msra.mxu0 %v4824
    %5192 = vmatprep.subr.mxu0 0.0
    %5193 = vmatpush2.msra.mxu0 %v4823
    %5194 = vmatprep.subr.mxu0 0.0
    %5195 = vmatpush2.msra.mxu0 %v4822
    %5196 = vmatprep.subr.mxu0 0.0
    %5197 = vmatpush2.msra.mxu0 %v4821
    %5198 = vmatprep.subr.mxu0 0.0
    %5199 = vmatpush2.msra.mxu0 %v4820
    %5200 = vmatprep.mubr.f32.mxu0 %v3631
    %5201 = vmatmul.mubr.f32.gmra.mxu0 %v3630
    %v5202 = vpop.f32.mrf.mxu0
    %v5203 = vadd.f32 %v5133, %v5202
    %v5204 = vpop.f32.mrf.mxu0
    %5205 = vdwg.mxu0
    %5206 = vmatprep.subr.mxu0 0.0
    %5207 = vmatpush1.msra.mxu0 %v4851
    %5208 = vmatprep.subr.mxu0 0.0
    %5209 = vmatpush1.msra.mxu0 %v4850
    %5210 = vmatprep.subr.mxu0 0.0
    %5211 = vmatpush1.msra.mxu0 %v4849
    %5212 = vmatprep.subr.mxu0 0.0
    %5213 = vmatpush1.msra.mxu0 %v4848
    %5214 = vmatprep.subr.mxu0 0.0
    %5215 = vmatpush1.msra.mxu0 %v4847
    %5216 = vmatprep.subr.mxu0 0.0
    %5217 = vmatpush1.msra.mxu0 %v4846
    %5218 = vmatprep.subr.mxu0 0.0
    %5219 = vmatpush1.msra.mxu0 %v4845
    %5220 = vmatprep.subr.mxu0 0.0
    %5221 = vmatpush1.msra.mxu0 %v4844
    %5222 = vmatprep.subr.mxu0 0.0
    %5223 = vmatpush1.msra.mxu0 %v4843
    %5224 = vmatprep.subr.mxu0 0.0
    %5225 = vmatpush1.msra.mxu0 %v4842
    %5226 = vmatprep.subr.mxu0 0.0
    %5227 = vmatpush1.msra.mxu0 %v4841
    %5228 = vmatprep.subr.mxu0 0.0
    %5229 = vmatpush1.msra.mxu0 %v4840
    %5230 = vmatprep.subr.mxu0 0.0
    %5231 = vmatpush1.msra.mxu0 %v4839
    %5232 = vmatprep.subr.mxu0 0.0
    %5233 = vmatpush1.msra.mxu0 %v4838
    %5234 = vmatprep.subr.mxu0 0.0
    %5235 = vmatpush1.msra.mxu0 %v4837
    %5236 = vmatprep.subr.mxu0 0.0
    %5237 = vmatpush1.msra.mxu0 %v4836
    %5238 = vmatprep.subr.mxu0 0.0
    %5239 = vmatpush2.msra.mxu0 %v4867
    %5240 = vmatprep.subr.mxu0 0.0
    %5241 = vmatpush2.msra.mxu0 %v4866
    %5242 = vmatprep.subr.mxu0 0.0
    %5243 = vmatpush2.msra.mxu0 %v4865
    %5244 = vmatprep.subr.mxu0 0.0
    %5245 = vmatpush2.msra.mxu0 %v4864
    %5246 = vmatprep.subr.mxu0 0.0
    %5247 = vmatpush2.msra.mxu0 %v4863
    %5248 = vmatprep.subr.mxu0 0.0
    %5249 = vmatpush2.msra.mxu0 %v4862
    %5250 = vmatprep.subr.mxu0 0.0
    %5251 = vmatpush2.msra.mxu0 %v4861
    %5252 = vmatprep.subr.mxu0 0.0
    %5253 = vmatpush2.msra.mxu0 %v4860
    %5254 = vmatprep.subr.mxu0 0.0
    %5255 = vmatpush2.msra.mxu0 %v4859
    %5256 = vmatprep.subr.mxu0 0.0
    %5257 = vmatpush2.msra.mxu0 %v4858
    %5258 = vmatprep.subr.mxu0 0.0
    %5259 = vmatpush2.msra.mxu0 %v4857
    %5260 = vmatprep.subr.mxu0 0.0
    %5261 = vmatpush2.msra.mxu0 %v4856
    %5262 = vmatprep.subr.mxu0 0.0
    %5263 = vmatpush2.msra.mxu0 %v4855
    %5264 = vmatprep.subr.mxu0 0.0
    %5265 = vmatpush2.msra.mxu0 %v4854
    %5266 = vmatprep.subr.mxu0 0.0
    %5267 = vmatpush2.msra.mxu0 %v4853
    %5268 = vmatprep.subr.mxu0 0.0
    %5269 = vmatpush2.msra.mxu0 %v4852
    %5270 = vmatprep.mubr.f32.mxu0 %v3633
    %5271 = vmatmul.mubr.f32.gmra.mxu0 %v3632
    %v5272 = vpop.f32.mrf.mxu0
    %v5273 = vadd.f32 %v5203, %v5272
    %v5274 = vpop.f32.mrf.mxu0
    %5275 = vdwg.mxu0
    %5276 = vmatprep.subr.mxu0 0.0
    %5277 = vmatpush1.msra.mxu0 %v4883
    %5278 = vmatprep.subr.mxu0 0.0
    %5279 = vmatpush1.msra.mxu0 %v4882
    %5280 = vmatprep.subr.mxu0 0.0
    %5281 = vmatpush1.msra.mxu0 %v4881
    %5282 = vmatprep.subr.mxu0 0.0
    %5283 = vmatpush1.msra.mxu0 %v4880
    %5284 = vmatprep.subr.mxu0 0.0
    %5285 = vmatpush1.msra.mxu0 %v4879
    %5286 = vmatprep.subr.mxu0 0.0
    %5287 = vmatpush1.msra.mxu0 %v4878
    %5288 = vmatprep.subr.mxu0 0.0
    %5289 = vmatpush1.msra.mxu0 %v4877
    %5290 = vmatprep.subr.mxu0 0.0
    %5291 = vmatpush1.msra.mxu0 %v4876
    %5292 = vmatprep.subr.mxu0 0.0
    %5293 = vmatpush1.msra.mxu0 %v4875
    %5294 = vmatprep.subr.mxu0 0.0
    %5295 = vmatpush1.msra.mxu0 %v4874
    %5296 = vmatprep.subr.mxu0 0.0
    %5297 = vmatpush1.msra.mxu0 %v4873
    %5298 = vmatprep.subr.mxu0 0.0
    %5299 = vmatpush1.msra.mxu0 %v4872
    %5300 = vmatprep.subr.mxu0 0.0
    %5301 = vmatpush1.msra.mxu0 %v4871
    %5302 = vmatprep.subr.mxu0 0.0
    %5303 = vmatpush1.msra.mxu0 %v4870
    %5304 = vmatprep.subr.mxu0 0.0
    %5305 = vmatpush1.msra.mxu0 %v4869
    %5306 = vmatprep.subr.mxu0 0.0
    %5307 = vmatpush1.msra.mxu0 %v4868
    %5308 = vmatprep.subr.mxu0 0.0
    %5309 = vmatpush2.msra.mxu0 %v4899
    %5310 = vmatprep.subr.mxu0 0.0
    %5311 = vmatpush2.msra.mxu0 %v4898
    %5312 = vmatprep.subr.mxu0 0.0
    %5313 = vmatpush2.msra.mxu0 %v4897
    %5314 = vmatprep.subr.mxu0 0.0
    %5315 = vmatpush2.msra.mxu0 %v4896
    %5316 = vmatprep.subr.mxu0 0.0
    %5317 = vmatpush2.msra.mxu0 %v4895
    %5318 = vmatprep.subr.mxu0 0.0
    %5319 = vmatpush2.msra.mxu0 %v4894
    %5320 = vmatprep.subr.mxu0 0.0
    %5321 = vmatpush2.msra.mxu0 %v4893
    %5322 = vmatprep.subr.mxu0 0.0
    %5323 = vmatpush2.msra.mxu0 %v4892
    %5324 = vmatprep.subr.mxu0 0.0
    %5325 = vmatpush2.msra.mxu0 %v4891
    %5326 = vmatprep.subr.mxu0 0.0
    %5327 = vmatpush2.msra.mxu0 %v4890
    %5328 = vmatprep.subr.mxu0 0.0
    %5329 = vmatpush2.msra.mxu0 %v4889
    %5330 = vmatprep.subr.mxu0 0.0
    %5331 = vmatpush2.msra.mxu0 %v4888
    %5332 = vmatprep.subr.mxu0 0.0
    %5333 = vmatpush2.msra.mxu0 %v4887
    %5334 = vmatprep.subr.mxu0 0.0
    %5335 = vmatpush2.msra.mxu0 %v4886
    %5336 = vmatprep.subr.mxu0 0.0
    %5337 = vmatpush2.msra.mxu0 %v4885
    %5338 = vmatprep.subr.mxu0 0.0
    %5339 = vmatpush2.msra.mxu0 %v4884
    %5340 = vmatprep.mubr.f32.mxu0 %v3635
    %5341 = vmatmul.mubr.f32.gmra.mxu0 %v3634
    %v5342 = vpop.f32.mrf.mxu0
    %v5343 = vadd.f32 %v5273, %v5342
    %v5344 = vpop.f32.mrf.mxu0
    %5345 = vdwg.mxu0
    %5346 = vmatprep.subr.mxu0 0.0
    %5347 = vmatpush1.msra.mxu0 %v4915
    %5348 = vmatprep.subr.mxu0 0.0
    %5349 = vmatpush1.msra.mxu0 %v4914
    %5350 = vmatprep.subr.mxu0 0.0
    %5351 = vmatpush1.msra.mxu0 %v4913
    %5352 = vmatprep.subr.mxu0 0.0
    %5353 = vmatpush1.msra.mxu0 %v4912
    %5354 = vmatprep.subr.mxu0 0.0
    %5355 = vmatpush1.msra.mxu0 %v4911
    %5356 = vmatprep.subr.mxu0 0.0
    %5357 = vmatpush1.msra.mxu0 %v4910
    %5358 = vmatprep.subr.mxu0 0.0
    %5359 = vmatpush1.msra.mxu0 %v4909
    %5360 = vmatprep.subr.mxu0 0.0
    %5361 = vmatpush1.msra.mxu0 %v4908
    %5362 = vmatprep.subr.mxu0 0.0
    %5363 = vmatpush1.msra.mxu0 %v4907
    %5364 = vmatprep.subr.mxu0 0.0
    %5365 = vmatpush1.msra.mxu0 %v4906
    %5366 = vmatprep.subr.mxu0 0.0
    %5367 = vmatpush1.msra.mxu0 %v4905
    %5368 = vmatprep.subr.mxu0 0.0
    %5369 = vmatpush1.msra.mxu0 %v4904
    %5370 = vmatprep.subr.mxu0 0.0
    %5371 = vmatpush1.msra.mxu0 %v4903
    %5372 = vmatprep.subr.mxu0 0.0
    %5373 = vmatpush1.msra.mxu0 %v4902
    %5374 = vmatprep.subr.mxu0 0.0
    %5375 = vmatpush1.msra.mxu0 %v4901
    %5376 = vmatprep.subr.mxu0 0.0
    %5377 = vmatpush1.msra.mxu0 %v4900
    %5378 = vmatprep.subr.mxu0 0.0
    %5379 = vmatpush2.msra.mxu0 %v4931
    %5380 = vmatprep.subr.mxu0 0.0
    %5381 = vmatpush2.msra.mxu0 %v4930
    %5382 = vmatprep.subr.mxu0 0.0
    %5383 = vmatpush2.msra.mxu0 %v4929
    %5384 = vmatprep.subr.mxu0 0.0
    %5385 = vmatpush2.msra.mxu0 %v4928
    %5386 = vmatprep.subr.mxu0 0.0
    %5387 = vmatpush2.msra.mxu0 %v4927
    %5388 = vmatprep.subr.mxu0 0.0
    %5389 = vmatpush2.msra.mxu0 %v4926
    %5390 = vmatprep.subr.mxu0 0.0
    %5391 = vmatpush2.msra.mxu0 %v4925
    %5392 = vmatprep.subr.mxu0 0.0
    %5393 = vmatpush2.msra.mxu0 %v4924
    %5394 = vmatprep.subr.mxu0 0.0
    %5395 = vmatpush2.msra.mxu0 %v4923
    %5396 = vmatprep.subr.mxu0 0.0
    %5397 = vmatpush2.msra.mxu0 %v4922
    %5398 = vmatprep.subr.mxu0 0.0
    %5399 = vmatpush2.msra.mxu0 %v4921
    %5400 = vmatprep.subr.mxu0 0.0
    %5401 = vmatpush2.msra.mxu0 %v4920
    %5402 = vmatprep.subr.mxu0 0.0
    %5403 = vmatpush2.msra.mxu0 %v4919
    %5404 = vmatprep.subr.mxu0 0.0
    %5405 = vmatpush2.msra.mxu0 %v4918
    %5406 = vmatprep.subr.mxu0 0.0
    %5407 = vmatpush2.msra.mxu0 %v4917
    %5408 = vmatprep.subr.mxu0 0.0
    %5409 = vmatpush2.msra.mxu0 %v4916
    %5410 = vmatprep.mubr.f32.mxu0 %v3637
    %5411 = vmatmul.mubr.f32.gmra.mxu0 %v3636
    %v5412 = vpop.f32.mrf.mxu0
    %v5413 = vadd.f32 %v5343, %v5412
    %v5414 = vpop.f32.mrf.mxu0
    %5415 = vdwg.mxu0
    %5416 = vmatprep.subr.mxu0 0.0
    %5417 = vmatpush1.msra.mxu0 %v4947
    %5418 = vmatprep.subr.mxu0 0.0
    %5419 = vmatpush1.msra.mxu0 %v4946
    %5420 = vmatprep.subr.mxu0 0.0
    %5421 = vmatpush1.msra.mxu0 %v4945
    %5422 = vmatprep.subr.mxu0 0.0
    %5423 = vmatpush1.msra.mxu0 %v4944
    %5424 = vmatprep.subr.mxu0 0.0
    %5425 = vmatpush1.msra.mxu0 %v4943
    %5426 = vmatprep.subr.mxu0 0.0
    %5427 = vmatpush1.msra.mxu0 %v4942
    %5428 = vmatprep.subr.mxu0 0.0
    %5429 = vmatpush1.msra.mxu0 %v4941
    %5430 = vmatprep.subr.mxu0 0.0
    %5431 = vmatpush1.msra.mxu0 %v4940
    %5432 = vmatprep.subr.mxu0 0.0
    %5433 = vmatpush1.msra.mxu0 %v4939
    %5434 = vmatprep.subr.mxu0 0.0
    %5435 = vmatpush1.msra.mxu0 %v4938
    %5436 = vmatprep.subr.mxu0 0.0
    %5437 = vmatpush1.msra.mxu0 %v4937
    %5438 = vmatprep.subr.mxu0 0.0
    %5439 = vmatpush1.msra.mxu0 %v4936
    %5440 = vmatprep.subr.mxu0 0.0
    %5441 = vmatpush1.msra.mxu0 %v4935
    %5442 = vmatprep.subr.mxu0 0.0
    %5443 = vmatpush1.msra.mxu0 %v4934
    %5444 = vmatprep.subr.mxu0 0.0
    %5445 = vmatpush1.msra.mxu0 %v4933
    %5446 = vmatprep.subr.mxu0 0.0
    %5447 = vmatpush1.msra.mxu0 %v4932
    %5448 = vmatprep.subr.mxu0 0.0
    %5449 = vmatpush2.msra.mxu0 %v4963
    %5450 = vmatprep.subr.mxu0 0.0
    %5451 = vmatpush2.msra.mxu0 %v4962
    %5452 = vmatprep.subr.mxu0 0.0
    %5453 = vmatpush2.msra.mxu0 %v4961
    %5454 = vmatprep.subr.mxu0 0.0
    %5455 = vmatpush2.msra.mxu0 %v4960
    %5456 = vmatprep.subr.mxu0 0.0
    %5457 = vmatpush2.msra.mxu0 %v4959
    %5458 = vmatprep.subr.mxu0 0.0
    %5459 = vmatpush2.msra.mxu0 %v4958
    %5460 = vmatprep.subr.mxu0 0.0
    %5461 = vmatpush2.msra.mxu0 %v4957
    %5462 = vmatprep.subr.mxu0 0.0
    %5463 = vmatpush2.msra.mxu0 %v4956
    %5464 = vmatprep.subr.mxu0 0.0
    %5465 = vmatpush2.msra.mxu0 %v4955
    %5466 = vmatprep.subr.mxu0 0.0
    %5467 = vmatpush2.msra.mxu0 %v4954
    %5468 = vmatprep.subr.mxu0 0.0
    %5469 = vmatpush2.msra.mxu0 %v4953
    %5470 = vmatprep.subr.mxu0 0.0
    %5471 = vmatpush2.msra.mxu0 %v4952
    %5472 = vmatprep.subr.mxu0 0.0
    %5473 = vmatpush2.msra.mxu0 %v4951
    %5474 = vmatprep.subr.mxu0 0.0
    %5475 = vmatpush2.msra.mxu0 %v4950
    %5476 = vmatprep.subr.mxu0 0.0
    %5477 = vmatpush2.msra.mxu0 %v4949
    %5478 = vmatprep.subr.mxu0 0.0
    %5479 = vmatpush2.msra.mxu0 %v4948
    %5480 = vmatprep.mubr.f32.mxu0 %v3639
    %5481 = vmatmul.mubr.f32.gmra.mxu0 %v3638
    %v5482 = vpop.f32.mrf.mxu0
    %v5483 = vadd.f32 %v5413, %v5482
    %v5484 = vpop.f32.mrf.mxu0
    %5485 = vdwg.mxu0
    %5486 = vmatprep.subr.mxu0 0.0
    %5487 = vmatpush1.msra.mxu0 %v4979
    %5488 = vmatprep.subr.mxu0 0.0
    %5489 = vmatpush1.msra.mxu0 %v4978
    %5490 = vmatprep.subr.mxu0 0.0
    %5491 = vmatpush1.msra.mxu0 %v4977
    %5492 = vmatprep.subr.mxu0 0.0
    %5493 = vmatpush1.msra.mxu0 %v4976
    %5494 = vmatprep.subr.mxu0 0.0
    %5495 = vmatpush1.msra.mxu0 %v4975
    %5496 = vmatprep.subr.mxu0 0.0
    %5497 = vmatpush1.msra.mxu0 %v4974
    %5498 = vmatprep.subr.mxu0 0.0
    %5499 = vmatpush1.msra.mxu0 %v4973
    %5500 = vmatprep.subr.mxu0 0.0
    %5501 = vmatpush1.msra.mxu0 %v4972
    %5502 = vmatprep.subr.mxu0 0.0
    %5503 = vmatpush1.msra.mxu0 %v4971
    %5504 = vmatprep.subr.mxu0 0.0
    %5505 = vmatpush1.msra.mxu0 %v4970
    %5506 = vmatprep.subr.mxu0 0.0
    %5507 = vmatpush1.msra.mxu0 %v4969
    %5508 = vmatprep.subr.mxu0 0.0
    %5509 = vmatpush1.msra.mxu0 %v4968
    %5510 = vmatprep.subr.mxu0 0.0
    %5511 = vmatpush1.msra.mxu0 %v4967
    %5512 = vmatprep.subr.mxu0 0.0
    %5513 = vmatpush1.msra.mxu0 %v4966
    %5514 = vmatprep.subr.mxu0 0.0
    %5515 = vmatpush1.msra.mxu0 %v4965
    %5516 = vmatprep.subr.mxu0 0.0
    %5517 = vmatpush1.msra.mxu0 %v4964
    %5518 = vmatprep.subr.mxu0 0.0
    %5519 = vmatpush2.msra.mxu0 %v4995
    %5520 = vmatprep.subr.mxu0 0.0
    %5521 = vmatpush2.msra.mxu0 %v4994
    %5522 = vmatprep.subr.mxu0 0.0
    %5523 = vmatpush2.msra.mxu0 %v4993
    %5524 = vmatprep.subr.mxu0 0.0
    %5525 = vmatpush2.msra.mxu0 %v4992
    %5526 = vmatprep.subr.mxu0 0.0
    %5527 = vmatpush2.msra.mxu0 %v4991
    %5528 = vmatprep.subr.mxu0 0.0
    %5529 = vmatpush2.msra.mxu0 %v4990
    %5530 = vmatprep.subr.mxu0 0.0
    %5531 = vmatpush2.msra.mxu0 %v4989
    %5532 = vmatprep.subr.mxu0 0.0
    %5533 = vmatpush2.msra.mxu0 %v4988
    %5534 = vmatprep.subr.mxu0 0.0
    %5535 = vmatpush2.msra.mxu0 %v4987
    %5536 = vmatprep.subr.mxu0 0.0
    %5537 = vmatpush2.msra.mxu0 %v4986
    %5538 = vmatprep.subr.mxu0 0.0
    %5539 = vmatpush2.msra.mxu0 %v4985
    %5540 = vmatprep.subr.mxu0 0.0
    %5541 = vmatpush2.msra.mxu0 %v4984
    %5542 = vmatprep.subr.mxu0 0.0
    %5543 = vmatpush2.msra.mxu0 %v4983
    %5544 = vmatprep.subr.mxu0 0.0
    %5545 = vmatpush2.msra.mxu0 %v4982
    %5546 = vmatprep.subr.mxu0 0.0
    %5547 = vmatpush2.msra.mxu0 %v4981
    %5548 = vmatprep.subr.mxu0 0.0
    %5549 = vmatpush2.msra.mxu0 %v4980
    %5550 = vmatprep.mubr.f32.mxu0 %v3641
    %5551 = vmatmul.mubr.f32.gmra.mxu0 %v3640
    %v5552 = vpop.f32.mrf.mxu0
    %v5553 = vadd.f32 %v5483, %v5552
    %v5554 = vpop.f32.mrf.mxu0
    %5555 = vdwg.mxu0
    %v5556 = vadd.f32 %v4739, %v5553
    %5557 = vst.msk [vmem:[#allocation6] sm:$0xff] %vm4737, %v5556
    // Predicated region
    $region26: #{_loss_components.1} parent=1 // pred_check
      %p5558 = pneg %p22
    $region27: #{_loss_components.1} parent=1 // pred_check_branch
      %5560 = sbr.rel (%p5558) target = $region29
    $region28: #{_loss_components.1} parent=1 // pred_region
      %v5561 = vld [vmem:[#allocation2] sm:$0x1]
      %v5562 = vsel %vm3166, %v5561, 0.0
      %5563 = vadd.xlane.f32.xlu0 %v5562
      %v5564 = vpop.xlane.xlu0 %5563
      %v5565 = vrot.slane %v5564, 4
      %v5566 = vadd.f32 %v5564, %v5565
      %v5567 = vrot.slane %v5566, 2
      %v5568 = vadd.f32 %v5566, %v5567
      %v5569 = vrot.slane %v5568, 1
      %v5570 = vadd.f32 %v5568, %v5569
      %s5571 = vtos %v5570
      %v5572 = vld [vmem:[#allocation3] sm:$0xff]
      %v5573 = vld [vmem:[#allocation3 + $0x8] sm:$0xff]
      %v5576 = vlaneseq
      %v5577 = vshrl.u32 %v5576, 7
      %v5578 = vsub.s32 0, %v5577
      %v5579 = vrot.slane %v5572, %v5578
      %v5580 = vlaneseq
      %v5581 = vshrl.u32 %v5580, 7
      %v5582 = vsub.s32 1, %v5581
      %v5583 = vrot.slane %v5572, %v5582
      %v5584 = vlaneseq
      %v5585 = vshrl.u32 %v5584, 7
      %v5586 = vsub.s32 2, %v5585
      %v5587 = vrot.slane %v5572, %v5586
      %v5588 = vlaneseq
      %v5589 = vshrl.u32 %v5588, 7
      %v5590 = vsub.s32 3, %v5589
      %v5591 = vrot.slane %v5572, %v5590
      %v5592 = vlaneseq
      %v5593 = vshrl.u32 %v5592, 7
      %v5594 = vsub.s32 4, %v5593
      %v5595 = vrot.slane %v5572, %v5594
      %v5596 = vlaneseq
      %v5597 = vshrl.u32 %v5596, 7
      %v5598 = vsub.s32 5, %v5597
      %v5599 = vrot.slane %v5572, %v5598
      %v5600 = vlaneseq
      %v5601 = vshrl.u32 %v5600, 7
      %v5602 = vsub.s32 6, %v5601
      %v5603 = vrot.slane %v5572, %v5602
      %v5604 = vlaneseq
      %v5605 = vshrl.u32 %v5604, 7
      %v5606 = vsub.s32 7, %v5605
      %v5607 = vrot.slane %v5572, %v5606
      %v5608 = vlaneseq
      %v5609 = vshrl.u32 %v5608, 7
      %v5610 = vsub.s32 0, %v5609
      %v5611 = vrot.slane %v5573, %v5610
      %v5612 = vlaneseq
      %v5613 = vshrl.u32 %v5612, 7
      %v5614 = vsub.s32 1, %v5613
      %v5615 = vrot.slane %v5573, %v5614
      %v5616 = vlaneseq
      %v5617 = vshrl.u32 %v5616, 7
      %v5618 = vsub.s32 2, %v5617
      %v5619 = vrot.slane %v5573, %v5618
      %v5620 = vlaneseq
      %v5621 = vshrl.u32 %v5620, 7
      %v5622 = vsub.s32 3, %v5621
      %v5623 = vrot.slane %v5573, %v5622
      %v5624 = vlaneseq
      %v5625 = vshrl.u32 %v5624, 7
      %v5626 = vsub.s32 4, %v5625
      %v5627 = vrot.slane %v5573, %v5626
      %v5628 = vlaneseq
      %v5629 = vshrl.u32 %v5628, 7
      %v5630 = vsub.s32 5, %v5629
      %v5631 = vrot.slane %v5573, %v5630
      %v5632 = vlaneseq
      %v5633 = vshrl.u32 %v5632, 7
      %v5634 = vsub.s32 6, %v5633
      %v5635 = vrot.slane %v5573, %v5634
      %v5636 = vlaneseq
      %v5637 = vshrl.u32 %v5636, 7
      %v5638 = vsub.s32 7, %v5637
      %v5639 = vrot.slane %v5573, %v5638
      %vm5656 = vcmask 1040384
      %v5657 = vsel %vm5656, %v5579, 0.0
      %v5658 = vsel %vm5656, %v5583, 0.0
      %v5659 = vadd.f32 %v5657, %v5658
      %v5660 = vsel %vm5656, %v5587, 0.0
      %v5661 = vadd.f32 %v5659, %v5660
      %v5662 = vsel %vm5656, %v5591, 0.0
      %v5663 = vadd.f32 %v5661, %v5662
      %v5664 = vsel %vm5656, %v5595, 0.0
      %v5665 = vadd.f32 %v5663, %v5664
      %v5666 = vsel %vm5656, %v5599, 0.0
      %v5667 = vadd.f32 %v5665, %v5666
      %v5668 = vsel %vm5656, %v5603, 0.0
      %v5669 = vadd.f32 %v5667, %v5668
      %v5670 = vsel %vm5656, %v5607, 0.0
      %v5671 = vadd.f32 %v5669, %v5670
      %v5672 = vsel %vm5656, %v5611, 0.0
      %v5673 = vadd.f32 %v5671, %v5672
      %v5674 = vsel %vm5656, %v5615, 0.0
      %v5675 = vadd.f32 %v5673, %v5674
      %v5676 = vsel %vm5656, %v5619, 0.0
      %v5677 = vadd.f32 %v5675, %v5676
      %v5678 = vsel %vm5656, %v5623, 0.0
      %v5679 = vadd.f32 %v5677, %v5678
      %v5680 = vsel %vm5656, %v5627, 0.0
      %v5681 = vadd.f32 %v5679, %v5680
      %v5682 = vsel %vm5656, %v5631, 0.0
      %v5683 = vadd.f32 %v5681, %v5682
      %v5684 = vsel %vm5656, %v5635, 0.0
      %v5685 = vadd.f32 %v5683, %v5684
      %v5686 = vsel %vm5656, %v5639, 0.0
      %v5687 = vadd.f32 %v5685, %v5686
      %5688 = vadd.xlane.f32.xlu0 %v5687
      %v5689 = vpop.xlane.xlu0 %5688
      %v5690 = vrot.slane %v5689, 4
      %v5691 = vadd.f32 %v5689, %v5690
      %v5692 = vrot.slane %v5691, 2
      %v5693 = vadd.f32 %v5691, %v5692
      %v5694 = vrot.slane %v5693, 1
      %v5695 = vadd.f32 %v5693, %v5694
      %s5696 = vtos %v5695
      %v5697 = vld [vmem:[#allocation4] sm:$0xff]
      %v5698 = vld [vmem:[#allocation5] sm:$0xff]
      %v5699 = vld [vmem:[#allocation6] sm:$0xff]
      %v5700 = vmul.f32 %v5698, %v5698
      %5702 = vset.pattern.permute.xlu0 0
      %5703 = vperm.xlu0 %5702, %v5697
      %v5704 = vpop.permute.xlu0 %5703
      %v5706 = vrcp.pop %v5704
      %v5707 = vmul.f32 %v5700, %v5706
      %v5708 = vsub.f32 %v5699, %v5707
      %v5709 = vmax.f32 %v5708, 0.0
      %vm5710 = vcmask 15360
      %v5711 = vsel %vm5710, %v5709, 0.0
      %5712 = vadd.xlane.f32.xlu0 %v5711
      %v5713 = vpop.xlane.xlu0 %5712
      %v5714 = vrot.slane %v5713, 4
      %v5715 = vadd.f32 %v5713, %v5714
      %v5716 = vrot.slane %v5715, 2
      %v5717 = vadd.f32 %v5715, %v5716
      %v5718 = vrot.slane %v5717, 1
      %v5719 = vadd.f32 %v5717, %v5718
      %s5720 = vtos %v5719
      %5722 = vrot.lane.b32.xlu0 %v5709, 126
      %v5723 = vpop.permute.xlu0 %5722
      %v5725 = vsel %vm5710, %v5723, 0.0
      %5726 = vadd.xlane.f32.xlu0 %v5725
      %v5727 = vpop.xlane.xlu0 %5726
      %v5728 = vrot.slane %v5727, 4
      %v5729 = vadd.f32 %v5727, %v5728
      %v5730 = vrot.slane %v5729, 2
      %v5731 = vadd.f32 %v5729, %v5730
      %v5732 = vrot.slane %v5731, 1
      %v5733 = vadd.f32 %v5731, %v5732
      %s5734 = vtos %v5733
      %s5735 = smul.f32 %s5720, 0.1
      %s5736 = smul.f32 %s5734, 0.2
      %s5737 = sadd.f32 %s5735, %s5736
      %v5738 = vrcp.pop 64000.0
      %s5739 = vtos %v5738
      %s5740 = smul.f32 %s5571, %s5739
      %v5741 = vrcp.pop 2000.0
      %s5742 = vtos %v5741
      %s5743 = smul.f32 %s5696, %s5742
      %s5744 = sadd.f32 %s5740, %s5743
      %s5745 = smul.f32 %s5737, 0.1
      %s5746 = sadd.f32 %s5744, %s5745
      %s5747 = scalar_lea.smem [#allocation7], 0
      %5748 = sst [smem:[%s5747]] %s5740
      %s5749 = scalar_lea.smem [#allocation7], 1
      %5750 = sst [smem:[%s5749]] %s5743
      %s5751 = scalar_lea.smem [#allocation7], 2
      %5752 = sst [smem:[%s5751]] %s5737
      %s5753 = scalar_lea.smem [#allocation7], 3
      %5754 = sst [smem:[%s5753]] %s5746
    $region29: #{_loss_components.1} parent=1 // pred_fallthru
      _
    // Predicated region
    $region30: #{_loss_components.1} parent=1 // pred_check
      _
    $region31: #{_loss_components.1} parent=1 // pred_check_branch
      %5756 = sbr.rel (0) target = $region33
    $region32: #{_loss_components.1} parent=1 // pred_region
      %s5758 = ssub.s32 16, 16
      %5759 = vsyncadd [#allocation8], %s5758
      %5762 = dma.smem_to_hbm [#allocation7], 16, %s5, [#allocation8]
    $region33: #{_loss_components.1} parent=1 // pred_fallthru
      _
    // Predicated region
    $region34: #{_loss_components.1} parent=1 // pred_check
      _
    $region35: #{_loss_components.1} parent=1 // pred_check_branch
      %5764 = sbr.rel (0) target = $region37
    $region36: #{_loss_components.1} parent=1 // pred_region
      %5765 = dma.done [#allocation8], 16
    $region37: #{_loss_components.1} parent=1 // pred_fallthru
      _
    %5766 = sfence
    %5767 = vsyncpa [#allocation8], 1

</llo_original>
